<compile_context>
chip_gen: v6e
topology: v6e:2x2x1
jax: 0.10.0
libtpu: 0.0.40
codegen_flags: <defaults>
</compile_context>

<pallas_src>
import functools

import numpy as np
import jax
import jax.numpy as jnp
from jax import lax
from jax.experimental import pallas as pl
from jax.experimental.pallas import tpu as pltpu


_OFFSETS = tuple((k // 3 - 1, k % 3 - 1) for k in range(9))   # HWIO tap order


def _prompt_kernel(x_ref, mask_ref, w1_ref, b1_ref, w2h_ref, b2h_ref, out_ref,
                   *, H, W, TB):
    """One grid step == TB batch elements.

    x_ref   : (TB, H*W, Cin) bf16  flattened NHWC images
    mask_ref: (9, H*W, 1)    f32   per-tap validity masks (position in image)
    w1_ref  : (9*Cin, 128)   bf16  conv1 weights, tap-major im2col layout
    b1_ref  : (1, 128)       f32   conv1 bias
    w2h_ref : (9*128, 128)   f32   fused conv2+mean+heads weights (pre-scaled
                                   by 1/HW, zero-padded to 128 output lanes)
    b2h_ref : (1, 128)       f32   fused bias (zero-padded)
    out_ref : (1, TB, 128)   f32   sigmoid(logits), lane-dense
    """
    HW = H * W
    M = TB * HW
    Cin = x_ref.shape[-1]

    x_bf = x_ref[...]                                        # (TB, HW, Cin) bf16
    x_f = x_bf.reshape(M, Cin).astype(jnp.float32)           # f32 for the rolls

    # ---- conv1 (3x3, pad 1) + ReLU: ONE K = 9*Cin MXU matmul ---------------
    cols = []
    for k, (oy, ox) in enumerate(_OFFSETS):
        s = oy * W + ox
        if s == 0:
            cols.append(x_bf)                                # center tap: valid
        else:
            shifted = pltpu.roll(x_f, (-s) % M, 0)           # XLU sublane rotate
            shifted = shifted.reshape(TB, HW, Cin)
            cols.append((shifted * mask_ref[k]).astype(jnp.bfloat16))
    patch1 = jnp.concatenate(cols, axis=2).reshape(M, 9 * Cin)      # bf16
    feat1 = jnp.dot(patch1, w1_ref[...],
                    preferred_element_type=jnp.float32) + b1_ref[...]
    feat1 = jnp.maximum(feat1, 0.0)                          # (M, 128) f32

    # ---- fused conv2 + spatial mean + point/box heads ----------------------
    # mean_{hw}(conv2(feat1) @ Wh + bh)
    #   = (1/HW) * sum_t S_t @ (w2[t] @ Wh)  +  (b2 @ Wh + bh)
    # where S_t is the per-image sum of feat1 over the positions tap t reads
    # (reflected validity mask 8-k).  1/HW and the head fusion live in w2h/b2h.
    feat1_3d = feat1.reshape(TB, HW, 128)
    sums = []
    for k in range(9):
        m = mask_ref[8 - k]                                  # reflected tap mask
        sums.append(jnp.sum(feat1_3d * m, axis=1))           # (TB, 128) f32
    s_cat = jnp.concatenate(sums, axis=1)                    # (TB, 9*128) f32

    logits = jnp.dot(s_cat, w2h_ref[...],
                     preferred_element_type=jnp.float32) + b2h_ref[...]
    out_ref[0] = 1.0 / (1.0 + jnp.exp(-logits))              # lane-dense store


def _pick_tb(B, HW, Cin):
    """Images per grid step + a VMEM budget (bytes), generation-aware."""
    try:
        vmem_cap = pltpu.get_tpu_info().vmem_capacity_bytes
    except Exception:
        vmem_cap = 64 << 20                       # v7x physical floor
    budget = max(16 << 20, min(vmem_cap // 2, 64 << 20))
    # Rough per-image working set: bf16 x (double-buffered), f32 upcast +
    # rolled/masked tap temporaries, bf16 im2col patch, f32 feat1 + sum temps.
    per_img = HW * (4 * Cin + 4 * Cin + 8 * Cin + 18 * Cin + 8 * 128)
    avail = max(per_img, budget - (2 << 20))      # leave room for the weights
    tb = max(1, min(B, 8, avail // per_img))
    if B >= 2:
        # >= 2 grid steps: input-DMA pipelining + v7x megacore actually engage.
        tb = min(tb, -(-B // 2))
    return tb, budget


def dynamic_prompt_generator(guide_matrix_nchw, params, num_points=5):
    """Pallas implementation of DynamicPromptGenerator.forward."""
    B, C, H, W = guide_matrix_nchw.shape
    HW = H * W
    n_out = 2 * num_points + 4
    hp = lax.Precision.HIGHEST

    # ---- weight preprocessing (tiny, f32, once per call) -------------------
    w1 = params["w1"].reshape(9 * C, 128).astype(jnp.bfloat16)
    b1 = params["b1"].reshape(1, 128).astype(jnp.float32)

    wh = jnp.concatenate([params["wp"], params["wb"]], axis=1).astype(jnp.float32)
    bh = jnp.concatenate([params["bp"], params["bb"]]).astype(jnp.float32)
    w2_flat = params["w2"].reshape(9 * 128, 64).astype(jnp.float32)
    w2h = jnp.dot(w2_flat, wh, precision=hp) / float(HW)        # (1152, n_out)
    b2h = jnp.dot(params["b2"].astype(jnp.float32), wh, precision=hp) + bh

    # Zero-pad the fused head to 128 output lanes -> lane-dense output stores.
    w2h_pad = jnp.zeros((9 * 128, 128), jnp.float32).at[:, :n_out].set(w2h)
    b2h_pad = jnp.zeros((1, 128), jnp.float32).at[0, :n_out].set(b2h)

    # Per-tap validity masks: static (H, W) constants, built on the host.
    hh, ww = np.meshgrid(np.arange(H), np.arange(W), indexing="ij")
    mask_np = np.zeros((9, HW, 1), np.float32)
    for k, (oy, ox) in enumerate(_OFFSETS):
        valid = ((hh + oy >= 0) & (hh + oy < H) &
                 (ww + ox >= 0) & (ww + ox < W))
        mask_np[k, :, 0] = valid.reshape(-1).astype(np.float32)
    masks = jnp.asarray(mask_np)

    # Input: NCHW -> NHWC -> (B, H*W, C), bf16 (halves the HBM->VMEM DMA).
    x_flat = jnp.transpose(guide_matrix_nchw, (0, 2, 3, 1)) \
                .reshape(B, HW, C).astype(jnp.bfloat16)

    # Batch blocking: VMEM-budget aware, >= 2 grid steps when B >= 2,
    # non-divisible B handled with a padded tail block (not a TB=1 fallback).
    TB, vmem_budget = _pick_tb(B, HW, C)
    nb = -(-B // TB)
    Bp = nb * TB
    if Bp != B:
        x_flat = jnp.pad(x_flat, ((0, Bp - B), (0, 0), (0, 0)))

    kernel = functools.partial(_prompt_kernel, H=H, W=W, TB=TB)

    out = pl.pallas_call(
        kernel,
        out_shape=jax.ShapeDtypeStruct((nb, TB, 128), jnp.float32),
        grid_spec=pltpu.PrefetchScalarGridSpec(
            num_scalar_prefetch=0,
            grid=(nb,),
            in_specs=[
                pl.BlockSpec((TB, HW, C), lambda b: (b, 0, 0)),
                pl.BlockSpec((9, HW, 1), lambda b: (0, 0, 0)),
                pl.BlockSpec((9 * C, 128), lambda b: (0, 0)),
                pl.BlockSpec((1, 128), lambda b: (0, 0)),
                pl.BlockSpec((9 * 128, 128), lambda b: (0, 0)),
                pl.BlockSpec((1, 128), lambda b: (0, 0)),
            ],
            out_specs=pl.BlockSpec((1, TB, 128), lambda b: (b, 0, 0)),
        ),
        compiler_params=pltpu.CompilerParams(
            dimension_semantics=("parallel",),       # batch blocks independent
            vmem_limit_bytes=int(vmem_budget)),
    )(x_flat, masks, w1, b1, w2h_pad, b2h_pad)

    sig = out.reshape(Bp, 128)[:B, :n_out]
    point_coords = sig[:, :2 * num_points].reshape(B, num_points, 2)
    boxes = sig[:, 2 * num_points:] * jnp.array([W, H, W, H], jnp.float32)
    return point_coords, boxes


def reference(guide_matrix_nchw, params, num_points=5):
    """Pure-JAX reference matching the PyTorch forward semantics."""
    B, C, H, W = guide_matrix_nchw.shape
    x = jnp.transpose(guide_matrix_nchw, (0, 2, 3, 1))
    dn = ("NHWC", "HWIO", "NHWC")
    hp = lax.Precision.HIGHEST
    f = lax.conv_general_dilated(x, params["w1"], (1, 1), "SAME",
                                 dimension_numbers=dn, precision=hp) + params["b1"]
    f = jnp.maximum(f, 0.0)
    f = lax.conv_general_dilated(f, params["w2"], (1, 1), "SAME",
                                 dimension_numbers=dn, precision=hp) + params["b2"]
    pts = jnp.einsum("bhwc,co->bhwo", f, params["wp"], precision=hp) + params["bp"]
    box = jnp.einsum("bhwc,co->bhwo", f, params["wb"], precision=hp) + params["bb"]
    point_coords = jax.nn.sigmoid(pts.mean((1, 2))).reshape(B, num_points, 2)
    boxes = jax.nn.sigmoid(box.mean((1, 2))) * jnp.array([W, H, W, H], jnp.float32)
    return point_coords, boxes


def init_params(key, guide_dim, num_points):
    ks = jax.random.split(key, 8)

    def uinit(k, shape, fan_in):
        bound = 1.0 / np.sqrt(fan_in)
        return jax.random.uniform(k, shape, jnp.float32, -bound, bound)

    return {
        "w1": uinit(ks[0], (3, 3, guide_dim, 128), guide_dim * 9),
        "b1": uinit(ks[1], (128,), guide_dim * 9),
        "w2": uinit(ks[2], (3, 3, 128, 64), 128 * 9),
        "b2": uinit(ks[3], (64,), 128 * 9),
        "wp": uinit(ks[4], (64, 2 * num_points), 64),
        "bp": uinit(ks[5], (2 * num_points,), 64),
        "wb": uinit(ks[6], (64, 4), 64),
        "bb": uinit(ks[7], (4,), 64),
    }


if __name__ == "__main__":
    B, guide_dim, H, W = 2, 32, 16, 16
    num_points = 5

    key = jax.random.PRNGKey(0)
    pkey, xkey = jax.random.split(key)
    params = init_params(pkey, guide_dim, num_points)
    guide_matrix = jax.random.normal(xkey, (B, guide_dim, H, W), jnp.float32)

    point_coords, boxes = dynamic_prompt_generator(guide_matrix, params, num_points)
    point_coords = jax.block_until_ready(point_coords)
    boxes = jax.block_until_ready(boxes)

    ref_pts, ref_boxes = reference(guide_matrix, params, num_points)

    assert point_coords.shape == (B, num_points, 2)
    assert boxes.shape == (B, 4)
    # conv1 inputs/weights are quantized to bf16 for the MXU (f32 accumulation);
    # the reference runs HIGHEST-precision f32, hence the 5e-3 tolerance.
    assert np.allclose(np.asarray(point_coords), np.asarray(ref_pts),
                       rtol=5e-3, atol=5e-3)
    assert np.allclose(np.asarray(boxes), np.asarray(ref_boxes),
                       rtol=5e-3, atol=5e-3)

    print("KERNEL_OK")
</pallas_src>

<mosaic_0001>
module attributes {stable_mosaic.version = 11 : i64} {
  func.func @_prompt_kernel(%arg0: i32, %arg1: memref<1x256x32xbf16, #tpu.memory_space<vmem>>, %arg2: memref<9x256x1xf32, #tpu.memory_space<vmem>>, %arg3: memref<288x128xbf16, #tpu.memory_space<vmem>>, %arg4: memref<1x128xf32, #tpu.memory_space<vmem>>, %arg5: memref<1152x128xf32, #tpu.memory_space<vmem>>, %arg6: memref<1x128xf32, #tpu.memory_space<vmem>>, %arg7: memref<1x1x128xf32, #tpu.memory_space<vmem>>) attributes {dimension_semantics = [#tpu.dimension_semantics<parallel>], iteration_bounds = array<i64: 2>, scalar_prefetch = 0 : i64, scratch_operands = 0 : i64, tpu.core_type = #tpu.core_type<tc>, window_params = [{transform_indices = @transform_0, window_bounds = array<i64: 1, 256, 32>}, {pipeline_mode = #tpu.pipeline_mode<synchronous>, transform_indices = @transform_1, window_bounds = array<i64: 9, 256, 1>}, {pipeline_mode = #tpu.pipeline_mode<synchronous>, transform_indices = @transform_2, window_bounds = array<i64: 288, 128>}, {pipeline_mode = #tpu.pipeline_mode<synchronous>, transform_indices = @transform_3, window_bounds = array<i64: 1, 128>}, {pipeline_mode = #tpu.pipeline_mode<synchronous>, transform_indices = @transform_4, window_bounds = array<i64: 1152, 128>}, {pipeline_mode = #tpu.pipeline_mode<synchronous>, transform_indices = @transform_5, window_bounds = array<i64: 1, 128>}, {transform_indices = @transform_6, window_bounds = array<i64: 1, 1, 128>}]} {
    %c0 = arith.constant 0 : index
    %c0_0 = arith.constant 0 : index
    %c0_1 = arith.constant 0 : index
    %0 = vector.load %arg1[%c0, %c0_0, %c0_1] : memref<1x256x32xbf16, #tpu.memory_space<vmem>>, vector<1x256x32xbf16>
    %1 = vector.shape_cast %0 : vector<1x256x32xbf16> to vector<256x32xbf16>
    %2 = arith.extf %1 : vector<256x32xbf16> to vector<256x32xf32>
    %c17_i32 = arith.constant 17 : i32
    %3 = tpu.dynamic_rotate %2 by %c17_i32 dim 0 : vector<256x32xf32>, i32 -> vector<256x32xf32>
    %4 = vector.shape_cast %3 : vector<256x32xf32> to vector<1x256x32xf32>
    %c0_2 = arith.constant 0 : index
    %c0_3 = arith.constant 0 : index
    %c0_4 = arith.constant 0 : index
    %5 = vector.load %arg2[%c0_2, %c0_3, %c0_4] : memref<9x256x1xf32, #tpu.memory_space<vmem>>, vector<1x256x1xf32>
    %6 = vector.shape_cast %5 : vector<1x256x1xf32> to vector<256x1xf32>
    %7 = vector.shape_cast %6 : vector<256x1xf32> to vector<1x256x1xf32>
    %8 = vector.broadcast %7 : vector<1x256x1xf32> to vector<1x256x32xf32>
    %9 = arith.mulf %4, %8 : vector<1x256x32xf32>
    %10 = arith.truncf %9 : vector<1x256x32xf32> to vector<1x256x32xbf16>
    %c16_i32 = arith.constant 16 : i32
    %11 = tpu.dynamic_rotate %2 by %c16_i32 dim 0 : vector<256x32xf32>, i32 -> vector<256x32xf32>
    %12 = vector.shape_cast %11 : vector<256x32xf32> to vector<1x256x32xf32>
    %c1 = arith.constant 1 : index
    %c0_5 = arith.constant 0 : index
    %c0_6 = arith.constant 0 : index
    %13 = vector.load %arg2[%c1, %c0_5, %c0_6] : memref<9x256x1xf32, #tpu.memory_space<vmem>>, vector<1x256x1xf32>
    %14 = vector.shape_cast %13 : vector<1x256x1xf32> to vector<256x1xf32>
    %15 = vector.shape_cast %14 : vector<256x1xf32> to vector<1x256x1xf32>
    %16 = vector.broadcast %15 : vector<1x256x1xf32> to vector<1x256x32xf32>
    %17 = arith.mulf %12, %16 : vector<1x256x32xf32>
    %18 = arith.truncf %17 : vector<1x256x32xf32> to vector<1x256x32xbf16>
    %c15_i32 = arith.constant 15 : i32
    %19 = tpu.dynamic_rotate %2 by %c15_i32 dim 0 : vector<256x32xf32>, i32 -> vector<256x32xf32>
    %20 = vector.shape_cast %19 : vector<256x32xf32> to vector<1x256x32xf32>
    %c2 = arith.constant 2 : index
    %c0_7 = arith.constant 0 : index
    %c0_8 = arith.constant 0 : index
    %21 = vector.load %arg2[%c2, %c0_7, %c0_8] : memref<9x256x1xf32, #tpu.memory_space<vmem>>, vector<1x256x1xf32>
    %22 = vector.shape_cast %21 : vector<1x256x1xf32> to vector<256x1xf32>
    %23 = vector.shape_cast %22 : vector<256x1xf32> to vector<1x256x1xf32>
    %24 = vector.broadcast %23 : vector<1x256x1xf32> to vector<1x256x32xf32>
    %25 = arith.mulf %20, %24 : vector<1x256x32xf32>
    %26 = arith.truncf %25 : vector<1x256x32xf32> to vector<1x256x32xbf16>
    %c1_i32 = arith.constant 1 : i32
    %27 = tpu.dynamic_rotate %2 by %c1_i32 dim 0 : vector<256x32xf32>, i32 -> vector<256x32xf32>
    %28 = vector.shape_cast %27 : vector<256x32xf32> to vector<1x256x32xf32>
    %c3 = arith.constant 3 : index
    %c0_9 = arith.constant 0 : index
    %c0_10 = arith.constant 0 : index
    %29 = vector.load %arg2[%c3, %c0_9, %c0_10] : memref<9x256x1xf32, #tpu.memory_space<vmem>>, vector<1x256x1xf32>
    %30 = vector.shape_cast %29 : vector<1x256x1xf32> to vector<256x1xf32>
    %31 = vector.shape_cast %30 : vector<256x1xf32> to vector<1x256x1xf32>
    %32 = vector.broadcast %31 : vector<1x256x1xf32> to vector<1x256x32xf32>
    %33 = arith.mulf %28, %32 : vector<1x256x32xf32>
    %34 = arith.truncf %33 : vector<1x256x32xf32> to vector<1x256x32xbf16>
    %c255_i32 = arith.constant 255 : i32
    %35 = tpu.dynamic_rotate %2 by %c255_i32 dim 0 : vector<256x32xf32>, i32 -> vector<256x32xf32>
    %36 = vector.shape_cast %35 : vector<256x32xf32> to vector<1x256x32xf32>
    %c5 = arith.constant 5 : index
    %c0_11 = arith.constant 0 : index
    %c0_12 = arith.constant 0 : index
    %37 = vector.load %arg2[%c5, %c0_11, %c0_12] : memref<9x256x1xf32, #tpu.memory_space<vmem>>, vector<1x256x1xf32>
    %38 = vector.shape_cast %37 : vector<1x256x1xf32> to vector<256x1xf32>
    %39 = vector.shape_cast %38 : vector<256x1xf32> to vector<1x256x1xf32>
    %40 = vector.broadcast %39 : vector<1x256x1xf32> to vector<1x256x32xf32>
    %41 = arith.mulf %36, %40 : vector<1x256x32xf32>
    %42 = arith.truncf %41 : vector<1x256x32xf32> to vector<1x256x32xbf16>
    %c241_i32 = arith.constant 241 : i32
    %43 = tpu.dynamic_rotate %2 by %c241_i32 dim 0 : vector<256x32xf32>, i32 -> vector<256x32xf32>
    %44 = vector.shape_cast %43 : vector<256x32xf32> to vector<1x256x32xf32>
    %c6 = arith.constant 6 : index
    %c0_13 = arith.constant 0 : index
    %c0_14 = arith.constant 0 : index
    %45 = vector.load %arg2[%c6, %c0_13, %c0_14] : memref<9x256x1xf32, #tpu.memory_space<vmem>>, vector<1x256x1xf32>
    %46 = vector.shape_cast %45 : vector<1x256x1xf32> to vector<256x1xf32>
    %47 = vector.shape_cast %46 : vector<256x1xf32> to vector<1x256x1xf32>
    %48 = vector.broadcast %47 : vector<1x256x1xf32> to vector<1x256x32xf32>
    %49 = arith.mulf %44, %48 : vector<1x256x32xf32>
    %50 = arith.truncf %49 : vector<1x256x32xf32> to vector<1x256x32xbf16>
    %c240_i32 = arith.constant 240 : i32
    %51 = tpu.dynamic_rotate %2 by %c240_i32 dim 0 : vector<256x32xf32>, i32 -> vector<256x32xf32>
    %52 = vector.shape_cast %51 : vector<256x32xf32> to vector<1x256x32xf32>
    %c7 = arith.constant 7 : index
    %c0_15 = arith.constant 0 : index
    %c0_16 = arith.constant 0 : index
    %53 = vector.load %arg2[%c7, %c0_15, %c0_16] : memref<9x256x1xf32, #tpu.memory_space<vmem>>, vector<1x256x1xf32>
    %54 = vector.shape_cast %53 : vector<1x256x1xf32> to vector<256x1xf32>
    %55 = vector.shape_cast %54 : vector<256x1xf32> to vector<1x256x1xf32>
    %56 = vector.broadcast %55 : vector<1x256x1xf32> to vector<1x256x32xf32>
    %57 = arith.mulf %52, %56 : vector<1x256x32xf32>
    %58 = arith.truncf %57 : vector<1x256x32xf32> to vector<1x256x32xbf16>
    %c239_i32 = arith.constant 239 : i32
    %59 = tpu.dynamic_rotate %2 by %c239_i32 dim 0 : vector<256x32xf32>, i32 -> vector<256x32xf32>
    %60 = vector.shape_cast %59 : vector<256x32xf32> to vector<1x256x32xf32>
    %c8 = arith.constant 8 : index
    %c0_17 = arith.constant 0 : index
    %c0_18 = arith.constant 0 : index
    %61 = vector.load %arg2[%c8, %c0_17, %c0_18] : memref<9x256x1xf32, #tpu.memory_space<vmem>>, vector<1x256x1xf32>
    %62 = vector.shape_cast %61 : vector<1x256x1xf32> to vector<256x1xf32>
    %63 = vector.shape_cast %62 : vector<256x1xf32> to vector<1x256x1xf32>
    %64 = vector.broadcast %63 : vector<1x256x1xf32> to vector<1x256x32xf32>
    %65 = arith.mulf %60, %64 : vector<1x256x32xf32>
    %66 = arith.truncf %65 : vector<1x256x32xf32> to vector<1x256x32xbf16>
    %67 = tpu.concatenate %10, %18, %26, %34, %0, %42, %50, %58, %66 in 2 : vector<1x256x32xbf16>, vector<1x256x32xbf16>, vector<1x256x32xbf16>, vector<1x256x32xbf16>, vector<1x256x32xbf16>, vector<1x256x32xbf16>, vector<1x256x32xbf16>, vector<1x256x32xbf16>, vector<1x256x32xbf16> -> vector<1x256x288xbf16>
    %68 = vector.shape_cast %67 : vector<1x256x288xbf16> to vector<256x288xbf16>
    %c0_19 = arith.constant 0 : index
    %c0_20 = arith.constant 0 : index
    %69 = vector.load %arg3[%c0_19, %c0_20] : memref<288x128xbf16, #tpu.memory_space<vmem>>, vector<288x128xbf16>
    %cst = arith.constant dense<0.000000e+00> : vector<256x128xf32>
    %70 = tpu.matmul %68, %69, %cst {dimension_numbers = #tpu.dot_dimension_numbers<[1], [0], [0], [1], [0, 0, 1, 1], [], []>} : vector<256x288xbf16>, vector<288x128xbf16>, vector<256x128xf32> -> vector<256x128xf32>
    %c0_21 = arith.constant 0 : index
    %c0_22 = arith.constant 0 : index
    %71 = vector.load %arg4[%c0_21, %c0_22] : memref<1x128xf32, #tpu.memory_space<vmem>>, vector<1x128xf32>
    %72 = vector.broadcast %71 : vector<1x128xf32> to vector<256x128xf32>
    %73 = arith.addf %70, %72 : vector<256x128xf32>
    %cst_23 = arith.constant 0.000000e+00 : f32
    %74 = vector.broadcast %cst_23 : f32 to vector<256x128xf32>
    %75 = arith.maximumf %73, %74 : vector<256x128xf32>
    %76 = vector.shape_cast %75 : vector<256x128xf32> to vector<1x256x128xf32>
    %c8_24 = arith.constant 8 : index
    %c0_25 = arith.constant 0 : index
    %c0_26 = arith.constant 0 : index
    %77 = vector.load %arg2[%c8_24, %c0_25, %c0_26] : memref<9x256x1xf32, #tpu.memory_space<vmem>>, vector<1x256x1xf32>
    %78 = vector.shape_cast %77 : vector<1x256x1xf32> to vector<256x1xf32>
    %79 = vector.shape_cast %78 : vector<256x1xf32> to vector<1x256x1xf32>
    %80 = vector.broadcast %79 : vector<1x256x1xf32> to vector<1x256x128xf32>
    %81 = arith.mulf %76, %80 : vector<1x256x128xf32>
    %cst_27 = arith.constant dense<0.000000e+00> : vector<1x128xf32>
    %82 = vector.multi_reduction <add>, %81, %cst_27 [1] : vector<1x256x128xf32> to vector<1x128xf32>
    %c7_28 = arith.constant 7 : index
    %c0_29 = arith.constant 0 : index
    %c0_30 = arith.constant 0 : index
    %83 = vector.load %arg2[%c7_28, %c0_29, %c0_30] : memref<9x256x1xf32, #tpu.memory_space<vmem>>, vector<1x256x1xf32>
    %84 = vector.shape_cast %83 : vector<1x256x1xf32> to vector<256x1xf32>
    %85 = vector.shape_cast %84 : vector<256x1xf32> to vector<1x256x1xf32>
    %86 = vector.broadcast %85 : vector<1x256x1xf32> to vector<1x256x128xf32>
    %87 = arith.mulf %76, %86 : vector<1x256x128xf32>
    %cst_31 = arith.constant dense<0.000000e+00> : vector<1x128xf32>
    %88 = vector.multi_reduction <add>, %87, %cst_31 [1] : vector<1x256x128xf32> to vector<1x128xf32>
    %c6_32 = arith.constant 6 : index
    %c0_33 = arith.constant 0 : index
    %c0_34 = arith.constant 0 : index
    %89 = vector.load %arg2[%c6_32, %c0_33, %c0_34] : memref<9x256x1xf32, #tpu.memory_space<vmem>>, vector<1x256x1xf32>
    %90 = vector.shape_cast %89 : vector<1x256x1xf32> to vector<256x1xf32>
    %91 = vector.shape_cast %90 : vector<256x1xf32> to vector<1x256x1xf32>
    %92 = vector.broadcast %91 : vector<1x256x1xf32> to vector<1x256x128xf32>
    %93 = arith.mulf %76, %92 : vector<1x256x128xf32>
    %cst_35 = arith.constant dense<0.000000e+00> : vector<1x128xf32>
    %94 = vector.multi_reduction <add>, %93, %cst_35 [1] : vector<1x256x128xf32> to vector<1x128xf32>
    %c5_36 = arith.constant 5 : index
    %c0_37 = arith.constant 0 : index
    %c0_38 = arith.constant 0 : index
    %95 = vector.load %arg2[%c5_36, %c0_37, %c0_38] : memref<9x256x1xf32, #tpu.memory_space<vmem>>, vector<1x256x1xf32>
    %96 = vector.shape_cast %95 : vector<1x256x1xf32> to vector<256x1xf32>
    %97 = vector.shape_cast %96 : vector<256x1xf32> to vector<1x256x1xf32>
    %98 = vector.broadcast %97 : vector<1x256x1xf32> to vector<1x256x128xf32>
    %99 = arith.mulf %76, %98 : vector<1x256x128xf32>
    %cst_39 = arith.constant dense<0.000000e+00> : vector<1x128xf32>
    %100 = vector.multi_reduction <add>, %99, %cst_39 [1] : vector<1x256x128xf32> to vector<1x128xf32>
    %c4 = arith.constant 4 : index
    %c0_40 = arith.constant 0 : index
    %c0_41 = arith.constant 0 : index
    %101 = vector.load %arg2[%c4, %c0_40, %c0_41] : memref<9x256x1xf32, #tpu.memory_space<vmem>>, vector<1x256x1xf32>
    %102 = vector.shape_cast %101 : vector<1x256x1xf32> to vector<256x1xf32>
    %103 = vector.shape_cast %102 : vector<256x1xf32> to vector<1x256x1xf32>
    %104 = vector.broadcast %103 : vector<1x256x1xf32> to vector<1x256x128xf32>
    %105 = arith.mulf %76, %104 : vector<1x256x128xf32>
    %cst_42 = arith.constant dense<0.000000e+00> : vector<1x128xf32>
    %106 = vector.multi_reduction <add>, %105, %cst_42 [1] : vector<1x256x128xf32> to vector<1x128xf32>
    %c3_43 = arith.constant 3 : index
    %c0_44 = arith.constant 0 : index
    %c0_45 = arith.constant 0 : index
    %107 = vector.load %arg2[%c3_43, %c0_44, %c0_45] : memref<9x256x1xf32, #tpu.memory_space<vmem>>, vector<1x256x1xf32>
    %108 = vector.shape_cast %107 : vector<1x256x1xf32> to vector<256x1xf32>
    %109 = vector.shape_cast %108 : vector<256x1xf32> to vector<1x256x1xf32>
    %110 = vector.broadcast %109 : vector<1x256x1xf32> to vector<1x256x128xf32>
    %111 = arith.mulf %76, %110 : vector<1x256x128xf32>
    %cst_46 = arith.constant dense<0.000000e+00> : vector<1x128xf32>
    %112 = vector.multi_reduction <add>, %111, %cst_46 [1] : vector<1x256x128xf32> to vector<1x128xf32>
    %c2_47 = arith.constant 2 : index
    %c0_48 = arith.constant 0 : index
    %c0_49 = arith.constant 0 : index
    %113 = vector.load %arg2[%c2_47, %c0_48, %c0_49] : memref<9x256x1xf32, #tpu.memory_space<vmem>>, vector<1x256x1xf32>
    %114 = vector.shape_cast %113 : vector<1x256x1xf32> to vector<256x1xf32>
    %115 = vector.shape_cast %114 : vector<256x1xf32> to vector<1x256x1xf32>
    %116 = vector.broadcast %115 : vector<1x256x1xf32> to vector<1x256x128xf32>
    %117 = arith.mulf %76, %116 : vector<1x256x128xf32>
    %cst_50 = arith.constant dense<0.000000e+00> : vector<1x128xf32>
    %118 = vector.multi_reduction <add>, %117, %cst_50 [1] : vector<1x256x128xf32> to vector<1x128xf32>
    %c1_51 = arith.constant 1 : index
    %c0_52 = arith.constant 0 : index
    %c0_53 = arith.constant 0 : index
    %119 = vector.load %arg2[%c1_51, %c0_52, %c0_53] : memref<9x256x1xf32, #tpu.memory_space<vmem>>, vector<1x256x1xf32>
    %120 = vector.shape_cast %119 : vector<1x256x1xf32> to vector<256x1xf32>
    %121 = vector.shape_cast %120 : vector<256x1xf32> to vector<1x256x1xf32>
    %122 = vector.broadcast %121 : vector<1x256x1xf32> to vector<1x256x128xf32>
    %123 = arith.mulf %76, %122 : vector<1x256x128xf32>
    %cst_54 = arith.constant dense<0.000000e+00> : vector<1x128xf32>
    %124 = vector.multi_reduction <add>, %123, %cst_54 [1] : vector<1x256x128xf32> to vector<1x128xf32>
    %c0_55 = arith.constant 0 : index
    %c0_56 = arith.constant 0 : index
    %c0_57 = arith.constant 0 : index
    %125 = vector.load %arg2[%c0_55, %c0_56, %c0_57] : memref<9x256x1xf32, #tpu.memory_space<vmem>>, vector<1x256x1xf32>
    %126 = vector.shape_cast %125 : vector<1x256x1xf32> to vector<256x1xf32>
    %127 = vector.shape_cast %126 : vector<256x1xf32> to vector<1x256x1xf32>
    %128 = vector.broadcast %127 : vector<1x256x1xf32> to vector<1x256x128xf32>
    %129 = arith.mulf %76, %128 : vector<1x256x128xf32>
    %cst_58 = arith.constant dense<0.000000e+00> : vector<1x128xf32>
    %130 = vector.multi_reduction <add>, %129, %cst_58 [1] : vector<1x256x128xf32> to vector<1x128xf32>
    %131 = tpu.concatenate %82, %88, %94, %100, %106, %112, %118, %124, %130 in 1 : vector<1x128xf32>, vector<1x128xf32>, vector<1x128xf32>, vector<1x128xf32>, vector<1x128xf32>, vector<1x128xf32>, vector<1x128xf32>, vector<1x128xf32>, vector<1x128xf32> -> vector<1x1152xf32>
    %c0_59 = arith.constant 0 : index
    %c0_60 = arith.constant 0 : index
    %132 = vector.load %arg5[%c0_59, %c0_60] : memref<1152x128xf32, #tpu.memory_space<vmem>>, vector<1152x128xf32>
    %cst_61 = arith.constant dense<0.000000e+00> : vector<1x128xf32>
    %133 = tpu.matmul %131, %132, %cst_61 {dimension_numbers = #tpu.dot_dimension_numbers<[1], [0], [0], [1], [0, 0, 1, 1], [], []>} : vector<1x1152xf32>, vector<1152x128xf32>, vector<1x128xf32> -> vector<1x128xf32>
    %c0_62 = arith.constant 0 : index
    %c0_63 = arith.constant 0 : index
    %134 = vector.load %arg6[%c0_62, %c0_63] : memref<1x128xf32, #tpu.memory_space<vmem>>, vector<1x128xf32>
    %135 = arith.addf %133, %134 : vector<1x128xf32>
    %cst_64 = arith.constant 0.000000e+00 : f32
    %136 = vector.broadcast %cst_64 : f32 to vector<1x128xf32>
    %137 = arith.subf %136, %135 : vector<1x128xf32>
    %138 = math.exp %137 : vector<1x128xf32>
    %cst_65 = arith.constant 1.000000e+00 : f32
    %139 = vector.broadcast %cst_65 : f32 to vector<1x128xf32>
    %140 = arith.addf %139, %138 : vector<1x128xf32>
    %cst_66 = arith.constant 1.000000e+00 : f32
    %141 = vector.broadcast %cst_66 : f32 to vector<1x128xf32>
    %142 = arith.divf %141, %140 : vector<1x128xf32>
    %c0_67 = arith.constant 0 : index
    %c0_68 = arith.constant 0 : index
    %c0_69 = arith.constant 0 : index
    %143 = vector.load %arg7[%c0_67, %c0_68, %c0_69] : memref<1x1x128xf32, #tpu.memory_space<vmem>>, vector<1x1x128xf32>
    %144 = vector.shape_cast %143 : vector<1x1x128xf32> to vector<1x128xf32>
    %145 = vector.shape_cast %142 : vector<1x128xf32> to vector<1x1x128xf32>
    tpu.vector_store %arg7[%c0_67, %c0_68, %c0_69], %145 {strides = array<i32>} : memref<1x1x128xf32, #tpu.memory_space<vmem>>, vector<1x1x128xf32>,
    return
  }
  func.func @transform_0(%arg0: i32) -> (i32, i32, i32) {
    %c0_i32 = arith.constant 0 : i32
    %c0_i32_0 = arith.constant 0 : i32
    %c0_i32_1 = arith.constant 0 : i32
    return %arg0, %c0_i32, %c0_i32_0 : i32, i32, i32
  }
  func.func @transform_1(%arg0: i32) -> (i32, i32, i32) {
    %c0_i32 = arith.constant 0 : i32
    %c0_i32_0 = arith.constant 0 : i32
    %c0_i32_1 = arith.constant 0 : i32
    %c0_i32_2 = arith.constant 0 : i32
    return %c0_i32, %c0_i32_0, %c0_i32_1 : i32, i32, i32
  }
  func.func @transform_2(%arg0: i32) -> (i32, i32) {
    %c0_i32 = arith.constant 0 : i32
    %c0_i32_0 = arith.constant 0 : i32
    %c0_i32_1 = arith.constant 0 : i32
    return %c0_i32, %c0_i32_0 : i32, i32
  }
  func.func @transform_3(%arg0: i32) -> (i32, i32) {
    %c0_i32 = arith.constant 0 : i32
    %c0_i32_0 = arith.constant 0 : i32
    %c0_i32_1 = arith.constant 0 : i32
    return %c0_i32, %c0_i32_0 : i32, i32
  }
  func.func @transform_4(%arg0: i32) -> (i32, i32) {
    %c0_i32 = arith.constant 0 : i32
    %c0_i32_0 = arith.constant 0 : i32
    %c0_i32_1 = arith.constant 0 : i32
    return %c0_i32, %c0_i32_0 : i32, i32
  }
  func.func @transform_5(%arg0: i32) -> (i32, i32) {
    %c0_i32 = arith.constant 0 : i32
    %c0_i32_0 = arith.constant 0 : i32
    %c0_i32_1 = arith.constant 0 : i32
    return %c0_i32, %c0_i32_0 : i32, i32
  }
  func.func @transform_6(%arg0: i32) -> (i32, i32, i32) {
    %c0_i32 = arith.constant 0 : i32
    %c0_i32_0 = arith.constant 0 : i32
    %c0_i32_1 = arith.constant 0 : i32
    return %arg0, %c0_i32, %c0_i32_0 : i32, i32, i32
  }
}

</mosaic_0001>

<llo_original>
// kernel: tpu_custom_call.1
$region0: #{tpu_custom_call.1}
  #allocation0 [shape = 'u32[]', space=smem, size = 0x4, offset = 0x4, fixed_abs, tag = 'smem constant byte address 0x4 - core index']
  #allocation1 [shape = 'u32[144,128]{1,0:T(1,128)}', space=vmem, size = 0x12000, scoped, tag = 'internal scratch']
  %s0 = inlined_call_operand.vmem [shape: bf16[2,256,32], index: 0, kind: input, shape index: {}]
  %s1 = inlined_call_operand.vmem [shape: f32[9,256,1], index: 1, kind: input, shape index: {}]
  %s2 = inlined_call_operand.vmem [shape: bf16[288,128], index: 2, kind: input, shape index: {}]
  %s3 = inlined_call_operand.vmem [shape: f32[1,128], index: 3, kind: input, shape index: {}]
  %s4 = inlined_call_operand.vmem [shape: f32[1152,128], index: 4, kind: input, shape index: {}]
  %s5 = inlined_call_operand.vmem [shape: f32[1,128], index: 5, kind: input, shape index: {}]
  %s6 = inlined_call_operand.hbm [shape: f32[2,1,128], index: 6, kind: output, shape index: {}]
  %s7 = sld [smem:[#allocation0]]
  $region57: #{tpu_custom_call.1} parent=0
    _
  %s9 = ssub.s32 1, %s7
  %s10 = scalar_select 0, %s9, %s7
  $region1: #{tpu_custom_call.1} parent=0
    #allocation2 [shape = 'u8[1024]{0}', space=vmem, size = 0x400, scoped, tag = 'output window, operand 0']
    #allocation3 [shape = 's32[2]{0}', space=sflag, size = 0x8, scoped, tag = 'scoped memory for tpu_custom_call.1']
    %11 = vsyncpa [#allocation3], 0
    %s12 = scalar_lea.sflag [#allocation3], 1
    %13 = vsyncpa %s12, 0
    loop: start=0, step=1, limit=4
    $region2: #{tpu_custom_call.1} parent=1 // loop_pre_header
      _
    $region3: #{tpu_custom_call.1} parent=1 // loop_header
      %s15 = sphi 0, %s19
      %p16 = scmp.ge.s32.totalorder %s15, 4
      %s25 = sphi 0, %s27
      %s28 = sphi 0, %s25
      %s29 = sphi 0, %s28
      %s45 = sphi 0, %s29
      %s49 = sphi 0, %s49
      %s51 = sphi 0, %s49
      %s52 = sphi 0, %s51
      %s66 = sphi 0, %s52
      %s70 = sphi 0, %s70
      %s72 = sphi 0, %s70
      %s73 = sphi 0, %s72
      %s87 = sphi 0, %s73
      %s91 = sphi 0, %s91
      %s93 = sphi 0, %s91
      %s94 = sphi 0, %s93
      %s108 = sphi 0, %s94
      %s112 = sphi 0, %s112
      %s114 = sphi 0, %s112
      %s115 = sphi 0, %s114
      %s129 = sphi 0, %s115
      %s133 = sphi 0, %s133
      %s135 = sphi 0, %s133
      %s136 = sphi 0, %s135
      %s150 = sphi 0, %s136
      %s156 = sphi 0, %s158
      %s159 = sphi 0, %s156
      %s160 = sphi 0, %s159
      %s176 = sphi 0, %s160
    $region4: #{tpu_custom_call.1} parent=1 // loop_header_branch
      %18 = sbr.rel (%p16) target = $region8
    $region5: #{tpu_custom_call.1} parent=1 // loop_body
      %s20 = ssub.s32 %s15, 1
      %s21 = ssub.s32 %s15, 2
      %s22 = sadd.s32 %s15, 1
      %s23 = ssub.s32 %s15, %s22
      %p24 = scmp.eq.s32.totalorder %s23, 0
      %s26 = sadd.s32 %s25, 1
      %s27 = scalar_select %p24, %s25, %s26
      %p30 = pneg %p24
      %p31 = scmp.eq.s32.totalorder %s15, 1
      %p32 = por %p30, %p31
      %p33 = scmp.ne.s32.totalorder %s25, %s28
      %p34 = scmp.eq.s32.totalorder %s15, 0
      %p35 = por %p33, %p34
      %p36 = scmp.ne.s32.totalorder %s25, %s28
      %p37 = scmp.eq.s32.totalorder %s20, 1
      %p38 = por %p36, %p37
      %p39 = scmp.ne.s32.totalorder %s28, %s29
      %p40 = scmp.eq.s32.totalorder %s20, 0
      %p41 = por %p39, %p40
      %p42 = scmp.ne.s32.totalorder %s28, %s29
      %p43 = scmp.eq.s32.totalorder %s21, 1
      %p44 = por %p42, %p43
      %p46 = scmp.ne.s32.totalorder %s29, %s45
      %p47 = scmp.eq.s32.totalorder %s21, 0
      %p48 = por %p46, %p47
      %s50 = sadd.s32 %s49, 1
      %p53 = scmp.eq.s32.totalorder %s15, 1
      %p54 = scmp.ne.s32.totalorder %s49, %s51
      %p55 = scmp.eq.s32.totalorder %s15, 0
      %p56 = por %p54, %p55
      %p57 = scmp.ne.s32.totalorder %s49, %s51
      %p58 = scmp.eq.s32.totalorder %s20, 1
      %p59 = por %p57, %p58
      %p60 = scmp.ne.s32.totalorder %s51, %s52
      %p61 = scmp.eq.s32.totalorder %s20, 0
      %p62 = por %p60, %p61
      %p63 = scmp.ne.s32.totalorder %s51, %s52
      %p64 = scmp.eq.s32.totalorder %s21, 1
      %p65 = por %p63, %p64
      %p67 = scmp.ne.s32.totalorder %s52, %s66
      %p68 = scmp.eq.s32.totalorder %s21, 0
      %p69 = por %p67, %p68
      %s71 = sadd.s32 %s70, 1
      %p74 = scmp.eq.s32.totalorder %s15, 1
      %p75 = scmp.ne.s32.totalorder %s70, %s72
      %p76 = scmp.eq.s32.totalorder %s15, 0
      %p77 = por %p75, %p76
      %p78 = scmp.ne.s32.totalorder %s70, %s72
      %p79 = scmp.eq.s32.totalorder %s20, 1
      %p80 = por %p78, %p79
      %p81 = scmp.ne.s32.totalorder %s72, %s73
      %p82 = scmp.eq.s32.totalorder %s20, 0
      %p83 = por %p81, %p82
      %p84 = scmp.ne.s32.totalorder %s72, %s73
      %p85 = scmp.eq.s32.totalorder %s21, 1
      %p86 = por %p84, %p85
      %p88 = scmp.ne.s32.totalorder %s73, %s87
      %p89 = scmp.eq.s32.totalorder %s21, 0
      %p90 = por %p88, %p89
      %s92 = sadd.s32 %s91, 1
      %p95 = scmp.eq.s32.totalorder %s15, 1
      %p96 = scmp.ne.s32.totalorder %s91, %s93
      %p97 = scmp.eq.s32.totalorder %s15, 0
      %p98 = por %p96, %p97
      %p99 = scmp.ne.s32.totalorder %s91, %s93
      %p100 = scmp.eq.s32.totalorder %s20, 1
      %p101 = por %p99, %p100
      %p102 = scmp.ne.s32.totalorder %s93, %s94
      %p103 = scmp.eq.s32.totalorder %s20, 0
      %p104 = por %p102, %p103
      %p105 = scmp.ne.s32.totalorder %s93, %s94
      %p106 = scmp.eq.s32.totalorder %s21, 1
      %p107 = por %p105, %p106
      %p109 = scmp.ne.s32.totalorder %s94, %s108
      %p110 = scmp.eq.s32.totalorder %s21, 0
      %p111 = por %p109, %p110
      %s113 = sadd.s32 %s112, 1
      %p116 = scmp.eq.s32.totalorder %s15, 1
      %p117 = scmp.ne.s32.totalorder %s112, %s114
      %p118 = scmp.eq.s32.totalorder %s15, 0
      %p119 = por %p117, %p118
      %p120 = scmp.ne.s32.totalorder %s112, %s114
      %p121 = scmp.eq.s32.totalorder %s20, 1
      %p122 = por %p120, %p121
      %p123 = scmp.ne.s32.totalorder %s114, %s115
      %p124 = scmp.eq.s32.totalorder %s20, 0
      %p125 = por %p123, %p124
      %p126 = scmp.ne.s32.totalorder %s114, %s115
      %p127 = scmp.eq.s32.totalorder %s21, 1
      %p128 = por %p126, %p127
      %p130 = scmp.ne.s32.totalorder %s115, %s129
      %p131 = scmp.eq.s32.totalorder %s21, 0
      %p132 = por %p130, %p131
      %s134 = sadd.s32 %s133, 1
      %p137 = scmp.eq.s32.totalorder %s15, 1
      %p138 = scmp.ne.s32.totalorder %s133, %s135
      %p139 = scmp.eq.s32.totalorder %s15, 0
      %p140 = por %p138, %p139
      %p141 = scmp.ne.s32.totalorder %s133, %s135
      %p142 = scmp.eq.s32.totalorder %s20, 1
      %p143 = por %p141, %p142
      %p144 = scmp.ne.s32.totalorder %s135, %s136
      %p145 = scmp.eq.s32.totalorder %s20, 0
      %p146 = por %p144, %p145
      %p147 = scmp.ne.s32.totalorder %s135, %s136
      %p148 = scmp.eq.s32.totalorder %s21, 1
      %p149 = por %p147, %p148
      %p151 = scmp.ne.s32.totalorder %s136, %s150
      %p152 = scmp.eq.s32.totalorder %s21, 0
      %p153 = por %p151, %p152
      %s154 = ssub.s32 %s15, %s22
      %p155 = scmp.eq.s32.totalorder %s154, 0
      %s157 = sadd.s32 %s156, 1
      %s158 = scalar_select %p155, %s156, %s157
      %p161 = pneg %p155
      %p162 = scmp.eq.s32.totalorder %s15, 1
      %p163 = por %p161, %p162
      %p164 = scmp.ne.s32.totalorder %s156, %s159
      %p165 = scmp.eq.s32.totalorder %s15, 0
      %p166 = por %p164, %p165
      %p167 = scmp.ne.s32.totalorder %s156, %s159
      %p168 = scmp.eq.s32.totalorder %s20, 1
      %p169 = por %p167, %p168
      %p170 = scmp.ne.s32.totalorder %s159, %s160
      %p171 = scmp.eq.s32.totalorder %s20, 0
      %p172 = por %p170, %p171
      %p173 = scmp.ne.s32.totalorder %s159, %s160
      %p174 = scmp.eq.s32.totalorder %s21, 1
      %p175 = por %p173, %p174
      %p177 = scmp.ne.s32.totalorder %s160, %s176
      %p178 = scmp.eq.s32.totalorder %s21, 0
      %p179 = por %p177, %p178
      %p180 = scmp.le.s32.totalorder 1, %s15
      %p181 = scmp.lt.s32.totalorder %s15, 3
      %p182 = pnand %p180, %p181
      %p183 = pneg %p182
      // Predicated region
      $region9: #{tpu_custom_call.1} parent=5 // pred_check
        _
      $region10: #{tpu_custom_call.1} parent=5 // pred_check_branch
        %185 = sbr.rel (%p182) target = $region12
      $region11: #{tpu_custom_call.1} parent=5 // pred_region
        %s186 = ssub.s32 %s15, 1
        // Predicated region
        $region13: #{tpu_custom_call.1} parent=11 // pred_check
          %p187 = pneg %p62
        $region14: #{tpu_custom_call.1} parent=11 // pred_check_branch
          %189 = sbr.rel (%p187) target = $region16
        $region15: #{tpu_custom_call.1} parent=11 // pred_region
          _
        $region16: #{tpu_custom_call.1} parent=11 // pred_fallthru
          _
        // Predicated region
        $region17: #{tpu_custom_call.1} parent=11 // pred_check
          %p190 = pneg %p83
        $region18: #{tpu_custom_call.1} parent=11 // pred_check_branch
          %192 = sbr.rel (%p190) target = $region20
        $region19: #{tpu_custom_call.1} parent=11 // pred_region
          _
        $region20: #{tpu_custom_call.1} parent=11 // pred_fallthru
          _
        // Predicated region
        $region21: #{tpu_custom_call.1} parent=11 // pred_check
          %p193 = pneg %p104
        $region22: #{tpu_custom_call.1} parent=11 // pred_check_branch
          %195 = sbr.rel (%p193) target = $region24
        $region23: #{tpu_custom_call.1} parent=11 // pred_region
          _
        $region24: #{tpu_custom_call.1} parent=11 // pred_fallthru
          _
        // Predicated region
        $region25: #{tpu_custom_call.1} parent=11 // pred_check
          %p196 = pneg %p125
        $region26: #{tpu_custom_call.1} parent=11 // pred_check_branch
          %198 = sbr.rel (%p196) target = $region28
        $region27: #{tpu_custom_call.1} parent=11 // pred_region
          _
        $region28: #{tpu_custom_call.1} parent=11 // pred_fallthru
          _
        // Predicated region
        $region29: #{tpu_custom_call.1} parent=11 // pred_check
          %p199 = pneg %p146
        $region30: #{tpu_custom_call.1} parent=11 // pred_check_branch
          %201 = sbr.rel (%p199) target = $region32
        $region31: #{tpu_custom_call.1} parent=11 // pred_region
          _
        $region32: #{tpu_custom_call.1} parent=11 // pred_fallthru
          _
      $region12: #{tpu_custom_call.1} parent=5 // pred_fallthru
        _
      %p202 = scmp.lt.s32.totalorder %s15, 2
      // Predicated region
      $region33: #{tpu_custom_call.1} parent=5 // pred_check
        %p203 = pneg %p202
      $region34: #{tpu_custom_call.1} parent=5 // pred_check_branch
        %205 = sbr.rel (%p203) target = $region36
      $region35: #{tpu_custom_call.1} parent=5 // pred_region
        // Predicated region
        $region37: #{tpu_custom_call.1} parent=35 // pred_check
          %p206 = pneg %p35
        $region38: #{tpu_custom_call.1} parent=35 // pred_check_branch
          %208 = sbr.rel (%p206) target = $region40
        $region39: #{tpu_custom_call.1} parent=35 // pred_region
          %p209 = scmp.lt.s32.totalorder %s15, 1
          %s210 = scalar_select %p209, %s15, 1
          %s211 = smul.addr %s210, 32
          %s212 = smul.addr %s211, 4
          %s213 = scalar_lea.vmem %s0, %s212
        $region40: #{tpu_custom_call.1} parent=35 // pred_fallthru
          _
      $region36: #{tpu_custom_call.1} parent=5 // pred_fallthru
        _
      %p214 = scmp.le.s32.totalorder 1, %s15
      %p215 = scmp.lt.s32.totalorder %s15, 3
      %p216 = pnand %p214, %p215
      %p217 = pneg %p216
      // Predicated region
      $region41: #{tpu_custom_call.1} parent=5 // pred_check
        _
      $region42: #{tpu_custom_call.1} parent=5 // pred_check_branch
        %219 = sbr.rel (%p216) target = $region44
      $region43: #{tpu_custom_call.1} parent=5 // pred_region
        %s220 = ssub.s32 %s15, 1
        %p221 = scmp.lt.s32.totalorder %s20, 1
        %s222 = scalar_select %p221, %s20, 1
        %s223 = smul.addr %s222, 32
        %s224 = smul.addr %s223, 4
        %s225 = scalar_lea.vmem %s0, %s224
        %p226 = pneg %p41
        %p227 = pneg %p38
        %p228 = pneg %p62
        %p229 = pneg %p59
        %p230 = pneg %p83
        %p231 = pneg %p80
        %p232 = pneg %p104
        %p233 = pneg %p101
        %p234 = pneg %p125
        %p235 = pneg %p122
        %p236 = pneg %p146
        %p237 = pneg %p143
        %p238 = pneg %p172
        %p239 = pneg %p169
        %s240 = sand.u32 %s159, 1
        %s241 = scalar_lea.sflag [#allocation3], %s240
        %s242 = sand.u32 %s159, 1
        %s243 = scalar_lea.vmem [#allocation2], %s242
        %p244 = scmp.lt.s32.totalorder %s20, 1
        %s245 = scalar_select %p244, %s20, 1
        %s246 = smul.addr %s245, 32
        %s247 = smul.addr %s246, 4
        %s248 = scalar_lea.vmem %s0, %s247
        %v250 = vld [vmem:[%s248] sm:$0xf]
        %v251 = vld [vmem:[%s248 + $0x4] sm:$0xf]
        %v252 = vld [vmem:[%s248 + $0x8] sm:$0xf]
        %v253 = vld [vmem:[%s248 + $0xc] sm:$0xf]
        %v254 = vld [vmem:[%s248 + $0x10] sm:$0xf]
        %v255 = vld [vmem:[%s248 + $0x14] sm:$0xf]
        %v256 = vld [vmem:[%s248 + $0x18] sm:$0xf]
        %v257 = vld [vmem:[%s248 + $0x1c] sm:$0xf]
        %v258 = vld [vmem:[%s248 + $0x20] sm:$0xf]
        %v259 = vld [vmem:[%s248 + $0x24] sm:$0xf]
        %v260 = vld [vmem:[%s248 + $0x28] sm:$0xf]
        %v261 = vld [vmem:[%s248 + $0x2c] sm:$0xf]
        %v262 = vld [vmem:[%s248 + $0x30] sm:$0xf]
        %v263 = vld [vmem:[%s248 + $0x34] sm:$0xf]
        %v264 = vld [vmem:[%s248 + $0x38] sm:$0xf]
        %v265 = vld [vmem:[%s248 + $0x3c] sm:$0xf]
        %v266 = vld [vmem:[%s248 + $0x40] sm:$0xf]
        %v267 = vld [vmem:[%s248 + $0x44] sm:$0xf]
        %v268 = vld [vmem:[%s248 + $0x48] sm:$0xf]
        %v269 = vld [vmem:[%s248 + $0x4c] sm:$0xf]
        %v270 = vld [vmem:[%s248 + $0x50] sm:$0xf]
        %v271 = vld [vmem:[%s248 + $0x54] sm:$0xf]
        %v272 = vld [vmem:[%s248 + $0x58] sm:$0xf]
        %v273 = vld [vmem:[%s248 + $0x5c] sm:$0xf]
        %v274 = vld [vmem:[%s248 + $0x60] sm:$0xf]
        %v275 = vld [vmem:[%s248 + $0x64] sm:$0xf]
        %v276 = vld [vmem:[%s248 + $0x68] sm:$0xf]
        %v277 = vld [vmem:[%s248 + $0x6c] sm:$0xf]
        %v278 = vld [vmem:[%s248 + $0x70] sm:$0xf]
        %v279 = vld [vmem:[%s248 + $0x74] sm:$0xf]
        %v280 = vld [vmem:[%s248 + $0x78] sm:$0xf]
        %v281 = vld [vmem:[%s248 + $0x7c] sm:$0xf]
        %v282 = vunpack.c.l.bf16 %v250
        %v283 = vunpack.c.l.bf16 %v251
        %v284 = vunpack.c.l.bf16 %v252
        %v285 = vunpack.c.l.bf16 %v253
        %v286 = vunpack.c.l.bf16 %v254
        %v287 = vunpack.c.l.bf16 %v255
        %v288 = vunpack.c.l.bf16 %v256
        %v289 = vunpack.c.l.bf16 %v257
        %v290 = vunpack.c.l.bf16 %v258
        %v291 = vunpack.c.l.bf16 %v259
        %v292 = vunpack.c.l.bf16 %v260
        %v293 = vunpack.c.l.bf16 %v261
        %v294 = vunpack.c.l.bf16 %v262
        %v295 = vunpack.c.l.bf16 %v263
        %v296 = vunpack.c.l.bf16 %v264
        %v297 = vunpack.c.l.bf16 %v265
        %v298 = vunpack.c.l.bf16 %v266
        %v299 = vunpack.c.l.bf16 %v267
        %v300 = vunpack.c.l.bf16 %v268
        %v301 = vunpack.c.l.bf16 %v269
        %v302 = vunpack.c.l.bf16 %v270
        %v303 = vunpack.c.l.bf16 %v271
        %v304 = vunpack.c.l.bf16 %v272
        %v305 = vunpack.c.l.bf16 %v273
        %v306 = vunpack.c.l.bf16 %v274
        %v307 = vunpack.c.l.bf16 %v275
        %v308 = vunpack.c.l.bf16 %v276
        %v309 = vunpack.c.l.bf16 %v277
        %v310 = vunpack.c.l.bf16 %v278
        %v311 = vunpack.c.l.bf16 %v279
        %v312 = vunpack.c.l.bf16 %v280
        %v313 = vunpack.c.l.bf16 %v281
        %v314 = vrot.slane %v282, 7
        %v315 = vrot.slane %v283, 7
        %v316 = vrot.slane %v284, 7
        %v317 = vrot.slane %v285, 7
        %v318 = vrot.slane %v286, 7
        %v319 = vrot.slane %v287, 7
        %v320 = vrot.slane %v288, 7
        %v321 = vrot.slane %v289, 7
        %v322 = vrot.slane %v290, 7
        %v323 = vrot.slane %v291, 7
        %v324 = vrot.slane %v292, 7
        %v325 = vrot.slane %v293, 7
        %v326 = vrot.slane %v294, 7
        %v327 = vrot.slane %v295, 7
        %v328 = vrot.slane %v296, 7
        %v329 = vrot.slane %v297, 7
        %v330 = vrot.slane %v298, 7
        %v331 = vrot.slane %v299, 7
        %v332 = vrot.slane %v300, 7
        %v333 = vrot.slane %v301, 7
        %v334 = vrot.slane %v302, 7
        %v335 = vrot.slane %v303, 7
        %v336 = vrot.slane %v304, 7
        %v337 = vrot.slane %v305, 7
        %v338 = vrot.slane %v306, 7
        %v339 = vrot.slane %v307, 7
        %v340 = vrot.slane %v308, 7
        %v341 = vrot.slane %v309, 7
        %v342 = vrot.slane %v310, 7
        %v343 = vrot.slane %v311, 7
        %v344 = vrot.slane %v312, 7
        %v345 = vrot.slane %v313, 7
        %v346 = vlaneseq
        %v347 = vshrl.u32 %v346, 7
        %vm348 = vcmp.lt.s32.totalorder %v347, 1
        %v349 = vsel %vm348, %v344, %v345
        %v350 = vsel %vm348, %v343, %v344
        %v351 = vsel %vm348, %v342, %v343
        %v352 = vsel %vm348, %v341, %v342
        %v353 = vsel %vm348, %v340, %v341
        %v354 = vsel %vm348, %v339, %v340
        %v355 = vsel %vm348, %v338, %v339
        %v356 = vsel %vm348, %v337, %v338
        %v357 = vsel %vm348, %v336, %v337
        %v358 = vsel %vm348, %v335, %v336
        %v359 = vsel %vm348, %v334, %v335
        %v360 = vsel %vm348, %v333, %v334
        %v361 = vsel %vm348, %v332, %v333
        %v362 = vsel %vm348, %v331, %v332
        %v363 = vsel %vm348, %v330, %v331
        %v364 = vsel %vm348, %v329, %v330
        %v365 = vsel %vm348, %v328, %v329
        %v366 = vsel %vm348, %v327, %v328
        %v367 = vsel %vm348, %v326, %v327
        %v368 = vsel %vm348, %v325, %v326
        %v369 = vsel %vm348, %v324, %v325
        %v370 = vsel %vm348, %v323, %v324
        %v371 = vsel %vm348, %v322, %v323
        %v372 = vsel %vm348, %v321, %v322
        %v373 = vsel %vm348, %v320, %v321
        %v374 = vsel %vm348, %v319, %v320
        %v375 = vsel %vm348, %v318, %v319
        %v376 = vsel %vm348, %v317, %v318
        %v377 = vsel %vm348, %v316, %v317
        %v378 = vsel %vm348, %v315, %v316
        %v379 = vsel %vm348, %v314, %v315
        %v380 = vsel %vm348, %v345, %v314
        %v381 = vld [vmem:[%s1] sm:$0xff]
        %v382 = vld [vmem:[%s1 + $0x8] sm:$0xff]
        %v383 = vld [vmem:[%s1 + $0x10] sm:$0xff]
        %v384 = vld [vmem:[%s1 + $0x18] sm:$0xff]
        %v385 = vld [vmem:[%s1 + $0x20] sm:$0xff]
        %v386 = vld [vmem:[%s1 + $0x28] sm:$0xff]
        %v387 = vld [vmem:[%s1 + $0x30] sm:$0xff]
        %v388 = vld [vmem:[%s1 + $0x38] sm:$0xff]
        %v389 = vld [vmem:[%s1 + $0x40] sm:$0xff]
        %v390 = vld [vmem:[%s1 + $0x48] sm:$0xff]
        %v391 = vld [vmem:[%s1 + $0x50] sm:$0xff]
        %v392 = vld [vmem:[%s1 + $0x58] sm:$0xff]
        %v393 = vld [vmem:[%s1 + $0x60] sm:$0xff]
        %v394 = vld [vmem:[%s1 + $0x68] sm:$0xff]
        %v395 = vld [vmem:[%s1 + $0x70] sm:$0xff]
        %v396 = vld [vmem:[%s1 + $0x78] sm:$0xff]
        %v397 = vld [vmem:[%s1 + $0x80] sm:$0xff]
        %v398 = vld [vmem:[%s1 + $0x88] sm:$0xff]
        %v399 = vld [vmem:[%s1 + $0x90] sm:$0xff]
        %v400 = vld [vmem:[%s1 + $0x98] sm:$0xff]
        %v401 = vld [vmem:[%s1 + $0xa0] sm:$0xff]
        %v402 = vld [vmem:[%s1 + $0xa8] sm:$0xff]
        %v403 = vld [vmem:[%s1 + $0xb0] sm:$0xff]
        %v404 = vld [vmem:[%s1 + $0xb8] sm:$0xff]
        %v405 = vld [vmem:[%s1 + $0xc0] sm:$0xff]
        %v406 = vld [vmem:[%s1 + $0xc8] sm:$0xff]
        %v407 = vld [vmem:[%s1 + $0xd0] sm:$0xff]
        %v408 = vld [vmem:[%s1 + $0xd8] sm:$0xff]
        %v409 = vld [vmem:[%s1 + $0xe0] sm:$0xff]
        %v410 = vld [vmem:[%s1 + $0xe8] sm:$0xff]
        %v411 = vld [vmem:[%s1 + $0xf0] sm:$0xff]
        %v412 = vld [vmem:[%s1 + $0xf8] sm:$0xff]
        %414 = vset.pattern.permute.xlu0 0
        %415 = vperm.xlu0 %414, %v381
        %v416 = vpop.permute.xlu0 %415
        %419 = vset.pattern.permute.xlu0 0
        %420 = vperm.xlu0 %419, %v382
        %v421 = vpop.permute.xlu0 %420
        %424 = vset.pattern.permute.xlu0 0
        %425 = vperm.xlu0 %424, %v383
        %v426 = vpop.permute.xlu0 %425
        %429 = vset.pattern.permute.xlu0 0
        %430 = vperm.xlu0 %429, %v384
        %v431 = vpop.permute.xlu0 %430
        %434 = vset.pattern.permute.xlu0 0
        %435 = vperm.xlu0 %434, %v385
        %v436 = vpop.permute.xlu0 %435
        %439 = vset.pattern.permute.xlu0 0
        %440 = vperm.xlu0 %439, %v386
        %v441 = vpop.permute.xlu0 %440
        %444 = vset.pattern.permute.xlu0 0
        %445 = vperm.xlu0 %444, %v387
        %v446 = vpop.permute.xlu0 %445
        %449 = vset.pattern.permute.xlu0 0
        %450 = vperm.xlu0 %449, %v388
        %v451 = vpop.permute.xlu0 %450
        %454 = vset.pattern.permute.xlu0 0
        %455 = vperm.xlu0 %454, %v389
        %v456 = vpop.permute.xlu0 %455
        %459 = vset.pattern.permute.xlu0 0
        %460 = vperm.xlu0 %459, %v390
        %v461 = vpop.permute.xlu0 %460
        %464 = vset.pattern.permute.xlu0 0
        %465 = vperm.xlu0 %464, %v391
        %v466 = vpop.permute.xlu0 %465
        %469 = vset.pattern.permute.xlu0 0
        %470 = vperm.xlu0 %469, %v392
        %v471 = vpop.permute.xlu0 %470
        %474 = vset.pattern.permute.xlu0 0
        %475 = vperm.xlu0 %474, %v393
        %v476 = vpop.permute.xlu0 %475
        %479 = vset.pattern.permute.xlu0 0
        %480 = vperm.xlu0 %479, %v394
        %v481 = vpop.permute.xlu0 %480
        %484 = vset.pattern.permute.xlu0 0
        %485 = vperm.xlu0 %484, %v395
        %v486 = vpop.permute.xlu0 %485
        %489 = vset.pattern.permute.xlu0 0
        %490 = vperm.xlu0 %489, %v396
        %v491 = vpop.permute.xlu0 %490
        %494 = vset.pattern.permute.xlu0 0
        %495 = vperm.xlu0 %494, %v397
        %v496 = vpop.permute.xlu0 %495
        %499 = vset.pattern.permute.xlu0 0
        %500 = vperm.xlu0 %499, %v398
        %v501 = vpop.permute.xlu0 %500
        %504 = vset.pattern.permute.xlu0 0
        %505 = vperm.xlu0 %504, %v399
        %v506 = vpop.permute.xlu0 %505
        %509 = vset.pattern.permute.xlu0 0
        %510 = vperm.xlu0 %509, %v400
        %v511 = vpop.permute.xlu0 %510
        %514 = vset.pattern.permute.xlu0 0
        %515 = vperm.xlu0 %514, %v401
        %v516 = vpop.permute.xlu0 %515
        %519 = vset.pattern.permute.xlu0 0
        %520 = vperm.xlu0 %519, %v402
        %v521 = vpop.permute.xlu0 %520
        %524 = vset.pattern.permute.xlu0 0
        %525 = vperm.xlu0 %524, %v403
        %v526 = vpop.permute.xlu0 %525
        %529 = vset.pattern.permute.xlu0 0
        %530 = vperm.xlu0 %529, %v404
        %v531 = vpop.permute.xlu0 %530
        %534 = vset.pattern.permute.xlu0 0
        %535 = vperm.xlu0 %534, %v405
        %v536 = vpop.permute.xlu0 %535
        %539 = vset.pattern.permute.xlu0 0
        %540 = vperm.xlu0 %539, %v406
        %v541 = vpop.permute.xlu0 %540
        %544 = vset.pattern.permute.xlu0 0
        %545 = vperm.xlu0 %544, %v407
        %v546 = vpop.permute.xlu0 %545
        %549 = vset.pattern.permute.xlu0 0
        %550 = vperm.xlu0 %549, %v408
        %v551 = vpop.permute.xlu0 %550
        %554 = vset.pattern.permute.xlu0 0
        %555 = vperm.xlu0 %554, %v409
        %v556 = vpop.permute.xlu0 %555
        %559 = vset.pattern.permute.xlu0 0
        %560 = vperm.xlu0 %559, %v410
        %v561 = vpop.permute.xlu0 %560
        %564 = vset.pattern.permute.xlu0 0
        %565 = vperm.xlu0 %564, %v411
        %v566 = vpop.permute.xlu0 %565
        %569 = vset.pattern.permute.xlu0 0
        %570 = vperm.xlu0 %569, %v412
        %v571 = vpop.permute.xlu0 %570
        %v573 = vmul.f32 %v350, %v416
        %v574 = vmul.f32 %v349, %v421
        %v575 = vmul.f32 %v380, %v426
        %v576 = vmul.f32 %v379, %v431
        %v577 = vmul.f32 %v378, %v436
        %v578 = vmul.f32 %v377, %v441
        %v579 = vmul.f32 %v376, %v446
        %v580 = vmul.f32 %v375, %v451
        %v581 = vmul.f32 %v374, %v456
        %v582 = vmul.f32 %v373, %v461
        %v583 = vmul.f32 %v372, %v466
        %v584 = vmul.f32 %v371, %v471
        %v585 = vmul.f32 %v370, %v476
        %v586 = vmul.f32 %v369, %v481
        %v587 = vmul.f32 %v368, %v486
        %v588 = vmul.f32 %v367, %v491
        %v589 = vmul.f32 %v366, %v496
        %v590 = vmul.f32 %v365, %v501
        %v591 = vmul.f32 %v364, %v506
        %v592 = vmul.f32 %v363, %v511
        %v593 = vmul.f32 %v362, %v516
        %v594 = vmul.f32 %v361, %v521
        %v595 = vmul.f32 %v360, %v526
        %v596 = vmul.f32 %v359, %v531
        %v597 = vmul.f32 %v358, %v536
        %v598 = vmul.f32 %v357, %v541
        %v599 = vmul.f32 %v356, %v546
        %v600 = vmul.f32 %v355, %v551
        %v601 = vmul.f32 %v354, %v556
        %v602 = vmul.f32 %v353, %v561
        %v603 = vmul.f32 %v352, %v566
        %v604 = vmul.f32 %v351, %v571
        %v605 = vpack.c.bf16 %v574, %v573
        %v606 = vpack.c.bf16 %v576, %v575
        %v607 = vpack.c.bf16 %v578, %v577
        %v608 = vpack.c.bf16 %v580, %v579
        %v609 = vpack.c.bf16 %v582, %v581
        %v610 = vpack.c.bf16 %v584, %v583
        %v611 = vpack.c.bf16 %v586, %v585
        %v612 = vpack.c.bf16 %v588, %v587
        %v613 = vpack.c.bf16 %v590, %v589
        %v614 = vpack.c.bf16 %v592, %v591
        %v615 = vpack.c.bf16 %v594, %v593
        %v616 = vpack.c.bf16 %v596, %v595
        %v617 = vpack.c.bf16 %v598, %v597
        %v618 = vpack.c.bf16 %v600, %v599
        %v619 = vpack.c.bf16 %v602, %v601
        %v620 = vpack.c.bf16 %v604, %v603
        %s621 = scalar_lea.vmem %s1, 256
        %v622 = vld [vmem:[%s621] sm:$0xff]
        %v623 = vld [vmem:[%s621 + $0x8] sm:$0xff]
        %v624 = vld [vmem:[%s621 + $0x10] sm:$0xff]
        %v625 = vld [vmem:[%s621 + $0x18] sm:$0xff]
        %v626 = vld [vmem:[%s621 + $0x20] sm:$0xff]
        %v627 = vld [vmem:[%s621 + $0x28] sm:$0xff]
        %v628 = vld [vmem:[%s621 + $0x30] sm:$0xff]
        %v629 = vld [vmem:[%s621 + $0x38] sm:$0xff]
        %v630 = vld [vmem:[%s621 + $0x40] sm:$0xff]
        %v631 = vld [vmem:[%s621 + $0x48] sm:$0xff]
        %v632 = vld [vmem:[%s621 + $0x50] sm:$0xff]
        %v633 = vld [vmem:[%s621 + $0x58] sm:$0xff]
        %v634 = vld [vmem:[%s621 + $0x60] sm:$0xff]
        %v635 = vld [vmem:[%s621 + $0x68] sm:$0xff]
        %v636 = vld [vmem:[%s621 + $0x70] sm:$0xff]
        %v637 = vld [vmem:[%s621 + $0x78] sm:$0xff]
        %v638 = vld [vmem:[%s621 + $0x80] sm:$0xff]
        %v639 = vld [vmem:[%s621 + $0x88] sm:$0xff]
        %v640 = vld [vmem:[%s621 + $0x90] sm:$0xff]
        %v641 = vld [vmem:[%s621 + $0x98] sm:$0xff]
        %v642 = vld [vmem:[%s621 + $0xa0] sm:$0xff]
        %v643 = vld [vmem:[%s621 + $0xa8] sm:$0xff]
        %v644 = vld [vmem:[%s621 + $0xb0] sm:$0xff]
        %v645 = vld [vmem:[%s621 + $0xb8] sm:$0xff]
        %v646 = vld [vmem:[%s621 + $0xc0] sm:$0xff]
        %v647 = vld [vmem:[%s621 + $0xc8] sm:$0xff]
        %v648 = vld [vmem:[%s621 + $0xd0] sm:$0xff]
        %v649 = vld [vmem:[%s621 + $0xd8] sm:$0xff]
        %v650 = vld [vmem:[%s621 + $0xe0] sm:$0xff]
        %v651 = vld [vmem:[%s621 + $0xe8] sm:$0xff]
        %v652 = vld [vmem:[%s621 + $0xf0] sm:$0xff]
        %v653 = vld [vmem:[%s621 + $0xf8] sm:$0xff]
        %655 = vset.pattern.permute.xlu0 0
        %656 = vperm.xlu0 %655, %v622
        %v657 = vpop.permute.xlu0 %656
        %660 = vset.pattern.permute.xlu0 0
        %661 = vperm.xlu0 %660, %v623
        %v662 = vpop.permute.xlu0 %661
        %665 = vset.pattern.permute.xlu0 0
        %666 = vperm.xlu0 %665, %v624
        %v667 = vpop.permute.xlu0 %666
        %670 = vset.pattern.permute.xlu0 0
        %671 = vperm.xlu0 %670, %v625
        %v672 = vpop.permute.xlu0 %671
        %675 = vset.pattern.permute.xlu0 0
        %676 = vperm.xlu0 %675, %v626
        %v677 = vpop.permute.xlu0 %676
        %680 = vset.pattern.permute.xlu0 0
        %681 = vperm.xlu0 %680, %v627
        %v682 = vpop.permute.xlu0 %681
        %685 = vset.pattern.permute.xlu0 0
        %686 = vperm.xlu0 %685, %v628
        %v687 = vpop.permute.xlu0 %686
        %690 = vset.pattern.permute.xlu0 0
        %691 = vperm.xlu0 %690, %v629
        %v692 = vpop.permute.xlu0 %691
        %695 = vset.pattern.permute.xlu0 0
        %696 = vperm.xlu0 %695, %v630
        %v697 = vpop.permute.xlu0 %696
        %700 = vset.pattern.permute.xlu0 0
        %701 = vperm.xlu0 %700, %v631
        %v702 = vpop.permute.xlu0 %701
        %705 = vset.pattern.permute.xlu0 0
        %706 = vperm.xlu0 %705, %v632
        %v707 = vpop.permute.xlu0 %706
        %710 = vset.pattern.permute.xlu0 0
        %711 = vperm.xlu0 %710, %v633
        %v712 = vpop.permute.xlu0 %711
        %715 = vset.pattern.permute.xlu0 0
        %716 = vperm.xlu0 %715, %v634
        %v717 = vpop.permute.xlu0 %716
        %720 = vset.pattern.permute.xlu0 0
        %721 = vperm.xlu0 %720, %v635
        %v722 = vpop.permute.xlu0 %721
        %725 = vset.pattern.permute.xlu0 0
        %726 = vperm.xlu0 %725, %v636
        %v727 = vpop.permute.xlu0 %726
        %730 = vset.pattern.permute.xlu0 0
        %731 = vperm.xlu0 %730, %v637
        %v732 = vpop.permute.xlu0 %731
        %735 = vset.pattern.permute.xlu0 0
        %736 = vperm.xlu0 %735, %v638
        %v737 = vpop.permute.xlu0 %736
        %740 = vset.pattern.permute.xlu0 0
        %741 = vperm.xlu0 %740, %v639
        %v742 = vpop.permute.xlu0 %741
        %745 = vset.pattern.permute.xlu0 0
        %746 = vperm.xlu0 %745, %v640
        %v747 = vpop.permute.xlu0 %746
        %750 = vset.pattern.permute.xlu0 0
        %751 = vperm.xlu0 %750, %v641
        %v752 = vpop.permute.xlu0 %751
        %755 = vset.pattern.permute.xlu0 0
        %756 = vperm.xlu0 %755, %v642
        %v757 = vpop.permute.xlu0 %756
        %760 = vset.pattern.permute.xlu0 0
        %761 = vperm.xlu0 %760, %v643
        %v762 = vpop.permute.xlu0 %761
        %765 = vset.pattern.permute.xlu0 0
        %766 = vperm.xlu0 %765, %v644
        %v767 = vpop.permute.xlu0 %766
        %770 = vset.pattern.permute.xlu0 0
        %771 = vperm.xlu0 %770, %v645
        %v772 = vpop.permute.xlu0 %771
        %775 = vset.pattern.permute.xlu0 0
        %776 = vperm.xlu0 %775, %v646
        %v777 = vpop.permute.xlu0 %776
        %780 = vset.pattern.permute.xlu0 0
        %781 = vperm.xlu0 %780, %v647
        %v782 = vpop.permute.xlu0 %781
        %785 = vset.pattern.permute.xlu0 0
        %786 = vperm.xlu0 %785, %v648
        %v787 = vpop.permute.xlu0 %786
        %790 = vset.pattern.permute.xlu0 0
        %791 = vperm.xlu0 %790, %v649
        %v792 = vpop.permute.xlu0 %791
        %795 = vset.pattern.permute.xlu0 0
        %796 = vperm.xlu0 %795, %v650
        %v797 = vpop.permute.xlu0 %796
        %800 = vset.pattern.permute.xlu0 0
        %801 = vperm.xlu0 %800, %v651
        %v802 = vpop.permute.xlu0 %801
        %805 = vset.pattern.permute.xlu0 0
        %806 = vperm.xlu0 %805, %v652
        %v807 = vpop.permute.xlu0 %806
        %810 = vset.pattern.permute.xlu0 0
        %811 = vperm.xlu0 %810, %v653
        %v812 = vpop.permute.xlu0 %811
        %v814 = vmul.f32 %v312, %v657
        %v815 = vmul.f32 %v313, %v662
        %v816 = vmul.f32 %v282, %v667
        %v817 = vmul.f32 %v283, %v672
        %v818 = vmul.f32 %v284, %v677
        %v819 = vmul.f32 %v285, %v682
        %v820 = vmul.f32 %v286, %v687
        %v821 = vmul.f32 %v287, %v692
        %v822 = vmul.f32 %v288, %v697
        %v823 = vmul.f32 %v289, %v702
        %v824 = vmul.f32 %v290, %v707
        %v825 = vmul.f32 %v291, %v712
        %v826 = vmul.f32 %v292, %v717
        %v827 = vmul.f32 %v293, %v722
        %v828 = vmul.f32 %v294, %v727
        %v829 = vmul.f32 %v295, %v732
        %v830 = vmul.f32 %v296, %v737
        %v831 = vmul.f32 %v297, %v742
        %v832 = vmul.f32 %v298, %v747
        %v833 = vmul.f32 %v299, %v752
        %v834 = vmul.f32 %v300, %v757
        %v835 = vmul.f32 %v301, %v762
        %v836 = vmul.f32 %v302, %v767
        %v837 = vmul.f32 %v303, %v772
        %v838 = vmul.f32 %v304, %v777
        %v839 = vmul.f32 %v305, %v782
        %v840 = vmul.f32 %v306, %v787
        %v841 = vmul.f32 %v307, %v792
        %v842 = vmul.f32 %v308, %v797
        %v843 = vmul.f32 %v309, %v802
        %v844 = vmul.f32 %v310, %v807
        %v845 = vmul.f32 %v311, %v812
        %v846 = vpack.c.bf16 %v815, %v814
        %v847 = vpack.c.bf16 %v817, %v816
        %v848 = vpack.c.bf16 %v819, %v818
        %v849 = vpack.c.bf16 %v821, %v820
        %v850 = vpack.c.bf16 %v823, %v822
        %v851 = vpack.c.bf16 %v825, %v824
        %v852 = vpack.c.bf16 %v827, %v826
        %v853 = vpack.c.bf16 %v829, %v828
        %v854 = vpack.c.bf16 %v831, %v830
        %v855 = vpack.c.bf16 %v833, %v832
        %v856 = vpack.c.bf16 %v835, %v834
        %v857 = vpack.c.bf16 %v837, %v836
        %v858 = vpack.c.bf16 %v839, %v838
        %v859 = vpack.c.bf16 %v841, %v840
        %v860 = vpack.c.bf16 %v843, %v842
        %v861 = vpack.c.bf16 %v845, %v844
        %v862 = vrot.slane %v282, 1
        %v863 = vrot.slane %v283, 1
        %v864 = vrot.slane %v284, 1
        %v865 = vrot.slane %v285, 1
        %v866 = vrot.slane %v286, 1
        %v867 = vrot.slane %v287, 1
        %v868 = vrot.slane %v288, 1
        %v869 = vrot.slane %v289, 1
        %v870 = vrot.slane %v290, 1
        %v871 = vrot.slane %v291, 1
        %v872 = vrot.slane %v292, 1
        %v873 = vrot.slane %v293, 1
        %v874 = vrot.slane %v294, 1
        %v875 = vrot.slane %v295, 1
        %v876 = vrot.slane %v296, 1
        %v877 = vrot.slane %v297, 1
        %v878 = vrot.slane %v298, 1
        %v879 = vrot.slane %v299, 1
        %v880 = vrot.slane %v300, 1
        %v881 = vrot.slane %v301, 1
        %v882 = vrot.slane %v302, 1
        %v883 = vrot.slane %v303, 1
        %v884 = vrot.slane %v304, 1
        %v885 = vrot.slane %v305, 1
        %v886 = vrot.slane %v306, 1
        %v887 = vrot.slane %v307, 1
        %v888 = vrot.slane %v308, 1
        %v889 = vrot.slane %v309, 1
        %v890 = vrot.slane %v310, 1
        %v891 = vrot.slane %v311, 1
        %v892 = vrot.slane %v312, 1
        %v893 = vrot.slane %v313, 1
        %vm894 = vcmp.lt.s32.totalorder %v347, 7
        %v895 = vsel %vm894, %v892, %v893
        %v896 = vsel %vm894, %v891, %v892
        %v897 = vsel %vm894, %v890, %v891
        %v898 = vsel %vm894, %v889, %v890
        %v899 = vsel %vm894, %v888, %v889
        %v900 = vsel %vm894, %v887, %v888
        %v901 = vsel %vm894, %v886, %v887
        %v902 = vsel %vm894, %v885, %v886
        %v903 = vsel %vm894, %v884, %v885
        %v904 = vsel %vm894, %v883, %v884
        %v905 = vsel %vm894, %v882, %v883
        %v906 = vsel %vm894, %v881, %v882
        %v907 = vsel %vm894, %v880, %v881
        %v908 = vsel %vm894, %v879, %v880
        %v909 = vsel %vm894, %v878, %v879
        %v910 = vsel %vm894, %v877, %v878
        %v911 = vsel %vm894, %v876, %v877
        %v912 = vsel %vm894, %v875, %v876
        %v913 = vsel %vm894, %v874, %v875
        %v914 = vsel %vm894, %v873, %v874
        %v915 = vsel %vm894, %v872, %v873
        %v916 = vsel %vm894, %v871, %v872
        %v917 = vsel %vm894, %v870, %v871
        %v918 = vsel %vm894, %v869, %v870
        %v919 = vsel %vm894, %v868, %v869
        %v920 = vsel %vm894, %v867, %v868
        %v921 = vsel %vm894, %v866, %v867
        %v922 = vsel %vm894, %v865, %v866
        %v923 = vsel %vm894, %v864, %v865
        %v924 = vsel %vm894, %v863, %v864
        %v925 = vsel %vm894, %v862, %v863
        %v926 = vsel %vm894, %v893, %v862
        %s927 = scalar_lea.vmem %s1, 512
        %v928 = vld [vmem:[%s927] sm:$0xff]
        %v929 = vld [vmem:[%s927 + $0x8] sm:$0xff]
        %v930 = vld [vmem:[%s927 + $0x10] sm:$0xff]
        %v931 = vld [vmem:[%s927 + $0x18] sm:$0xff]
        %v932 = vld [vmem:[%s927 + $0x20] sm:$0xff]
        %v933 = vld [vmem:[%s927 + $0x28] sm:$0xff]
        %v934 = vld [vmem:[%s927 + $0x30] sm:$0xff]
        %v935 = vld [vmem:[%s927 + $0x38] sm:$0xff]
        %v936 = vld [vmem:[%s927 + $0x40] sm:$0xff]
        %v937 = vld [vmem:[%s927 + $0x48] sm:$0xff]
        %v938 = vld [vmem:[%s927 + $0x50] sm:$0xff]
        %v939 = vld [vmem:[%s927 + $0x58] sm:$0xff]
        %v940 = vld [vmem:[%s927 + $0x60] sm:$0xff]
        %v941 = vld [vmem:[%s927 + $0x68] sm:$0xff]
        %v942 = vld [vmem:[%s927 + $0x70] sm:$0xff]
        %v943 = vld [vmem:[%s927 + $0x78] sm:$0xff]
        %v944 = vld [vmem:[%s927 + $0x80] sm:$0xff]
        %v945 = vld [vmem:[%s927 + $0x88] sm:$0xff]
        %v946 = vld [vmem:[%s927 + $0x90] sm:$0xff]
        %v947 = vld [vmem:[%s927 + $0x98] sm:$0xff]
        %v948 = vld [vmem:[%s927 + $0xa0] sm:$0xff]
        %v949 = vld [vmem:[%s927 + $0xa8] sm:$0xff]
        %v950 = vld [vmem:[%s927 + $0xb0] sm:$0xff]
        %v951 = vld [vmem:[%s927 + $0xb8] sm:$0xff]
        %v952 = vld [vmem:[%s927 + $0xc0] sm:$0xff]
        %v953 = vld [vmem:[%s927 + $0xc8] sm:$0xff]
        %v954 = vld [vmem:[%s927 + $0xd0] sm:$0xff]
        %v955 = vld [vmem:[%s927 + $0xd8] sm:$0xff]
        %v956 = vld [vmem:[%s927 + $0xe0] sm:$0xff]
        %v957 = vld [vmem:[%s927 + $0xe8] sm:$0xff]
        %v958 = vld [vmem:[%s927 + $0xf0] sm:$0xff]
        %v959 = vld [vmem:[%s927 + $0xf8] sm:$0xff]
        %961 = vset.pattern.permute.xlu0 0
        %962 = vperm.xlu0 %961, %v928
        %v963 = vpop.permute.xlu0 %962
        %966 = vset.pattern.permute.xlu0 0
        %967 = vperm.xlu0 %966, %v929
        %v968 = vpop.permute.xlu0 %967
        %971 = vset.pattern.permute.xlu0 0
        %972 = vperm.xlu0 %971, %v930
        %v973 = vpop.permute.xlu0 %972
        %976 = vset.pattern.permute.xlu0 0
        %977 = vperm.xlu0 %976, %v931
        %v978 = vpop.permute.xlu0 %977
        %981 = vset.pattern.permute.xlu0 0
        %982 = vperm.xlu0 %981, %v932
        %v983 = vpop.permute.xlu0 %982
        %986 = vset.pattern.permute.xlu0 0
        %987 = vperm.xlu0 %986, %v933
        %v988 = vpop.permute.xlu0 %987
        %991 = vset.pattern.permute.xlu0 0
        %992 = vperm.xlu0 %991, %v934
        %v993 = vpop.permute.xlu0 %992
        %996 = vset.pattern.permute.xlu0 0
        %997 = vperm.xlu0 %996, %v935
        %v998 = vpop.permute.xlu0 %997
        %1001 = vset.pattern.permute.xlu0 0
        %1002 = vperm.xlu0 %1001, %v936
        %v1003 = vpop.permute.xlu0 %1002
        %1006 = vset.pattern.permute.xlu0 0
        %1007 = vperm.xlu0 %1006, %v937
        %v1008 = vpop.permute.xlu0 %1007
        %1011 = vset.pattern.permute.xlu0 0
        %1012 = vperm.xlu0 %1011, %v938
        %v1013 = vpop.permute.xlu0 %1012
        %1016 = vset.pattern.permute.xlu0 0
        %1017 = vperm.xlu0 %1016, %v939
        %v1018 = vpop.permute.xlu0 %1017
        %1021 = vset.pattern.permute.xlu0 0
        %1022 = vperm.xlu0 %1021, %v940
        %v1023 = vpop.permute.xlu0 %1022
        %1026 = vset.pattern.permute.xlu0 0
        %1027 = vperm.xlu0 %1026, %v941
        %v1028 = vpop.permute.xlu0 %1027
        %1031 = vset.pattern.permute.xlu0 0
        %1032 = vperm.xlu0 %1031, %v942
        %v1033 = vpop.permute.xlu0 %1032
        %1036 = vset.pattern.permute.xlu0 0
        %1037 = vperm.xlu0 %1036, %v943
        %v1038 = vpop.permute.xlu0 %1037
        %1041 = vset.pattern.permute.xlu0 0
        %1042 = vperm.xlu0 %1041, %v944
        %v1043 = vpop.permute.xlu0 %1042
        %1046 = vset.pattern.permute.xlu0 0
        %1047 = vperm.xlu0 %1046, %v945
        %v1048 = vpop.permute.xlu0 %1047
        %1051 = vset.pattern.permute.xlu0 0
        %1052 = vperm.xlu0 %1051, %v946
        %v1053 = vpop.permute.xlu0 %1052
        %1056 = vset.pattern.permute.xlu0 0
        %1057 = vperm.xlu0 %1056, %v947
        %v1058 = vpop.permute.xlu0 %1057
        %1061 = vset.pattern.permute.xlu0 0
        %1062 = vperm.xlu0 %1061, %v948
        %v1063 = vpop.permute.xlu0 %1062
        %1066 = vset.pattern.permute.xlu0 0
        %1067 = vperm.xlu0 %1066, %v949
        %v1068 = vpop.permute.xlu0 %1067
        %1071 = vset.pattern.permute.xlu0 0
        %1072 = vperm.xlu0 %1071, %v950
        %v1073 = vpop.permute.xlu0 %1072
        %1076 = vset.pattern.permute.xlu0 0
        %1077 = vperm.xlu0 %1076, %v951
        %v1078 = vpop.permute.xlu0 %1077
        %1081 = vset.pattern.permute.xlu0 0
        %1082 = vperm.xlu0 %1081, %v952
        %v1083 = vpop.permute.xlu0 %1082
        %1086 = vset.pattern.permute.xlu0 0
        %1087 = vperm.xlu0 %1086, %v953
        %v1088 = vpop.permute.xlu0 %1087
        %1091 = vset.pattern.permute.xlu0 0
        %1092 = vperm.xlu0 %1091, %v954
        %v1093 = vpop.permute.xlu0 %1092
        %1096 = vset.pattern.permute.xlu0 0
        %1097 = vperm.xlu0 %1096, %v955
        %v1098 = vpop.permute.xlu0 %1097
        %1101 = vset.pattern.permute.xlu0 0
        %1102 = vperm.xlu0 %1101, %v956
        %v1103 = vpop.permute.xlu0 %1102
        %1106 = vset.pattern.permute.xlu0 0
        %1107 = vperm.xlu0 %1106, %v957
        %v1108 = vpop.permute.xlu0 %1107
        %1111 = vset.pattern.permute.xlu0 0
        %1112 = vperm.xlu0 %1111, %v958
        %v1113 = vpop.permute.xlu0 %1112
        %1116 = vset.pattern.permute.xlu0 0
        %1117 = vperm.xlu0 %1116, %v959
        %v1118 = vpop.permute.xlu0 %1117
        %v1120 = vmul.f32 %v895, %v963
        %v1121 = vmul.f32 %v926, %v968
        %v1122 = vmul.f32 %v925, %v973
        %v1123 = vmul.f32 %v924, %v978
        %v1124 = vmul.f32 %v923, %v983
        %v1125 = vmul.f32 %v922, %v988
        %v1126 = vmul.f32 %v921, %v993
        %v1127 = vmul.f32 %v920, %v998
        %v1128 = vmul.f32 %v919, %v1003
        %v1129 = vmul.f32 %v918, %v1008
        %v1130 = vmul.f32 %v917, %v1013
        %v1131 = vmul.f32 %v916, %v1018
        %v1132 = vmul.f32 %v915, %v1023
        %v1133 = vmul.f32 %v914, %v1028
        %v1134 = vmul.f32 %v913, %v1033
        %v1135 = vmul.f32 %v912, %v1038
        %v1136 = vmul.f32 %v911, %v1043
        %v1137 = vmul.f32 %v910, %v1048
        %v1138 = vmul.f32 %v909, %v1053
        %v1139 = vmul.f32 %v908, %v1058
        %v1140 = vmul.f32 %v907, %v1063
        %v1141 = vmul.f32 %v906, %v1068
        %v1142 = vmul.f32 %v905, %v1073
        %v1143 = vmul.f32 %v904, %v1078
        %v1144 = vmul.f32 %v903, %v1083
        %v1145 = vmul.f32 %v902, %v1088
        %v1146 = vmul.f32 %v901, %v1093
        %v1147 = vmul.f32 %v900, %v1098
        %v1148 = vmul.f32 %v899, %v1103
        %v1149 = vmul.f32 %v898, %v1108
        %v1150 = vmul.f32 %v897, %v1113
        %v1151 = vmul.f32 %v896, %v1118
        %v1152 = vpack.c.bf16 %v1121, %v1120
        %v1153 = vpack.c.bf16 %v1123, %v1122
        %v1154 = vpack.c.bf16 %v1125, %v1124
        %v1155 = vpack.c.bf16 %v1127, %v1126
        %v1156 = vpack.c.bf16 %v1129, %v1128
        %v1157 = vpack.c.bf16 %v1131, %v1130
        %v1158 = vpack.c.bf16 %v1133, %v1132
        %v1159 = vpack.c.bf16 %v1135, %v1134
        %v1160 = vpack.c.bf16 %v1137, %v1136
        %v1161 = vpack.c.bf16 %v1139, %v1138
        %v1162 = vpack.c.bf16 %v1141, %v1140
        %v1163 = vpack.c.bf16 %v1143, %v1142
        %v1164 = vpack.c.bf16 %v1145, %v1144
        %v1165 = vpack.c.bf16 %v1147, %v1146
        %v1166 = vpack.c.bf16 %v1149, %v1148
        %v1167 = vpack.c.bf16 %v1151, %v1150
        %s1168 = scalar_lea.vmem %s1, 768
        %v1169 = vld [vmem:[%s1168] sm:$0xff]
        %v1170 = vld [vmem:[%s1168 + $0x8] sm:$0xff]
        %v1171 = vld [vmem:[%s1168 + $0x10] sm:$0xff]
        %v1172 = vld [vmem:[%s1168 + $0x18] sm:$0xff]
        %v1173 = vld [vmem:[%s1168 + $0x20] sm:$0xff]
        %v1174 = vld [vmem:[%s1168 + $0x28] sm:$0xff]
        %v1175 = vld [vmem:[%s1168 + $0x30] sm:$0xff]
        %v1176 = vld [vmem:[%s1168 + $0x38] sm:$0xff]
        %v1177 = vld [vmem:[%s1168 + $0x40] sm:$0xff]
        %v1178 = vld [vmem:[%s1168 + $0x48] sm:$0xff]
        %v1179 = vld [vmem:[%s1168 + $0x50] sm:$0xff]
        %v1180 = vld [vmem:[%s1168 + $0x58] sm:$0xff]
        %v1181 = vld [vmem:[%s1168 + $0x60] sm:$0xff]
        %v1182 = vld [vmem:[%s1168 + $0x68] sm:$0xff]
        %v1183 = vld [vmem:[%s1168 + $0x70] sm:$0xff]
        %v1184 = vld [vmem:[%s1168 + $0x78] sm:$0xff]
        %v1185 = vld [vmem:[%s1168 + $0x80] sm:$0xff]
        %v1186 = vld [vmem:[%s1168 + $0x88] sm:$0xff]
        %v1187 = vld [vmem:[%s1168 + $0x90] sm:$0xff]
        %v1188 = vld [vmem:[%s1168 + $0x98] sm:$0xff]
        %v1189 = vld [vmem:[%s1168 + $0xa0] sm:$0xff]
        %v1190 = vld [vmem:[%s1168 + $0xa8] sm:$0xff]
        %v1191 = vld [vmem:[%s1168 + $0xb0] sm:$0xff]
        %v1192 = vld [vmem:[%s1168 + $0xb8] sm:$0xff]
        %v1193 = vld [vmem:[%s1168 + $0xc0] sm:$0xff]
        %v1194 = vld [vmem:[%s1168 + $0xc8] sm:$0xff]
        %v1195 = vld [vmem:[%s1168 + $0xd0] sm:$0xff]
        %v1196 = vld [vmem:[%s1168 + $0xd8] sm:$0xff]
        %v1197 = vld [vmem:[%s1168 + $0xe0] sm:$0xff]
        %v1198 = vld [vmem:[%s1168 + $0xe8] sm:$0xff]
        %v1199 = vld [vmem:[%s1168 + $0xf0] sm:$0xff]
        %v1200 = vld [vmem:[%s1168 + $0xf8] sm:$0xff]
        %1202 = vset.pattern.permute.xlu0 0
        %1203 = vperm.xlu0 %1202, %v1169
        %v1204 = vpop.permute.xlu0 %1203
        %1207 = vset.pattern.permute.xlu0 0
        %1208 = vperm.xlu0 %1207, %v1170
        %v1209 = vpop.permute.xlu0 %1208
        %1212 = vset.pattern.permute.xlu0 0
        %1213 = vperm.xlu0 %1212, %v1171
        %v1214 = vpop.permute.xlu0 %1213
        %1217 = vset.pattern.permute.xlu0 0
        %1218 = vperm.xlu0 %1217, %v1172
        %v1219 = vpop.permute.xlu0 %1218
        %1222 = vset.pattern.permute.xlu0 0
        %1223 = vperm.xlu0 %1222, %v1173
        %v1224 = vpop.permute.xlu0 %1223
        %1227 = vset.pattern.permute.xlu0 0
        %1228 = vperm.xlu0 %1227, %v1174
        %v1229 = vpop.permute.xlu0 %1228
        %1232 = vset.pattern.permute.xlu0 0
        %1233 = vperm.xlu0 %1232, %v1175
        %v1234 = vpop.permute.xlu0 %1233
        %1237 = vset.pattern.permute.xlu0 0
        %1238 = vperm.xlu0 %1237, %v1176
        %v1239 = vpop.permute.xlu0 %1238
        %1242 = vset.pattern.permute.xlu0 0
        %1243 = vperm.xlu0 %1242, %v1177
        %v1244 = vpop.permute.xlu0 %1243
        %1247 = vset.pattern.permute.xlu0 0
        %1248 = vperm.xlu0 %1247, %v1178
        %v1249 = vpop.permute.xlu0 %1248
        %1252 = vset.pattern.permute.xlu0 0
        %1253 = vperm.xlu0 %1252, %v1179
        %v1254 = vpop.permute.xlu0 %1253
        %1257 = vset.pattern.permute.xlu0 0
        %1258 = vperm.xlu0 %1257, %v1180
        %v1259 = vpop.permute.xlu0 %1258
        %1262 = vset.pattern.permute.xlu0 0
        %1263 = vperm.xlu0 %1262, %v1181
        %v1264 = vpop.permute.xlu0 %1263
        %1267 = vset.pattern.permute.xlu0 0
        %1268 = vperm.xlu0 %1267, %v1182
        %v1269 = vpop.permute.xlu0 %1268
        %1272 = vset.pattern.permute.xlu0 0
        %1273 = vperm.xlu0 %1272, %v1183
        %v1274 = vpop.permute.xlu0 %1273
        %1277 = vset.pattern.permute.xlu0 0
        %1278 = vperm.xlu0 %1277, %v1184
        %v1279 = vpop.permute.xlu0 %1278
        %1282 = vset.pattern.permute.xlu0 0
        %1283 = vperm.xlu0 %1282, %v1185
        %v1284 = vpop.permute.xlu0 %1283
        %1287 = vset.pattern.permute.xlu0 0
        %1288 = vperm.xlu0 %1287, %v1186
        %v1289 = vpop.permute.xlu0 %1288
        %1292 = vset.pattern.permute.xlu0 0
        %1293 = vperm.xlu0 %1292, %v1187
        %v1294 = vpop.permute.xlu0 %1293
        %1297 = vset.pattern.permute.xlu0 0
        %1298 = vperm.xlu0 %1297, %v1188
        %v1299 = vpop.permute.xlu0 %1298
        %1302 = vset.pattern.permute.xlu0 0
        %1303 = vperm.xlu0 %1302, %v1189
        %v1304 = vpop.permute.xlu0 %1303
        %1307 = vset.pattern.permute.xlu0 0
        %1308 = vperm.xlu0 %1307, %v1190
        %v1309 = vpop.permute.xlu0 %1308
        %1312 = vset.pattern.permute.xlu0 0
        %1313 = vperm.xlu0 %1312, %v1191
        %v1314 = vpop.permute.xlu0 %1313
        %1317 = vset.pattern.permute.xlu0 0
        %1318 = vperm.xlu0 %1317, %v1192
        %v1319 = vpop.permute.xlu0 %1318
        %1322 = vset.pattern.permute.xlu0 0
        %1323 = vperm.xlu0 %1322, %v1193
        %v1324 = vpop.permute.xlu0 %1323
        %1327 = vset.pattern.permute.xlu0 0
        %1328 = vperm.xlu0 %1327, %v1194
        %v1329 = vpop.permute.xlu0 %1328
        %1332 = vset.pattern.permute.xlu0 0
        %1333 = vperm.xlu0 %1332, %v1195
        %v1334 = vpop.permute.xlu0 %1333
        %1337 = vset.pattern.permute.xlu0 0
        %1338 = vperm.xlu0 %1337, %v1196
        %v1339 = vpop.permute.xlu0 %1338
        %1342 = vset.pattern.permute.xlu0 0
        %1343 = vperm.xlu0 %1342, %v1197
        %v1344 = vpop.permute.xlu0 %1343
        %1347 = vset.pattern.permute.xlu0 0
        %1348 = vperm.xlu0 %1347, %v1198
        %v1349 = vpop.permute.xlu0 %1348
        %1352 = vset.pattern.permute.xlu0 0
        %1353 = vperm.xlu0 %1352, %v1199
        %v1354 = vpop.permute.xlu0 %1353
        %1357 = vset.pattern.permute.xlu0 0
        %1358 = vperm.xlu0 %1357, %v1200
        %v1359 = vpop.permute.xlu0 %1358
        %v1361 = vmul.f32 %v380, %v1204
        %v1362 = vmul.f32 %v379, %v1209
        %v1363 = vmul.f32 %v378, %v1214
        %v1364 = vmul.f32 %v377, %v1219
        %v1365 = vmul.f32 %v376, %v1224
        %v1366 = vmul.f32 %v375, %v1229
        %v1367 = vmul.f32 %v374, %v1234
        %v1368 = vmul.f32 %v373, %v1239
        %v1369 = vmul.f32 %v372, %v1244
        %v1370 = vmul.f32 %v371, %v1249
        %v1371 = vmul.f32 %v370, %v1254
        %v1372 = vmul.f32 %v369, %v1259
        %v1373 = vmul.f32 %v368, %v1264
        %v1374 = vmul.f32 %v367, %v1269
        %v1375 = vmul.f32 %v366, %v1274
        %v1376 = vmul.f32 %v365, %v1279
        %v1377 = vmul.f32 %v364, %v1284
        %v1378 = vmul.f32 %v363, %v1289
        %v1379 = vmul.f32 %v362, %v1294
        %v1380 = vmul.f32 %v361, %v1299
        %v1381 = vmul.f32 %v360, %v1304
        %v1382 = vmul.f32 %v359, %v1309
        %v1383 = vmul.f32 %v358, %v1314
        %v1384 = vmul.f32 %v357, %v1319
        %v1385 = vmul.f32 %v356, %v1324
        %v1386 = vmul.f32 %v355, %v1329
        %v1387 = vmul.f32 %v354, %v1334
        %v1388 = vmul.f32 %v353, %v1339
        %v1389 = vmul.f32 %v352, %v1344
        %v1390 = vmul.f32 %v351, %v1349
        %v1391 = vmul.f32 %v350, %v1354
        %v1392 = vmul.f32 %v349, %v1359
        %v1393 = vpack.c.bf16 %v1362, %v1361
        %v1394 = vpack.c.bf16 %v1364, %v1363
        %v1395 = vpack.c.bf16 %v1366, %v1365
        %v1396 = vpack.c.bf16 %v1368, %v1367
        %v1397 = vpack.c.bf16 %v1370, %v1369
        %v1398 = vpack.c.bf16 %v1372, %v1371
        %v1399 = vpack.c.bf16 %v1374, %v1373
        %v1400 = vpack.c.bf16 %v1376, %v1375
        %v1401 = vpack.c.bf16 %v1378, %v1377
        %v1402 = vpack.c.bf16 %v1380, %v1379
        %v1403 = vpack.c.bf16 %v1382, %v1381
        %v1404 = vpack.c.bf16 %v1384, %v1383
        %v1405 = vpack.c.bf16 %v1386, %v1385
        %v1406 = vpack.c.bf16 %v1388, %v1387
        %v1407 = vpack.c.bf16 %v1390, %v1389
        %v1408 = vpack.c.bf16 %v1392, %v1391
        %s1409 = scalar_lea.vmem %s1, 1280
        %v1410 = vld [vmem:[%s1409] sm:$0xff]
        %v1411 = vld [vmem:[%s1409 + $0x8] sm:$0xff]
        %v1412 = vld [vmem:[%s1409 + $0x10] sm:$0xff]
        %v1413 = vld [vmem:[%s1409 + $0x18] sm:$0xff]
        %v1414 = vld [vmem:[%s1409 + $0x20] sm:$0xff]
        %v1415 = vld [vmem:[%s1409 + $0x28] sm:$0xff]
        %v1416 = vld [vmem:[%s1409 + $0x30] sm:$0xff]
        %v1417 = vld [vmem:[%s1409 + $0x38] sm:$0xff]
        %v1418 = vld [vmem:[%s1409 + $0x40] sm:$0xff]
        %v1419 = vld [vmem:[%s1409 + $0x48] sm:$0xff]
        %v1420 = vld [vmem:[%s1409 + $0x50] sm:$0xff]
        %v1421 = vld [vmem:[%s1409 + $0x58] sm:$0xff]
        %v1422 = vld [vmem:[%s1409 + $0x60] sm:$0xff]
        %v1423 = vld [vmem:[%s1409 + $0x68] sm:$0xff]
        %v1424 = vld [vmem:[%s1409 + $0x70] sm:$0xff]
        %v1425 = vld [vmem:[%s1409 + $0x78] sm:$0xff]
        %v1426 = vld [vmem:[%s1409 + $0x80] sm:$0xff]
        %v1427 = vld [vmem:[%s1409 + $0x88] sm:$0xff]
        %v1428 = vld [vmem:[%s1409 + $0x90] sm:$0xff]
        %v1429 = vld [vmem:[%s1409 + $0x98] sm:$0xff]
        %v1430 = vld [vmem:[%s1409 + $0xa0] sm:$0xff]
        %v1431 = vld [vmem:[%s1409 + $0xa8] sm:$0xff]
        %v1432 = vld [vmem:[%s1409 + $0xb0] sm:$0xff]
        %v1433 = vld [vmem:[%s1409 + $0xb8] sm:$0xff]
        %v1434 = vld [vmem:[%s1409 + $0xc0] sm:$0xff]
        %v1435 = vld [vmem:[%s1409 + $0xc8] sm:$0xff]
        %v1436 = vld [vmem:[%s1409 + $0xd0] sm:$0xff]
        %v1437 = vld [vmem:[%s1409 + $0xd8] sm:$0xff]
        %v1438 = vld [vmem:[%s1409 + $0xe0] sm:$0xff]
        %v1439 = vld [vmem:[%s1409 + $0xe8] sm:$0xff]
        %v1440 = vld [vmem:[%s1409 + $0xf0] sm:$0xff]
        %v1441 = vld [vmem:[%s1409 + $0xf8] sm:$0xff]
        %1443 = vset.pattern.permute.xlu0 0
        %1444 = vperm.xlu0 %1443, %v1410
        %v1445 = vpop.permute.xlu0 %1444
        %1448 = vset.pattern.permute.xlu0 0
        %1449 = vperm.xlu0 %1448, %v1411
        %v1450 = vpop.permute.xlu0 %1449
        %1453 = vset.pattern.permute.xlu0 0
        %1454 = vperm.xlu0 %1453, %v1412
        %v1455 = vpop.permute.xlu0 %1454
        %1458 = vset.pattern.permute.xlu0 0
        %1459 = vperm.xlu0 %1458, %v1413
        %v1460 = vpop.permute.xlu0 %1459
        %1463 = vset.pattern.permute.xlu0 0
        %1464 = vperm.xlu0 %1463, %v1414
        %v1465 = vpop.permute.xlu0 %1464
        %1468 = vset.pattern.permute.xlu0 0
        %1469 = vperm.xlu0 %1468, %v1415
        %v1470 = vpop.permute.xlu0 %1469
        %1473 = vset.pattern.permute.xlu0 0
        %1474 = vperm.xlu0 %1473, %v1416
        %v1475 = vpop.permute.xlu0 %1474
        %1478 = vset.pattern.permute.xlu0 0
        %1479 = vperm.xlu0 %1478, %v1417
        %v1480 = vpop.permute.xlu0 %1479
        %1483 = vset.pattern.permute.xlu0 0
        %1484 = vperm.xlu0 %1483, %v1418
        %v1485 = vpop.permute.xlu0 %1484
        %1488 = vset.pattern.permute.xlu0 0
        %1489 = vperm.xlu0 %1488, %v1419
        %v1490 = vpop.permute.xlu0 %1489
        %1493 = vset.pattern.permute.xlu0 0
        %1494 = vperm.xlu0 %1493, %v1420
        %v1495 = vpop.permute.xlu0 %1494
        %1498 = vset.pattern.permute.xlu0 0
        %1499 = vperm.xlu0 %1498, %v1421
        %v1500 = vpop.permute.xlu0 %1499
        %1503 = vset.pattern.permute.xlu0 0
        %1504 = vperm.xlu0 %1503, %v1422
        %v1505 = vpop.permute.xlu0 %1504
        %1508 = vset.pattern.permute.xlu0 0
        %1509 = vperm.xlu0 %1508, %v1423
        %v1510 = vpop.permute.xlu0 %1509
        %1513 = vset.pattern.permute.xlu0 0
        %1514 = vperm.xlu0 %1513, %v1424
        %v1515 = vpop.permute.xlu0 %1514
        %1518 = vset.pattern.permute.xlu0 0
        %1519 = vperm.xlu0 %1518, %v1425
        %v1520 = vpop.permute.xlu0 %1519
        %1523 = vset.pattern.permute.xlu0 0
        %1524 = vperm.xlu0 %1523, %v1426
        %v1525 = vpop.permute.xlu0 %1524
        %1528 = vset.pattern.permute.xlu0 0
        %1529 = vperm.xlu0 %1528, %v1427
        %v1530 = vpop.permute.xlu0 %1529
        %1533 = vset.pattern.permute.xlu0 0
        %1534 = vperm.xlu0 %1533, %v1428
        %v1535 = vpop.permute.xlu0 %1534
        %1538 = vset.pattern.permute.xlu0 0
        %1539 = vperm.xlu0 %1538, %v1429
        %v1540 = vpop.permute.xlu0 %1539
        %1543 = vset.pattern.permute.xlu0 0
        %1544 = vperm.xlu0 %1543, %v1430
        %v1545 = vpop.permute.xlu0 %1544
        %1548 = vset.pattern.permute.xlu0 0
        %1549 = vperm.xlu0 %1548, %v1431
        %v1550 = vpop.permute.xlu0 %1549
        %1553 = vset.pattern.permute.xlu0 0
        %1554 = vperm.xlu0 %1553, %v1432
        %v1555 = vpop.permute.xlu0 %1554
        %1558 = vset.pattern.permute.xlu0 0
        %1559 = vperm.xlu0 %1558, %v1433
        %v1560 = vpop.permute.xlu0 %1559
        %1563 = vset.pattern.permute.xlu0 0
        %1564 = vperm.xlu0 %1563, %v1434
        %v1565 = vpop.permute.xlu0 %1564
        %1568 = vset.pattern.permute.xlu0 0
        %1569 = vperm.xlu0 %1568, %v1435
        %v1570 = vpop.permute.xlu0 %1569
        %1573 = vset.pattern.permute.xlu0 0
        %1574 = vperm.xlu0 %1573, %v1436
        %v1575 = vpop.permute.xlu0 %1574
        %1578 = vset.pattern.permute.xlu0 0
        %1579 = vperm.xlu0 %1578, %v1437
        %v1580 = vpop.permute.xlu0 %1579
        %1583 = vset.pattern.permute.xlu0 0
        %1584 = vperm.xlu0 %1583, %v1438
        %v1585 = vpop.permute.xlu0 %1584
        %1588 = vset.pattern.permute.xlu0 0
        %1589 = vperm.xlu0 %1588, %v1439
        %v1590 = vpop.permute.xlu0 %1589
        %1593 = vset.pattern.permute.xlu0 0
        %1594 = vperm.xlu0 %1593, %v1440
        %v1595 = vpop.permute.xlu0 %1594
        %1598 = vset.pattern.permute.xlu0 0
        %1599 = vperm.xlu0 %1598, %v1441
        %v1600 = vpop.permute.xlu0 %1599
        %v1602 = vmul.f32 %v925, %v1445
        %v1603 = vmul.f32 %v924, %v1450
        %v1604 = vmul.f32 %v923, %v1455
        %v1605 = vmul.f32 %v922, %v1460
        %v1606 = vmul.f32 %v921, %v1465
        %v1607 = vmul.f32 %v920, %v1470
        %v1608 = vmul.f32 %v919, %v1475
        %v1609 = vmul.f32 %v918, %v1480
        %v1610 = vmul.f32 %v917, %v1485
        %v1611 = vmul.f32 %v916, %v1490
        %v1612 = vmul.f32 %v915, %v1495
        %v1613 = vmul.f32 %v914, %v1500
        %v1614 = vmul.f32 %v913, %v1505
        %v1615 = vmul.f32 %v912, %v1510
        %v1616 = vmul.f32 %v911, %v1515
        %v1617 = vmul.f32 %v910, %v1520
        %v1618 = vmul.f32 %v909, %v1525
        %v1619 = vmul.f32 %v908, %v1530
        %v1620 = vmul.f32 %v907, %v1535
        %v1621 = vmul.f32 %v906, %v1540
        %v1622 = vmul.f32 %v905, %v1545
        %v1623 = vmul.f32 %v904, %v1550
        %v1624 = vmul.f32 %v903, %v1555
        %v1625 = vmul.f32 %v902, %v1560
        %v1626 = vmul.f32 %v901, %v1565
        %v1627 = vmul.f32 %v900, %v1570
        %v1628 = vmul.f32 %v899, %v1575
        %v1629 = vmul.f32 %v898, %v1580
        %v1630 = vmul.f32 %v897, %v1585
        %v1631 = vmul.f32 %v896, %v1590
        %v1632 = vmul.f32 %v895, %v1595
        %v1633 = vmul.f32 %v926, %v1600
        %v1634 = vpack.c.bf16 %v1603, %v1602
        %v1635 = vpack.c.bf16 %v1605, %v1604
        %v1636 = vpack.c.bf16 %v1607, %v1606
        %v1637 = vpack.c.bf16 %v1609, %v1608
        %v1638 = vpack.c.bf16 %v1611, %v1610
        %v1639 = vpack.c.bf16 %v1613, %v1612
        %v1640 = vpack.c.bf16 %v1615, %v1614
        %v1641 = vpack.c.bf16 %v1617, %v1616
        %v1642 = vpack.c.bf16 %v1619, %v1618
        %v1643 = vpack.c.bf16 %v1621, %v1620
        %v1644 = vpack.c.bf16 %v1623, %v1622
        %v1645 = vpack.c.bf16 %v1625, %v1624
        %v1646 = vpack.c.bf16 %v1627, %v1626
        %v1647 = vpack.c.bf16 %v1629, %v1628
        %v1648 = vpack.c.bf16 %v1631, %v1630
        %v1649 = vpack.c.bf16 %v1633, %v1632
        %s1650 = scalar_lea.vmem %s1, 1536
        %v1651 = vld [vmem:[%s1650] sm:$0xff]
        %v1652 = vld [vmem:[%s1650 + $0x8] sm:$0xff]
        %v1653 = vld [vmem:[%s1650 + $0x10] sm:$0xff]
        %v1654 = vld [vmem:[%s1650 + $0x18] sm:$0xff]
        %v1655 = vld [vmem:[%s1650 + $0x20] sm:$0xff]
        %v1656 = vld [vmem:[%s1650 + $0x28] sm:$0xff]
        %v1657 = vld [vmem:[%s1650 + $0x30] sm:$0xff]
        %v1658 = vld [vmem:[%s1650 + $0x38] sm:$0xff]
        %v1659 = vld [vmem:[%s1650 + $0x40] sm:$0xff]
        %v1660 = vld [vmem:[%s1650 + $0x48] sm:$0xff]
        %v1661 = vld [vmem:[%s1650 + $0x50] sm:$0xff]
        %v1662 = vld [vmem:[%s1650 + $0x58] sm:$0xff]
        %v1663 = vld [vmem:[%s1650 + $0x60] sm:$0xff]
        %v1664 = vld [vmem:[%s1650 + $0x68] sm:$0xff]
        %v1665 = vld [vmem:[%s1650 + $0x70] sm:$0xff]
        %v1666 = vld [vmem:[%s1650 + $0x78] sm:$0xff]
        %v1667 = vld [vmem:[%s1650 + $0x80] sm:$0xff]
        %v1668 = vld [vmem:[%s1650 + $0x88] sm:$0xff]
        %v1669 = vld [vmem:[%s1650 + $0x90] sm:$0xff]
        %v1670 = vld [vmem:[%s1650 + $0x98] sm:$0xff]
        %v1671 = vld [vmem:[%s1650 + $0xa0] sm:$0xff]
        %v1672 = vld [vmem:[%s1650 + $0xa8] sm:$0xff]
        %v1673 = vld [vmem:[%s1650 + $0xb0] sm:$0xff]
        %v1674 = vld [vmem:[%s1650 + $0xb8] sm:$0xff]
        %v1675 = vld [vmem:[%s1650 + $0xc0] sm:$0xff]
        %v1676 = vld [vmem:[%s1650 + $0xc8] sm:$0xff]
        %v1677 = vld [vmem:[%s1650 + $0xd0] sm:$0xff]
        %v1678 = vld [vmem:[%s1650 + $0xd8] sm:$0xff]
        %v1679 = vld [vmem:[%s1650 + $0xe0] sm:$0xff]
        %v1680 = vld [vmem:[%s1650 + $0xe8] sm:$0xff]
        %v1681 = vld [vmem:[%s1650 + $0xf0] sm:$0xff]
        %v1682 = vld [vmem:[%s1650 + $0xf8] sm:$0xff]
        %1684 = vset.pattern.permute.xlu0 0
        %1685 = vperm.xlu0 %1684, %v1651
        %v1686 = vpop.permute.xlu0 %1685
        %1689 = vset.pattern.permute.xlu0 0
        %1690 = vperm.xlu0 %1689, %v1652
        %v1691 = vpop.permute.xlu0 %1690
        %1694 = vset.pattern.permute.xlu0 0
        %1695 = vperm.xlu0 %1694, %v1653
        %v1696 = vpop.permute.xlu0 %1695
        %1699 = vset.pattern.permute.xlu0 0
        %1700 = vperm.xlu0 %1699, %v1654
        %v1701 = vpop.permute.xlu0 %1700
        %1704 = vset.pattern.permute.xlu0 0
        %1705 = vperm.xlu0 %1704, %v1655
        %v1706 = vpop.permute.xlu0 %1705
        %1709 = vset.pattern.permute.xlu0 0
        %1710 = vperm.xlu0 %1709, %v1656
        %v1711 = vpop.permute.xlu0 %1710
        %1714 = vset.pattern.permute.xlu0 0
        %1715 = vperm.xlu0 %1714, %v1657
        %v1716 = vpop.permute.xlu0 %1715
        %1719 = vset.pattern.permute.xlu0 0
        %1720 = vperm.xlu0 %1719, %v1658
        %v1721 = vpop.permute.xlu0 %1720
        %1724 = vset.pattern.permute.xlu0 0
        %1725 = vperm.xlu0 %1724, %v1659
        %v1726 = vpop.permute.xlu0 %1725
        %1729 = vset.pattern.permute.xlu0 0
        %1730 = vperm.xlu0 %1729, %v1660
        %v1731 = vpop.permute.xlu0 %1730
        %1734 = vset.pattern.permute.xlu0 0
        %1735 = vperm.xlu0 %1734, %v1661
        %v1736 = vpop.permute.xlu0 %1735
        %1739 = vset.pattern.permute.xlu0 0
        %1740 = vperm.xlu0 %1739, %v1662
        %v1741 = vpop.permute.xlu0 %1740
        %1744 = vset.pattern.permute.xlu0 0
        %1745 = vperm.xlu0 %1744, %v1663
        %v1746 = vpop.permute.xlu0 %1745
        %1749 = vset.pattern.permute.xlu0 0
        %1750 = vperm.xlu0 %1749, %v1664
        %v1751 = vpop.permute.xlu0 %1750
        %1754 = vset.pattern.permute.xlu0 0
        %1755 = vperm.xlu0 %1754, %v1665
        %v1756 = vpop.permute.xlu0 %1755
        %1759 = vset.pattern.permute.xlu0 0
        %1760 = vperm.xlu0 %1759, %v1666
        %v1761 = vpop.permute.xlu0 %1760
        %1764 = vset.pattern.permute.xlu0 0
        %1765 = vperm.xlu0 %1764, %v1667
        %v1766 = vpop.permute.xlu0 %1765
        %1769 = vset.pattern.permute.xlu0 0
        %1770 = vperm.xlu0 %1769, %v1668
        %v1771 = vpop.permute.xlu0 %1770
        %1774 = vset.pattern.permute.xlu0 0
        %1775 = vperm.xlu0 %1774, %v1669
        %v1776 = vpop.permute.xlu0 %1775
        %1779 = vset.pattern.permute.xlu0 0
        %1780 = vperm.xlu0 %1779, %v1670
        %v1781 = vpop.permute.xlu0 %1780
        %1784 = vset.pattern.permute.xlu0 0
        %1785 = vperm.xlu0 %1784, %v1671
        %v1786 = vpop.permute.xlu0 %1785
        %1789 = vset.pattern.permute.xlu0 0
        %1790 = vperm.xlu0 %1789, %v1672
        %v1791 = vpop.permute.xlu0 %1790
        %1794 = vset.pattern.permute.xlu0 0
        %1795 = vperm.xlu0 %1794, %v1673
        %v1796 = vpop.permute.xlu0 %1795
        %1799 = vset.pattern.permute.xlu0 0
        %1800 = vperm.xlu0 %1799, %v1674
        %v1801 = vpop.permute.xlu0 %1800
        %1804 = vset.pattern.permute.xlu0 0
        %1805 = vperm.xlu0 %1804, %v1675
        %v1806 = vpop.permute.xlu0 %1805
        %1809 = vset.pattern.permute.xlu0 0
        %1810 = vperm.xlu0 %1809, %v1676
        %v1811 = vpop.permute.xlu0 %1810
        %1814 = vset.pattern.permute.xlu0 0
        %1815 = vperm.xlu0 %1814, %v1677
        %v1816 = vpop.permute.xlu0 %1815
        %1819 = vset.pattern.permute.xlu0 0
        %1820 = vperm.xlu0 %1819, %v1678
        %v1821 = vpop.permute.xlu0 %1820
        %1824 = vset.pattern.permute.xlu0 0
        %1825 = vperm.xlu0 %1824, %v1679
        %v1826 = vpop.permute.xlu0 %1825
        %1829 = vset.pattern.permute.xlu0 0
        %1830 = vperm.xlu0 %1829, %v1680
        %v1831 = vpop.permute.xlu0 %1830
        %1834 = vset.pattern.permute.xlu0 0
        %1835 = vperm.xlu0 %1834, %v1681
        %v1836 = vpop.permute.xlu0 %1835
        %1839 = vset.pattern.permute.xlu0 0
        %1840 = vperm.xlu0 %1839, %v1682
        %v1841 = vpop.permute.xlu0 %1840
        %v1843 = vmul.f32 %v378, %v1686
        %v1844 = vmul.f32 %v377, %v1691
        %v1845 = vmul.f32 %v376, %v1696
        %v1846 = vmul.f32 %v375, %v1701
        %v1847 = vmul.f32 %v374, %v1706
        %v1848 = vmul.f32 %v373, %v1711
        %v1849 = vmul.f32 %v372, %v1716
        %v1850 = vmul.f32 %v371, %v1721
        %v1851 = vmul.f32 %v370, %v1726
        %v1852 = vmul.f32 %v369, %v1731
        %v1853 = vmul.f32 %v368, %v1736
        %v1854 = vmul.f32 %v367, %v1741
        %v1855 = vmul.f32 %v366, %v1746
        %v1856 = vmul.f32 %v365, %v1751
        %v1857 = vmul.f32 %v364, %v1756
        %v1858 = vmul.f32 %v363, %v1761
        %v1859 = vmul.f32 %v362, %v1766
        %v1860 = vmul.f32 %v361, %v1771
        %v1861 = vmul.f32 %v360, %v1776
        %v1862 = vmul.f32 %v359, %v1781
        %v1863 = vmul.f32 %v358, %v1786
        %v1864 = vmul.f32 %v357, %v1791
        %v1865 = vmul.f32 %v356, %v1796
        %v1866 = vmul.f32 %v355, %v1801
        %v1867 = vmul.f32 %v354, %v1806
        %v1868 = vmul.f32 %v353, %v1811
        %v1869 = vmul.f32 %v352, %v1816
        %v1870 = vmul.f32 %v351, %v1821
        %v1871 = vmul.f32 %v350, %v1826
        %v1872 = vmul.f32 %v349, %v1831
        %v1873 = vmul.f32 %v380, %v1836
        %v1874 = vmul.f32 %v379, %v1841
        %v1875 = vpack.c.bf16 %v1844, %v1843
        %v1876 = vpack.c.bf16 %v1846, %v1845
        %v1877 = vpack.c.bf16 %v1848, %v1847
        %v1878 = vpack.c.bf16 %v1850, %v1849
        %v1879 = vpack.c.bf16 %v1852, %v1851
        %v1880 = vpack.c.bf16 %v1854, %v1853
        %v1881 = vpack.c.bf16 %v1856, %v1855
        %v1882 = vpack.c.bf16 %v1858, %v1857
        %v1883 = vpack.c.bf16 %v1860, %v1859
        %v1884 = vpack.c.bf16 %v1862, %v1861
        %v1885 = vpack.c.bf16 %v1864, %v1863
        %v1886 = vpack.c.bf16 %v1866, %v1865
        %v1887 = vpack.c.bf16 %v1868, %v1867
        %v1888 = vpack.c.bf16 %v1870, %v1869
        %v1889 = vpack.c.bf16 %v1872, %v1871
        %v1890 = vpack.c.bf16 %v1874, %v1873
        %s1891 = scalar_lea.vmem %s1, 1792
        %v1892 = vld [vmem:[%s1891] sm:$0xff]
        %v1893 = vld [vmem:[%s1891 + $0x8] sm:$0xff]
        %v1894 = vld [vmem:[%s1891 + $0x10] sm:$0xff]
        %v1895 = vld [vmem:[%s1891 + $0x18] sm:$0xff]
        %v1896 = vld [vmem:[%s1891 + $0x20] sm:$0xff]
        %v1897 = vld [vmem:[%s1891 + $0x28] sm:$0xff]
        %v1898 = vld [vmem:[%s1891 + $0x30] sm:$0xff]
        %v1899 = vld [vmem:[%s1891 + $0x38] sm:$0xff]
        %v1900 = vld [vmem:[%s1891 + $0x40] sm:$0xff]
        %v1901 = vld [vmem:[%s1891 + $0x48] sm:$0xff]
        %v1902 = vld [vmem:[%s1891 + $0x50] sm:$0xff]
        %v1903 = vld [vmem:[%s1891 + $0x58] sm:$0xff]
        %v1904 = vld [vmem:[%s1891 + $0x60] sm:$0xff]
        %v1905 = vld [vmem:[%s1891 + $0x68] sm:$0xff]
        %v1906 = vld [vmem:[%s1891 + $0x70] sm:$0xff]
        %v1907 = vld [vmem:[%s1891 + $0x78] sm:$0xff]
        %v1908 = vld [vmem:[%s1891 + $0x80] sm:$0xff]
        %v1909 = vld [vmem:[%s1891 + $0x88] sm:$0xff]
        %v1910 = vld [vmem:[%s1891 + $0x90] sm:$0xff]
        %v1911 = vld [vmem:[%s1891 + $0x98] sm:$0xff]
        %v1912 = vld [vmem:[%s1891 + $0xa0] sm:$0xff]
        %v1913 = vld [vmem:[%s1891 + $0xa8] sm:$0xff]
        %v1914 = vld [vmem:[%s1891 + $0xb0] sm:$0xff]
        %v1915 = vld [vmem:[%s1891 + $0xb8] sm:$0xff]
        %v1916 = vld [vmem:[%s1891 + $0xc0] sm:$0xff]
        %v1917 = vld [vmem:[%s1891 + $0xc8] sm:$0xff]
        %v1918 = vld [vmem:[%s1891 + $0xd0] sm:$0xff]
        %v1919 = vld [vmem:[%s1891 + $0xd8] sm:$0xff]
        %v1920 = vld [vmem:[%s1891 + $0xe0] sm:$0xff]
        %v1921 = vld [vmem:[%s1891 + $0xe8] sm:$0xff]
        %v1922 = vld [vmem:[%s1891 + $0xf0] sm:$0xff]
        %v1923 = vld [vmem:[%s1891 + $0xf8] sm:$0xff]
        %1925 = vset.pattern.permute.xlu0 0
        %1926 = vperm.xlu0 %1925, %v1892
        %v1927 = vpop.permute.xlu0 %1926
        %1930 = vset.pattern.permute.xlu0 0
        %1931 = vperm.xlu0 %1930, %v1893
        %v1932 = vpop.permute.xlu0 %1931
        %1935 = vset.pattern.permute.xlu0 0
        %1936 = vperm.xlu0 %1935, %v1894
        %v1937 = vpop.permute.xlu0 %1936
        %1940 = vset.pattern.permute.xlu0 0
        %1941 = vperm.xlu0 %1940, %v1895
        %v1942 = vpop.permute.xlu0 %1941
        %1945 = vset.pattern.permute.xlu0 0
        %1946 = vperm.xlu0 %1945, %v1896
        %v1947 = vpop.permute.xlu0 %1946
        %1950 = vset.pattern.permute.xlu0 0
        %1951 = vperm.xlu0 %1950, %v1897
        %v1952 = vpop.permute.xlu0 %1951
        %1955 = vset.pattern.permute.xlu0 0
        %1956 = vperm.xlu0 %1955, %v1898
        %v1957 = vpop.permute.xlu0 %1956
        %1960 = vset.pattern.permute.xlu0 0
        %1961 = vperm.xlu0 %1960, %v1899
        %v1962 = vpop.permute.xlu0 %1961
        %1965 = vset.pattern.permute.xlu0 0
        %1966 = vperm.xlu0 %1965, %v1900
        %v1967 = vpop.permute.xlu0 %1966
        %1970 = vset.pattern.permute.xlu0 0
        %1971 = vperm.xlu0 %1970, %v1901
        %v1972 = vpop.permute.xlu0 %1971
        %1975 = vset.pattern.permute.xlu0 0
        %1976 = vperm.xlu0 %1975, %v1902
        %v1977 = vpop.permute.xlu0 %1976
        %1980 = vset.pattern.permute.xlu0 0
        %1981 = vperm.xlu0 %1980, %v1903
        %v1982 = vpop.permute.xlu0 %1981
        %1985 = vset.pattern.permute.xlu0 0
        %1986 = vperm.xlu0 %1985, %v1904
        %v1987 = vpop.permute.xlu0 %1986
        %1990 = vset.pattern.permute.xlu0 0
        %1991 = vperm.xlu0 %1990, %v1905
        %v1992 = vpop.permute.xlu0 %1991
        %1995 = vset.pattern.permute.xlu0 0
        %1996 = vperm.xlu0 %1995, %v1906
        %v1997 = vpop.permute.xlu0 %1996
        %2000 = vset.pattern.permute.xlu0 0
        %2001 = vperm.xlu0 %2000, %v1907
        %v2002 = vpop.permute.xlu0 %2001
        %2005 = vset.pattern.permute.xlu0 0
        %2006 = vperm.xlu0 %2005, %v1908
        %v2007 = vpop.permute.xlu0 %2006
        %2010 = vset.pattern.permute.xlu0 0
        %2011 = vperm.xlu0 %2010, %v1909
        %v2012 = vpop.permute.xlu0 %2011
        %2015 = vset.pattern.permute.xlu0 0
        %2016 = vperm.xlu0 %2015, %v1910
        %v2017 = vpop.permute.xlu0 %2016
        %2020 = vset.pattern.permute.xlu0 0
        %2021 = vperm.xlu0 %2020, %v1911
        %v2022 = vpop.permute.xlu0 %2021
        %2025 = vset.pattern.permute.xlu0 0
        %2026 = vperm.xlu0 %2025, %v1912
        %v2027 = vpop.permute.xlu0 %2026
        %2030 = vset.pattern.permute.xlu0 0
        %2031 = vperm.xlu0 %2030, %v1913
        %v2032 = vpop.permute.xlu0 %2031
        %2035 = vset.pattern.permute.xlu0 0
        %2036 = vperm.xlu0 %2035, %v1914
        %v2037 = vpop.permute.xlu0 %2036
        %2040 = vset.pattern.permute.xlu0 0
        %2041 = vperm.xlu0 %2040, %v1915
        %v2042 = vpop.permute.xlu0 %2041
        %2045 = vset.pattern.permute.xlu0 0
        %2046 = vperm.xlu0 %2045, %v1916
        %v2047 = vpop.permute.xlu0 %2046
        %2050 = vset.pattern.permute.xlu0 0
        %2051 = vperm.xlu0 %2050, %v1917
        %v2052 = vpop.permute.xlu0 %2051
        %2055 = vset.pattern.permute.xlu0 0
        %2056 = vperm.xlu0 %2055, %v1918
        %v2057 = vpop.permute.xlu0 %2056
        %2060 = vset.pattern.permute.xlu0 0
        %2061 = vperm.xlu0 %2060, %v1919
        %v2062 = vpop.permute.xlu0 %2061
        %2065 = vset.pattern.permute.xlu0 0
        %2066 = vperm.xlu0 %2065, %v1920
        %v2067 = vpop.permute.xlu0 %2066
        %2070 = vset.pattern.permute.xlu0 0
        %2071 = vperm.xlu0 %2070, %v1921
        %v2072 = vpop.permute.xlu0 %2071
        %2075 = vset.pattern.permute.xlu0 0
        %2076 = vperm.xlu0 %2075, %v1922
        %v2077 = vpop.permute.xlu0 %2076
        %2080 = vset.pattern.permute.xlu0 0
        %2081 = vperm.xlu0 %2080, %v1923
        %v2082 = vpop.permute.xlu0 %2081
        %v2084 = vmul.f32 %v284, %v1927
        %v2085 = vmul.f32 %v285, %v1932
        %v2086 = vmul.f32 %v286, %v1937
        %v2087 = vmul.f32 %v287, %v1942
        %v2088 = vmul.f32 %v288, %v1947
        %v2089 = vmul.f32 %v289, %v1952
        %v2090 = vmul.f32 %v290, %v1957
        %v2091 = vmul.f32 %v291, %v1962
        %v2092 = vmul.f32 %v292, %v1967
        %v2093 = vmul.f32 %v293, %v1972
        %v2094 = vmul.f32 %v294, %v1977
        %v2095 = vmul.f32 %v295, %v1982
        %v2096 = vmul.f32 %v296, %v1987
        %v2097 = vmul.f32 %v297, %v1992
        %v2098 = vmul.f32 %v298, %v1997
        %v2099 = vmul.f32 %v299, %v2002
        %v2100 = vmul.f32 %v300, %v2007
        %v2101 = vmul.f32 %v301, %v2012
        %v2102 = vmul.f32 %v302, %v2017
        %v2103 = vmul.f32 %v303, %v2022
        %v2104 = vmul.f32 %v304, %v2027
        %v2105 = vmul.f32 %v305, %v2032
        %v2106 = vmul.f32 %v306, %v2037
        %v2107 = vmul.f32 %v307, %v2042
        %v2108 = vmul.f32 %v308, %v2047
        %v2109 = vmul.f32 %v309, %v2052
        %v2110 = vmul.f32 %v310, %v2057
        %v2111 = vmul.f32 %v311, %v2062
        %v2112 = vmul.f32 %v312, %v2067
        %v2113 = vmul.f32 %v313, %v2072
        %v2114 = vmul.f32 %v282, %v2077
        %v2115 = vmul.f32 %v283, %v2082
        %v2116 = vpack.c.bf16 %v2085, %v2084
        %v2117 = vpack.c.bf16 %v2087, %v2086
        %v2118 = vpack.c.bf16 %v2089, %v2088
        %v2119 = vpack.c.bf16 %v2091, %v2090
        %v2120 = vpack.c.bf16 %v2093, %v2092
        %v2121 = vpack.c.bf16 %v2095, %v2094
        %v2122 = vpack.c.bf16 %v2097, %v2096
        %v2123 = vpack.c.bf16 %v2099, %v2098
        %v2124 = vpack.c.bf16 %v2101, %v2100
        %v2125 = vpack.c.bf16 %v2103, %v2102
        %v2126 = vpack.c.bf16 %v2105, %v2104
        %v2127 = vpack.c.bf16 %v2107, %v2106
        %v2128 = vpack.c.bf16 %v2109, %v2108
        %v2129 = vpack.c.bf16 %v2111, %v2110
        %v2130 = vpack.c.bf16 %v2113, %v2112
        %v2131 = vpack.c.bf16 %v2115, %v2114
        %s2132 = scalar_lea.vmem %s1, 2048
        %v2133 = vld [vmem:[%s2132] sm:$0xff]
        %v2134 = vld [vmem:[%s2132 + $0x8] sm:$0xff]
        %v2135 = vld [vmem:[%s2132 + $0x10] sm:$0xff]
        %v2136 = vld [vmem:[%s2132 + $0x18] sm:$0xff]
        %v2137 = vld [vmem:[%s2132 + $0x20] sm:$0xff]
        %v2138 = vld [vmem:[%s2132 + $0x28] sm:$0xff]
        %v2139 = vld [vmem:[%s2132 + $0x30] sm:$0xff]
        %v2140 = vld [vmem:[%s2132 + $0x38] sm:$0xff]
        %v2141 = vld [vmem:[%s2132 + $0x40] sm:$0xff]
        %v2142 = vld [vmem:[%s2132 + $0x48] sm:$0xff]
        %v2143 = vld [vmem:[%s2132 + $0x50] sm:$0xff]
        %v2144 = vld [vmem:[%s2132 + $0x58] sm:$0xff]
        %v2145 = vld [vmem:[%s2132 + $0x60] sm:$0xff]
        %v2146 = vld [vmem:[%s2132 + $0x68] sm:$0xff]
        %v2147 = vld [vmem:[%s2132 + $0x70] sm:$0xff]
        %v2148 = vld [vmem:[%s2132 + $0x78] sm:$0xff]
        %v2149 = vld [vmem:[%s2132 + $0x80] sm:$0xff]
        %v2150 = vld [vmem:[%s2132 + $0x88] sm:$0xff]
        %v2151 = vld [vmem:[%s2132 + $0x90] sm:$0xff]
        %v2152 = vld [vmem:[%s2132 + $0x98] sm:$0xff]
        %v2153 = vld [vmem:[%s2132 + $0xa0] sm:$0xff]
        %v2154 = vld [vmem:[%s2132 + $0xa8] sm:$0xff]
        %v2155 = vld [vmem:[%s2132 + $0xb0] sm:$0xff]
        %v2156 = vld [vmem:[%s2132 + $0xb8] sm:$0xff]
        %v2157 = vld [vmem:[%s2132 + $0xc0] sm:$0xff]
        %v2158 = vld [vmem:[%s2132 + $0xc8] sm:$0xff]
        %v2159 = vld [vmem:[%s2132 + $0xd0] sm:$0xff]
        %v2160 = vld [vmem:[%s2132 + $0xd8] sm:$0xff]
        %v2161 = vld [vmem:[%s2132 + $0xe0] sm:$0xff]
        %v2162 = vld [vmem:[%s2132 + $0xe8] sm:$0xff]
        %v2163 = vld [vmem:[%s2132 + $0xf0] sm:$0xff]
        %v2164 = vld [vmem:[%s2132 + $0xf8] sm:$0xff]
        %2166 = vset.pattern.permute.xlu0 0
        %2167 = vperm.xlu0 %2166, %v2133
        %v2168 = vpop.permute.xlu0 %2167
        %2171 = vset.pattern.permute.xlu0 0
        %2172 = vperm.xlu0 %2171, %v2134
        %v2173 = vpop.permute.xlu0 %2172
        %2176 = vset.pattern.permute.xlu0 0
        %2177 = vperm.xlu0 %2176, %v2135
        %v2178 = vpop.permute.xlu0 %2177
        %2181 = vset.pattern.permute.xlu0 0
        %2182 = vperm.xlu0 %2181, %v2136
        %v2183 = vpop.permute.xlu0 %2182
        %2186 = vset.pattern.permute.xlu0 0
        %2187 = vperm.xlu0 %2186, %v2137
        %v2188 = vpop.permute.xlu0 %2187
        %2191 = vset.pattern.permute.xlu0 0
        %2192 = vperm.xlu0 %2191, %v2138
        %v2193 = vpop.permute.xlu0 %2192
        %2196 = vset.pattern.permute.xlu0 0
        %2197 = vperm.xlu0 %2196, %v2139
        %v2198 = vpop.permute.xlu0 %2197
        %2201 = vset.pattern.permute.xlu0 0
        %2202 = vperm.xlu0 %2201, %v2140
        %v2203 = vpop.permute.xlu0 %2202
        %2206 = vset.pattern.permute.xlu0 0
        %2207 = vperm.xlu0 %2206, %v2141
        %v2208 = vpop.permute.xlu0 %2207
        %2211 = vset.pattern.permute.xlu0 0
        %2212 = vperm.xlu0 %2211, %v2142
        %v2213 = vpop.permute.xlu0 %2212
        %2216 = vset.pattern.permute.xlu0 0
        %2217 = vperm.xlu0 %2216, %v2143
        %v2218 = vpop.permute.xlu0 %2217
        %2221 = vset.pattern.permute.xlu0 0
        %2222 = vperm.xlu0 %2221, %v2144
        %v2223 = vpop.permute.xlu0 %2222
        %2226 = vset.pattern.permute.xlu0 0
        %2227 = vperm.xlu0 %2226, %v2145
        %v2228 = vpop.permute.xlu0 %2227
        %2231 = vset.pattern.permute.xlu0 0
        %2232 = vperm.xlu0 %2231, %v2146
        %v2233 = vpop.permute.xlu0 %2232
        %2236 = vset.pattern.permute.xlu0 0
        %2237 = vperm.xlu0 %2236, %v2147
        %v2238 = vpop.permute.xlu0 %2237
        %2241 = vset.pattern.permute.xlu0 0
        %2242 = vperm.xlu0 %2241, %v2148
        %v2243 = vpop.permute.xlu0 %2242
        %2246 = vset.pattern.permute.xlu0 0
        %2247 = vperm.xlu0 %2246, %v2149
        %v2248 = vpop.permute.xlu0 %2247
        %2251 = vset.pattern.permute.xlu0 0
        %2252 = vperm.xlu0 %2251, %v2150
        %v2253 = vpop.permute.xlu0 %2252
        %2256 = vset.pattern.permute.xlu0 0
        %2257 = vperm.xlu0 %2256, %v2151
        %v2258 = vpop.permute.xlu0 %2257
        %2261 = vset.pattern.permute.xlu0 0
        %2262 = vperm.xlu0 %2261, %v2152
        %v2263 = vpop.permute.xlu0 %2262
        %2266 = vset.pattern.permute.xlu0 0
        %2267 = vperm.xlu0 %2266, %v2153
        %v2268 = vpop.permute.xlu0 %2267
        %2271 = vset.pattern.permute.xlu0 0
        %2272 = vperm.xlu0 %2271, %v2154
        %v2273 = vpop.permute.xlu0 %2272
        %2276 = vset.pattern.permute.xlu0 0
        %2277 = vperm.xlu0 %2276, %v2155
        %v2278 = vpop.permute.xlu0 %2277
        %2281 = vset.pattern.permute.xlu0 0
        %2282 = vperm.xlu0 %2281, %v2156
        %v2283 = vpop.permute.xlu0 %2282
        %2286 = vset.pattern.permute.xlu0 0
        %2287 = vperm.xlu0 %2286, %v2157
        %v2288 = vpop.permute.xlu0 %2287
        %2291 = vset.pattern.permute.xlu0 0
        %2292 = vperm.xlu0 %2291, %v2158
        %v2293 = vpop.permute.xlu0 %2292
        %2296 = vset.pattern.permute.xlu0 0
        %2297 = vperm.xlu0 %2296, %v2159
        %v2298 = vpop.permute.xlu0 %2297
        %2301 = vset.pattern.permute.xlu0 0
        %2302 = vperm.xlu0 %2301, %v2160
        %v2303 = vpop.permute.xlu0 %2302
        %2306 = vset.pattern.permute.xlu0 0
        %2307 = vperm.xlu0 %2306, %v2161
        %v2308 = vpop.permute.xlu0 %2307
        %2311 = vset.pattern.permute.xlu0 0
        %2312 = vperm.xlu0 %2311, %v2162
        %v2313 = vpop.permute.xlu0 %2312
        %2316 = vset.pattern.permute.xlu0 0
        %2317 = vperm.xlu0 %2316, %v2163
        %v2318 = vpop.permute.xlu0 %2317
        %2321 = vset.pattern.permute.xlu0 0
        %2322 = vperm.xlu0 %2321, %v2164
        %v2323 = vpop.permute.xlu0 %2322
        %v2325 = vmul.f32 %v923, %v2168
        %v2326 = vmul.f32 %v922, %v2173
        %v2327 = vmul.f32 %v921, %v2178
        %v2328 = vmul.f32 %v920, %v2183
        %v2329 = vmul.f32 %v919, %v2188
        %v2330 = vmul.f32 %v918, %v2193
        %v2331 = vmul.f32 %v917, %v2198
        %v2332 = vmul.f32 %v916, %v2203
        %v2333 = vmul.f32 %v915, %v2208
        %v2334 = vmul.f32 %v914, %v2213
        %v2335 = vmul.f32 %v913, %v2218
        %v2336 = vmul.f32 %v912, %v2223
        %v2337 = vmul.f32 %v911, %v2228
        %v2338 = vmul.f32 %v910, %v2233
        %v2339 = vmul.f32 %v909, %v2238
        %v2340 = vmul.f32 %v908, %v2243
        %v2341 = vmul.f32 %v907, %v2248
        %v2342 = vmul.f32 %v906, %v2253
        %v2343 = vmul.f32 %v905, %v2258
        %v2344 = vmul.f32 %v904, %v2263
        %v2345 = vmul.f32 %v903, %v2268
        %v2346 = vmul.f32 %v902, %v2273
        %v2347 = vmul.f32 %v901, %v2278
        %v2348 = vmul.f32 %v900, %v2283
        %v2349 = vmul.f32 %v899, %v2288
        %v2350 = vmul.f32 %v898, %v2293
        %v2351 = vmul.f32 %v897, %v2298
        %v2352 = vmul.f32 %v896, %v2303
        %v2353 = vmul.f32 %v895, %v2308
        %v2354 = vmul.f32 %v926, %v2313
        %v2355 = vmul.f32 %v925, %v2318
        %v2356 = vmul.f32 %v924, %v2323
        %v2357 = vpack.c.bf16 %v2326, %v2325
        %v2358 = vpack.c.bf16 %v2328, %v2327
        %v2359 = vpack.c.bf16 %v2330, %v2329
        %v2360 = vpack.c.bf16 %v2332, %v2331
        %v2361 = vpack.c.bf16 %v2334, %v2333
        %v2362 = vpack.c.bf16 %v2336, %v2335
        %v2363 = vpack.c.bf16 %v2338, %v2337
        %v2364 = vpack.c.bf16 %v2340, %v2339
        %v2365 = vpack.c.bf16 %v2342, %v2341
        %v2366 = vpack.c.bf16 %v2344, %v2343
        %v2367 = vpack.c.bf16 %v2346, %v2345
        %v2368 = vpack.c.bf16 %v2348, %v2347
        %v2369 = vpack.c.bf16 %v2350, %v2349
        %v2370 = vpack.c.bf16 %v2352, %v2351
        %v2371 = vpack.c.bf16 %v2354, %v2353
        %v2372 = vpack.c.bf16 %v2356, %v2355
        %2389 = vrot.lane.b32.xlu0 %v846, 32
        %v2390 = vpop.permute.xlu0 %2389
        %2391 = vrot.lane.b32.xlu0 %v847, 32
        %v2392 = vpop.permute.xlu0 %2391
        %2393 = vrot.lane.b32.xlu0 %v848, 32
        %v2394 = vpop.permute.xlu0 %2393
        %2395 = vrot.lane.b32.xlu0 %v849, 32
        %v2396 = vpop.permute.xlu0 %2395
        %2397 = vrot.lane.b32.xlu0 %v850, 32
        %v2398 = vpop.permute.xlu0 %2397
        %2399 = vrot.lane.b32.xlu0 %v851, 32
        %v2400 = vpop.permute.xlu0 %2399
        %2401 = vrot.lane.b32.xlu0 %v852, 32
        %v2402 = vpop.permute.xlu0 %2401
        %2403 = vrot.lane.b32.xlu0 %v853, 32
        %v2404 = vpop.permute.xlu0 %2403
        %2405 = vrot.lane.b32.xlu0 %v854, 32
        %v2406 = vpop.permute.xlu0 %2405
        %2407 = vrot.lane.b32.xlu0 %v855, 32
        %v2408 = vpop.permute.xlu0 %2407
        %2409 = vrot.lane.b32.xlu0 %v856, 32
        %v2410 = vpop.permute.xlu0 %2409
        %2411 = vrot.lane.b32.xlu0 %v857, 32
        %v2412 = vpop.permute.xlu0 %2411
        %2413 = vrot.lane.b32.xlu0 %v858, 32
        %v2414 = vpop.permute.xlu0 %2413
        %2415 = vrot.lane.b32.xlu0 %v859, 32
        %v2416 = vpop.permute.xlu0 %2415
        %2417 = vrot.lane.b32.xlu0 %v860, 32
        %v2418 = vpop.permute.xlu0 %2417
        %2419 = vrot.lane.b32.xlu0 %v861, 32
        %v2420 = vpop.permute.xlu0 %2419
        %2437 = vrot.lane.b32.xlu0 %v1152, 64
        %v2438 = vpop.permute.xlu0 %2437
        %2439 = vrot.lane.b32.xlu0 %v1153, 64
        %v2440 = vpop.permute.xlu0 %2439
        %2441 = vrot.lane.b32.xlu0 %v1154, 64
        %v2442 = vpop.permute.xlu0 %2441
        %2443 = vrot.lane.b32.xlu0 %v1155, 64
        %v2444 = vpop.permute.xlu0 %2443
        %2445 = vrot.lane.b32.xlu0 %v1156, 64
        %v2446 = vpop.permute.xlu0 %2445
        %2447 = vrot.lane.b32.xlu0 %v1157, 64
        %v2448 = vpop.permute.xlu0 %2447
        %2449 = vrot.lane.b32.xlu0 %v1158, 64
        %v2450 = vpop.permute.xlu0 %2449
        %2451 = vrot.lane.b32.xlu0 %v1159, 64
        %v2452 = vpop.permute.xlu0 %2451
        %2453 = vrot.lane.b32.xlu0 %v1160, 64
        %v2454 = vpop.permute.xlu0 %2453
        %2455 = vrot.lane.b32.xlu0 %v1161, 64
        %v2456 = vpop.permute.xlu0 %2455
        %2457 = vrot.lane.b32.xlu0 %v1162, 64
        %v2458 = vpop.permute.xlu0 %2457
        %2459 = vrot.lane.b32.xlu0 %v1163, 64
        %v2460 = vpop.permute.xlu0 %2459
        %2461 = vrot.lane.b32.xlu0 %v1164, 64
        %v2462 = vpop.permute.xlu0 %2461
        %2463 = vrot.lane.b32.xlu0 %v1165, 64
        %v2464 = vpop.permute.xlu0 %2463
        %2465 = vrot.lane.b32.xlu0 %v1166, 64
        %v2466 = vpop.permute.xlu0 %2465
        %2467 = vrot.lane.b32.xlu0 %v1167, 64
        %v2468 = vpop.permute.xlu0 %2467
        %2485 = vrot.lane.b32.xlu0 %v1393, 96
        %v2486 = vpop.permute.xlu0 %2485
        %2487 = vrot.lane.b32.xlu0 %v1394, 96
        %v2488 = vpop.permute.xlu0 %2487
        %2489 = vrot.lane.b32.xlu0 %v1395, 96
        %v2490 = vpop.permute.xlu0 %2489
        %2491 = vrot.lane.b32.xlu0 %v1396, 96
        %v2492 = vpop.permute.xlu0 %2491
        %2493 = vrot.lane.b32.xlu0 %v1397, 96
        %v2494 = vpop.permute.xlu0 %2493
        %2495 = vrot.lane.b32.xlu0 %v1398, 96
        %v2496 = vpop.permute.xlu0 %2495
        %2497 = vrot.lane.b32.xlu0 %v1399, 96
        %v2498 = vpop.permute.xlu0 %2497
        %2499 = vrot.lane.b32.xlu0 %v1400, 96
        %v2500 = vpop.permute.xlu0 %2499
        %2501 = vrot.lane.b32.xlu0 %v1401, 96
        %v2502 = vpop.permute.xlu0 %2501
        %2503 = vrot.lane.b32.xlu0 %v1402, 96
        %v2504 = vpop.permute.xlu0 %2503
        %2505 = vrot.lane.b32.xlu0 %v1403, 96
        %v2506 = vpop.permute.xlu0 %2505
        %2507 = vrot.lane.b32.xlu0 %v1404, 96
        %v2508 = vpop.permute.xlu0 %2507
        %2509 = vrot.lane.b32.xlu0 %v1405, 96
        %v2510 = vpop.permute.xlu0 %2509
        %2511 = vrot.lane.b32.xlu0 %v1406, 96
        %v2512 = vpop.permute.xlu0 %2511
        %2513 = vrot.lane.b32.xlu0 %v1407, 96
        %v2514 = vpop.permute.xlu0 %2513
        %2515 = vrot.lane.b32.xlu0 %v1408, 96
        %v2516 = vpop.permute.xlu0 %2515
        %v2549 = vunpack.c.l.b16 %v250
        %v2550 = vunpack.c.l.b16 %v251
        %v2551 = vunpack.c.l.b16 %v252
        %v2552 = vunpack.c.l.b16 %v253
        %v2553 = vunpack.c.l.b16 %v254
        %v2554 = vunpack.c.l.b16 %v255
        %v2555 = vunpack.c.l.b16 %v256
        %v2556 = vunpack.c.l.b16 %v257
        %v2557 = vunpack.c.l.b16 %v258
        %v2558 = vunpack.c.l.b16 %v259
        %v2559 = vunpack.c.l.b16 %v260
        %v2560 = vunpack.c.l.b16 %v261
        %v2561 = vunpack.c.l.b16 %v262
        %v2562 = vunpack.c.l.b16 %v263
        %v2563 = vunpack.c.l.b16 %v264
        %v2564 = vunpack.c.l.b16 %v265
        %v2565 = vunpack.c.l.b16 %v266
        %v2566 = vunpack.c.l.b16 %v267
        %v2567 = vunpack.c.l.b16 %v268
        %v2568 = vunpack.c.l.b16 %v269
        %v2569 = vunpack.c.l.b16 %v270
        %v2570 = vunpack.c.l.b16 %v271
        %v2571 = vunpack.c.l.b16 %v272
        %v2572 = vunpack.c.l.b16 %v273
        %v2573 = vunpack.c.l.b16 %v274
        %v2574 = vunpack.c.l.b16 %v275
        %v2575 = vunpack.c.l.b16 %v276
        %v2576 = vunpack.c.l.b16 %v277
        %v2577 = vunpack.c.l.b16 %v278
        %v2578 = vunpack.c.l.b16 %v279
        %v2579 = vunpack.c.l.b16 %v280
        %v2580 = vunpack.c.l.b16 %v281
        %v2581 = vpack.c.b16 %v2550, %v2549
        %v2582 = vpack.c.b16 %v2552, %v2551
        %v2583 = vpack.c.b16 %v2554, %v2553
        %v2584 = vpack.c.b16 %v2556, %v2555
        %v2585 = vpack.c.b16 %v2558, %v2557
        %v2586 = vpack.c.b16 %v2560, %v2559
        %v2587 = vpack.c.b16 %v2562, %v2561
        %v2588 = vpack.c.b16 %v2564, %v2563
        %v2589 = vpack.c.b16 %v2566, %v2565
        %v2590 = vpack.c.b16 %v2568, %v2567
        %v2591 = vpack.c.b16 %v2570, %v2569
        %v2592 = vpack.c.b16 %v2572, %v2571
        %v2593 = vpack.c.b16 %v2574, %v2573
        %v2594 = vpack.c.b16 %v2576, %v2575
        %v2595 = vpack.c.b16 %v2578, %v2577
        %v2596 = vpack.c.b16 %v2580, %v2579
        %2613 = vrot.lane.b32.xlu0 %v1634, 32
        %v2614 = vpop.permute.xlu0 %2613
        %2615 = vrot.lane.b32.xlu0 %v1635, 32
        %v2616 = vpop.permute.xlu0 %2615
        %2617 = vrot.lane.b32.xlu0 %v1636, 32
        %v2618 = vpop.permute.xlu0 %2617
        %2619 = vrot.lane.b32.xlu0 %v1637, 32
        %v2620 = vpop.permute.xlu0 %2619
        %2621 = vrot.lane.b32.xlu0 %v1638, 32
        %v2622 = vpop.permute.xlu0 %2621
        %2623 = vrot.lane.b32.xlu0 %v1639, 32
        %v2624 = vpop.permute.xlu0 %2623
        %2625 = vrot.lane.b32.xlu0 %v1640, 32
        %v2626 = vpop.permute.xlu0 %2625
        %2627 = vrot.lane.b32.xlu0 %v1641, 32
        %v2628 = vpop.permute.xlu0 %2627
        %2629 = vrot.lane.b32.xlu0 %v1642, 32
        %v2630 = vpop.permute.xlu0 %2629
        %2631 = vrot.lane.b32.xlu0 %v1643, 32
        %v2632 = vpop.permute.xlu0 %2631
        %2633 = vrot.lane.b32.xlu0 %v1644, 32
        %v2634 = vpop.permute.xlu0 %2633
        %2635 = vrot.lane.b32.xlu0 %v1645, 32
        %v2636 = vpop.permute.xlu0 %2635
        %2637 = vrot.lane.b32.xlu0 %v1646, 32
        %v2638 = vpop.permute.xlu0 %2637
        %2639 = vrot.lane.b32.xlu0 %v1647, 32
        %v2640 = vpop.permute.xlu0 %2639
        %2641 = vrot.lane.b32.xlu0 %v1648, 32
        %v2642 = vpop.permute.xlu0 %2641
        %2643 = vrot.lane.b32.xlu0 %v1649, 32
        %v2644 = vpop.permute.xlu0 %2643
        %2661 = vrot.lane.b32.xlu0 %v1875, 64
        %v2662 = vpop.permute.xlu0 %2661
        %2663 = vrot.lane.b32.xlu0 %v1876, 64
        %v2664 = vpop.permute.xlu0 %2663
        %2665 = vrot.lane.b32.xlu0 %v1877, 64
        %v2666 = vpop.permute.xlu0 %2665
        %2667 = vrot.lane.b32.xlu0 %v1878, 64
        %v2668 = vpop.permute.xlu0 %2667
        %2669 = vrot.lane.b32.xlu0 %v1879, 64
        %v2670 = vpop.permute.xlu0 %2669
        %2671 = vrot.lane.b32.xlu0 %v1880, 64
        %v2672 = vpop.permute.xlu0 %2671
        %2673 = vrot.lane.b32.xlu0 %v1881, 64
        %v2674 = vpop.permute.xlu0 %2673
        %2675 = vrot.lane.b32.xlu0 %v1882, 64
        %v2676 = vpop.permute.xlu0 %2675
        %2677 = vrot.lane.b32.xlu0 %v1883, 64
        %v2678 = vpop.permute.xlu0 %2677
        %2679 = vrot.lane.b32.xlu0 %v1884, 64
        %v2680 = vpop.permute.xlu0 %2679
        %2681 = vrot.lane.b32.xlu0 %v1885, 64
        %v2682 = vpop.permute.xlu0 %2681
        %2683 = vrot.lane.b32.xlu0 %v1886, 64
        %v2684 = vpop.permute.xlu0 %2683
        %2685 = vrot.lane.b32.xlu0 %v1887, 64
        %v2686 = vpop.permute.xlu0 %2685
        %2687 = vrot.lane.b32.xlu0 %v1888, 64
        %v2688 = vpop.permute.xlu0 %2687
        %2689 = vrot.lane.b32.xlu0 %v1889, 64
        %v2690 = vpop.permute.xlu0 %2689
        %2691 = vrot.lane.b32.xlu0 %v1890, 64
        %v2692 = vpop.permute.xlu0 %2691
        %2709 = vrot.lane.b32.xlu0 %v2116, 96
        %v2710 = vpop.permute.xlu0 %2709
        %2711 = vrot.lane.b32.xlu0 %v2117, 96
        %v2712 = vpop.permute.xlu0 %2711
        %2713 = vrot.lane.b32.xlu0 %v2118, 96
        %v2714 = vpop.permute.xlu0 %2713
        %2715 = vrot.lane.b32.xlu0 %v2119, 96
        %v2716 = vpop.permute.xlu0 %2715
        %2717 = vrot.lane.b32.xlu0 %v2120, 96
        %v2718 = vpop.permute.xlu0 %2717
        %2719 = vrot.lane.b32.xlu0 %v2121, 96
        %v2720 = vpop.permute.xlu0 %2719
        %2721 = vrot.lane.b32.xlu0 %v2122, 96
        %v2722 = vpop.permute.xlu0 %2721
        %2723 = vrot.lane.b32.xlu0 %v2123, 96
        %v2724 = vpop.permute.xlu0 %2723
        %2725 = vrot.lane.b32.xlu0 %v2124, 96
        %v2726 = vpop.permute.xlu0 %2725
        %2727 = vrot.lane.b32.xlu0 %v2125, 96
        %v2728 = vpop.permute.xlu0 %2727
        %2729 = vrot.lane.b32.xlu0 %v2126, 96
        %v2730 = vpop.permute.xlu0 %2729
        %2731 = vrot.lane.b32.xlu0 %v2127, 96
        %v2732 = vpop.permute.xlu0 %2731
        %2733 = vrot.lane.b32.xlu0 %v2128, 96
        %v2734 = vpop.permute.xlu0 %2733
        %2735 = vrot.lane.b32.xlu0 %v2129, 96
        %v2736 = vpop.permute.xlu0 %2735
        %2737 = vrot.lane.b32.xlu0 %v2130, 96
        %v2738 = vpop.permute.xlu0 %2737
        %2739 = vrot.lane.b32.xlu0 %v2131, 96
        %v2740 = vpop.permute.xlu0 %2739
        %vm2741 = vcmask 261120
        %v2744 = vsel %vm2741, %v605, %v2390
        %v2747 = vsel %vm2741, %v606, %v2392
        %v2750 = vsel %vm2741, %v607, %v2394
        %v2753 = vsel %vm2741, %v608, %v2396
        %v2756 = vsel %vm2741, %v609, %v2398
        %v2759 = vsel %vm2741, %v610, %v2400
        %v2762 = vsel %vm2741, %v611, %v2402
        %v2765 = vsel %vm2741, %v612, %v2404
        %v2768 = vsel %vm2741, %v613, %v2406
        %v2771 = vsel %vm2741, %v614, %v2408
        %v2774 = vsel %vm2741, %v615, %v2410
        %v2777 = vsel %vm2741, %v616, %v2412
        %v2780 = vsel %vm2741, %v617, %v2414
        %v2783 = vsel %vm2741, %v618, %v2416
        %v2786 = vsel %vm2741, %v619, %v2418
        %v2789 = vsel %vm2741, %v620, %v2420
        %vm2790 = vcmask 523264
        %v2792 = vsel %vm2790, %v2744, %v2438
        %v2794 = vsel %vm2790, %v2747, %v2440
        %v2796 = vsel %vm2790, %v2750, %v2442
        %v2798 = vsel %vm2790, %v2753, %v2444
        %v2800 = vsel %vm2790, %v2756, %v2446
        %v2802 = vsel %vm2790, %v2759, %v2448
        %v2804 = vsel %vm2790, %v2762, %v2450
        %v2806 = vsel %vm2790, %v2765, %v2452
        %v2808 = vsel %vm2790, %v2768, %v2454
        %v2810 = vsel %vm2790, %v2771, %v2456
        %v2812 = vsel %vm2790, %v2774, %v2458
        %v2814 = vsel %vm2790, %v2777, %v2460
        %v2816 = vsel %vm2790, %v2780, %v2462
        %v2818 = vsel %vm2790, %v2783, %v2464
        %v2820 = vsel %vm2790, %v2786, %v2466
        %v2822 = vsel %vm2790, %v2789, %v2468
        %vm2823 = vcmask 785408
        %v2825 = vsel %vm2823, %v2792, %v2486
        %v2828 = vsel %vm2823, %v2794, %v2488
        %v2831 = vsel %vm2823, %v2796, %v2490
        %v2834 = vsel %vm2823, %v2798, %v2492
        %v2837 = vsel %vm2823, %v2800, %v2494
        %v2840 = vsel %vm2823, %v2802, %v2496
        %v2843 = vsel %vm2823, %v2804, %v2498
        %v2846 = vsel %vm2823, %v2806, %v2500
        %v2849 = vsel %vm2823, %v2808, %v2502
        %v2852 = vsel %vm2823, %v2810, %v2504
        %v2855 = vsel %vm2823, %v2812, %v2506
        %v2858 = vsel %vm2823, %v2814, %v2508
        %v2861 = vsel %vm2823, %v2816, %v2510
        %v2864 = vsel %vm2823, %v2818, %v2512
        %v2867 = vsel %vm2823, %v2820, %v2514
        %v2870 = vsel %vm2823, %v2822, %v2516
        %v2874 = vsel %vm2741, %v2581, %v2614
        %v2877 = vsel %vm2741, %v2582, %v2616
        %v2880 = vsel %vm2741, %v2583, %v2618
        %v2883 = vsel %vm2741, %v2584, %v2620
        %v2886 = vsel %vm2741, %v2585, %v2622
        %v2889 = vsel %vm2741, %v2586, %v2624
        %v2892 = vsel %vm2741, %v2587, %v2626
        %v2895 = vsel %vm2741, %v2588, %v2628
        %v2898 = vsel %vm2741, %v2589, %v2630
        %v2901 = vsel %vm2741, %v2590, %v2632
        %v2904 = vsel %vm2741, %v2591, %v2634
        %v2907 = vsel %vm2741, %v2592, %v2636
        %v2910 = vsel %vm2741, %v2593, %v2638
        %v2913 = vsel %vm2741, %v2594, %v2640
        %v2916 = vsel %vm2741, %v2595, %v2642
        %v2919 = vsel %vm2741, %v2596, %v2644
        %v2921 = vsel %vm2790, %v2874, %v2662
        %v2923 = vsel %vm2790, %v2877, %v2664
        %v2925 = vsel %vm2790, %v2880, %v2666
        %v2927 = vsel %vm2790, %v2883, %v2668
        %v2929 = vsel %vm2790, %v2886, %v2670
        %v2931 = vsel %vm2790, %v2889, %v2672
        %v2933 = vsel %vm2790, %v2892, %v2674
        %v2935 = vsel %vm2790, %v2895, %v2676
        %v2937 = vsel %vm2790, %v2898, %v2678
        %v2939 = vsel %vm2790, %v2901, %v2680
        %v2941 = vsel %vm2790, %v2904, %v2682
        %v2943 = vsel %vm2790, %v2907, %v2684
        %v2945 = vsel %vm2790, %v2910, %v2686
        %v2947 = vsel %vm2790, %v2913, %v2688
        %v2949 = vsel %vm2790, %v2916, %v2690
        %v2951 = vsel %vm2790, %v2919, %v2692
        %v2953 = vsel %vm2823, %v2921, %v2710
        %v2956 = vsel %vm2823, %v2923, %v2712
        %v2959 = vsel %vm2823, %v2925, %v2714
        %v2962 = vsel %vm2823, %v2927, %v2716
        %v2965 = vsel %vm2823, %v2929, %v2718
        %v2968 = vsel %vm2823, %v2931, %v2720
        %v2971 = vsel %vm2823, %v2933, %v2722
        %v2974 = vsel %vm2823, %v2935, %v2724
        %v2977 = vsel %vm2823, %v2937, %v2726
        %v2980 = vsel %vm2823, %v2939, %v2728
        %v2983 = vsel %vm2823, %v2941, %v2730
        %v2986 = vsel %vm2823, %v2943, %v2732
        %v2989 = vsel %vm2823, %v2945, %v2734
        %v2992 = vsel %vm2823, %v2947, %v2736
        %v2995 = vsel %vm2823, %v2949, %v2738
        %v2998 = vsel %vm2823, %v2951, %v2740
        %v3000 = vld [vmem:[%s2] sm:$0xf]
        %v3001 = vld [vmem:[%s2 + $0x4] sm:$0xf]
        %v3002 = vld [vmem:[%s2 + $0x8] sm:$0xf]
        %v3003 = vld [vmem:[%s2 + $0xc] sm:$0xf]
        %v3004 = vld [vmem:[%s2 + $0x10] sm:$0xf]
        %v3005 = vld [vmem:[%s2 + $0x14] sm:$0xf]
        %v3006 = vld [vmem:[%s2 + $0x18] sm:$0xf]
        %v3007 = vld [vmem:[%s2 + $0x1c] sm:$0xf]
        %v3008 = vld [vmem:[%s2 + $0x20] sm:$0xf]
        %v3009 = vld [vmem:[%s2 + $0x24] sm:$0xf]
        %v3010 = vld [vmem:[%s2 + $0x28] sm:$0xf]
        %v3011 = vld [vmem:[%s2 + $0x2c] sm:$0xf]
        %v3012 = vld [vmem:[%s2 + $0x30] sm:$0xf]
        %v3013 = vld [vmem:[%s2 + $0x34] sm:$0xf]
        %v3014 = vld [vmem:[%s2 + $0x38] sm:$0xf]
        %v3015 = vld [vmem:[%s2 + $0x3c] sm:$0xf]
        %v3016 = vld [vmem:[%s2 + $0x40] sm:$0xf]
        %v3017 = vld [vmem:[%s2 + $0x44] sm:$0xf]
        %v3018 = vld [vmem:[%s2 + $0x48] sm:$0xf]
        %v3019 = vld [vmem:[%s2 + $0x4c] sm:$0xf]
        %v3020 = vld [vmem:[%s2 + $0x50] sm:$0xf]
        %v3021 = vld [vmem:[%s2 + $0x54] sm:$0xf]
        %v3022 = vld [vmem:[%s2 + $0x58] sm:$0xf]
        %v3023 = vld [vmem:[%s2 + $0x5c] sm:$0xf]
        %v3024 = vld [vmem:[%s2 + $0x60] sm:$0xf]
        %v3025 = vld [vmem:[%s2 + $0x64] sm:$0xf]
        %v3026 = vld [vmem:[%s2 + $0x68] sm:$0xf]
        %v3027 = vld [vmem:[%s2 + $0x6c] sm:$0xf]
        %v3028 = vld [vmem:[%s2 + $0x70] sm:$0xf]
        %v3029 = vld [vmem:[%s2 + $0x74] sm:$0xf]
        %v3030 = vld [vmem:[%s2 + $0x78] sm:$0xf]
        %v3031 = vld [vmem:[%s2 + $0x7c] sm:$0xf]
        %v3032 = vld [vmem:[%s2 + $0x80] sm:$0xf]
        %v3033 = vld [vmem:[%s2 + $0x84] sm:$0xf]
        %v3034 = vld [vmem:[%s2 + $0x88] sm:$0xf]
        %v3035 = vld [vmem:[%s2 + $0x8c] sm:$0xf]
        %v3036 = vld [vmem:[%s3] sm:$0x1]
        %v3038 = vlaneseq
        %v3039 = vshrl.u32 %v3038, 7
        %v3040 = vsub.s32 0, %v3039
        %v3041 = vrot.slane %v3036, %v3040
        %v3079 = vunpack.c.l.b16 %v3000
        %v3080 = vunpack.c.l.b16 %v3001
        %v3081 = vunpack.c.l.b16 %v3002
        %v3082 = vunpack.c.l.b16 %v3003
        %v3083 = vunpack.c.l.b16 %v3004
        %v3084 = vunpack.c.l.b16 %v3005
        %v3085 = vunpack.c.l.b16 %v3006
        %v3086 = vunpack.c.l.b16 %v3007
        %v3087 = vunpack.c.l.b16 %v3008
        %v3088 = vunpack.c.l.b16 %v3009
        %v3089 = vunpack.c.l.b16 %v3010
        %v3090 = vunpack.c.l.b16 %v3011
        %v3091 = vunpack.c.l.b16 %v3012
        %v3092 = vunpack.c.l.b16 %v3013
        %v3093 = vunpack.c.l.b16 %v3014
        %v3094 = vunpack.c.l.b16 %v3015
        %v3095 = vunpack.c.l.b16 %v3016
        %v3096 = vunpack.c.l.b16 %v3017
        %v3097 = vunpack.c.l.b16 %v3018
        %v3098 = vunpack.c.l.b16 %v3019
        %v3099 = vunpack.c.l.b16 %v3020
        %v3100 = vunpack.c.l.b16 %v3021
        %v3101 = vunpack.c.l.b16 %v3022
        %v3102 = vunpack.c.l.b16 %v3023
        %v3103 = vunpack.c.l.b16 %v3024
        %v3104 = vunpack.c.l.b16 %v3025
        %v3105 = vunpack.c.l.b16 %v3026
        %v3106 = vunpack.c.l.b16 %v3027
        %v3107 = vunpack.c.l.b16 %v3028
        %v3108 = vunpack.c.l.b16 %v3029
        %v3109 = vunpack.c.l.b16 %v3030
        %v3110 = vunpack.c.l.b16 %v3031
        %v3111 = vunpack.c.l.b16 %v3032
        %v3112 = vunpack.c.l.b16 %v3033
        %v3113 = vunpack.c.l.b16 %v3034
        %v3114 = vunpack.c.l.b16 %v3035
        %v3115 = vpack.c.b16 %v3080, %v3079
        %v3116 = vpack.c.b16 %v3082, %v3081
        %v3117 = vpack.c.b16 %v3084, %v3083
        %v3118 = vpack.c.b16 %v3086, %v3085
        %v3119 = vpack.c.b16 %v3088, %v3087
        %v3120 = vpack.c.b16 %v3090, %v3089
        %v3121 = vpack.c.b16 %v3092, %v3091
        %v3122 = vpack.c.b16 %v3094, %v3093
        %v3123 = vpack.c.b16 %v3096, %v3095
        %v3124 = vpack.c.b16 %v3098, %v3097
        %v3125 = vpack.c.b16 %v3100, %v3099
        %v3126 = vpack.c.b16 %v3102, %v3101
        %v3127 = vpack.c.b16 %v3104, %v3103
        %v3128 = vpack.c.b16 %v3106, %v3105
        %v3129 = vpack.c.b16 %v3108, %v3107
        %v3130 = vpack.c.b16 %v3110, %v3109
        %v3131 = vpack.c.b16 %v3112, %v3111
        %v3132 = vpack.c.b16 %v3114, %v3113
        %v3152 = vsel %vm2741, %v2357, 0
        %v3155 = vsel %vm2741, %v2358, 0
        %v3158 = vsel %vm2741, %v2359, 0
        %v3161 = vsel %vm2741, %v2360, 0
        %v3164 = vsel %vm2741, %v2361, 0
        %v3167 = vsel %vm2741, %v2362, 0
        %v3170 = vsel %vm2741, %v2363, 0
        %v3173 = vsel %vm2741, %v2364, 0
        %v3176 = vsel %vm2741, %v2365, 0
        %v3179 = vsel %vm2741, %v2366, 0
        %v3182 = vsel %vm2741, %v2367, 0
        %v3185 = vsel %vm2741, %v2368, 0
        %v3188 = vsel %vm2741, %v2369, 0
        %v3191 = vsel %vm2741, %v2370, 0
        %v3194 = vsel %vm2741, %v2371, 0
        %v3197 = vsel %vm2741, %v2372, 0
        %3199 = vmatprep.subr.bf16.mxu0 0
        %3200 = vmatpush1.bf16.msra.mxu0 %v3122
        %3201 = vmatprep.subr.bf16.mxu0 0
        %3202 = vmatpush1.bf16.msra.mxu0 %v3121
        %3203 = vmatprep.subr.bf16.mxu0 0
        %3204 = vmatpush1.bf16.msra.mxu0 %v3120
        %3205 = vmatprep.subr.bf16.mxu0 0
        %3206 = vmatpush1.bf16.msra.mxu0 %v3119
        %3207 = vmatprep.subr.bf16.mxu0 0
        %3208 = vmatpush1.bf16.msra.mxu0 %v3118
        %3209 = vmatprep.subr.bf16.mxu0 0
        %3210 = vmatpush1.bf16.msra.mxu0 %v3117
        %3211 = vmatprep.subr.bf16.mxu0 0
        %3212 = vmatpush1.bf16.msra.mxu0 %v3116
        %3213 = vmatprep.subr.bf16.mxu0 0
        %3214 = vmatpush1.bf16.msra.mxu0 %v3115
        %3215 = vmatprep.subr.bf16.mxu0 0
        %3216 = vmatpush2.bf16.msra.mxu0 %v3130
        %3217 = vmatprep.subr.bf16.mxu0 0
        %3218 = vmatpush2.bf16.msra.mxu0 %v3129
        %3219 = vmatprep.subr.bf16.mxu0 0
        %3220 = vmatpush2.bf16.msra.mxu0 %v3128
        %3221 = vmatprep.subr.bf16.mxu0 0
        %3222 = vmatpush2.bf16.msra.mxu0 %v3127
        %3223 = vmatprep.subr.bf16.mxu0 0
        %3224 = vmatpush2.bf16.msra.mxu0 %v3126
        %3225 = vmatprep.subr.bf16.mxu0 0
        %3226 = vmatpush2.bf16.msra.mxu0 %v3125
        %3227 = vmatprep.subr.bf16.mxu0 0
        %3228 = vmatpush2.bf16.msra.mxu0 %v3124
        %3229 = vmatprep.subr.bf16.mxu0 0
        %3230 = vmatpush2.bf16.msra.mxu0 %v3123
        %3231 = vmatprep.mubr.bf16.mxu0 %v2953
        %3232 = vmatmul.mubr.bf16.gmra.mxu0 %v2825
        %v3233 = vpop.f32.mrf.mxu0
        %v3234 = vadd.f32 %v3041, %v3233
        %v3235 = vpop.f32.mrf.mxu0
        %v3236 = vpop.f32.mrf.mxu0
        %v3237 = vadd.f32 %v3041, %v3236
        %v3238 = vpop.f32.mrf.mxu0
        %3239 = vmatprep.mubr.bf16.mxu0 %v2956
        %3240 = vmatmul.mubr.bf16.gmra.mxu0 %v2828
        %v3241 = vpop.f32.mrf.mxu0
        %v3242 = vadd.f32 %v3041, %v3241
        %v3243 = vpop.f32.mrf.mxu0
        %v3244 = vpop.f32.mrf.mxu0
        %v3245 = vadd.f32 %v3041, %v3244
        %v3246 = vpop.f32.mrf.mxu0
        %3247 = vmatprep.mubr.bf16.mxu0 %v2959
        %3248 = vmatmul.mubr.bf16.gmra.mxu0 %v2831
        %v3249 = vpop.f32.mrf.mxu0
        %v3250 = vadd.f32 %v3041, %v3249
        %v3251 = vpop.f32.mrf.mxu0
        %v3252 = vpop.f32.mrf.mxu0
        %v3253 = vadd.f32 %v3041, %v3252
        %v3254 = vpop.f32.mrf.mxu0
        %3255 = vmatprep.mubr.bf16.mxu0 %v2962
        %3256 = vmatmul.mubr.bf16.gmra.mxu0 %v2834
        %v3257 = vpop.f32.mrf.mxu0
        %v3258 = vadd.f32 %v3041, %v3257
        %v3259 = vpop.f32.mrf.mxu0
        %v3260 = vpop.f32.mrf.mxu0
        %v3261 = vadd.f32 %v3041, %v3260
        %v3262 = vpop.f32.mrf.mxu0
        %3263 = vmatprep.mubr.bf16.mxu0 %v2965
        %3264 = vmatmul.mubr.bf16.gmra.mxu0 %v2837
        %v3265 = vpop.f32.mrf.mxu0
        %v3266 = vadd.f32 %v3041, %v3265
        %v3267 = vpop.f32.mrf.mxu0
        %v3268 = vpop.f32.mrf.mxu0
        %v3269 = vadd.f32 %v3041, %v3268
        %v3270 = vpop.f32.mrf.mxu0
        %3271 = vmatprep.mubr.bf16.mxu0 %v2968
        %3272 = vmatmul.mubr.bf16.gmra.mxu0 %v2840
        %v3273 = vpop.f32.mrf.mxu0
        %v3274 = vadd.f32 %v3041, %v3273
        %v3275 = vpop.f32.mrf.mxu0
        %v3276 = vpop.f32.mrf.mxu0
        %v3277 = vadd.f32 %v3041, %v3276
        %v3278 = vpop.f32.mrf.mxu0
        %3279 = vmatprep.mubr.bf16.mxu0 %v2971
        %3280 = vmatmul.mubr.bf16.gmra.mxu0 %v2843
        %v3281 = vpop.f32.mrf.mxu0
        %v3282 = vadd.f32 %v3041, %v3281
        %v3283 = vpop.f32.mrf.mxu0
        %v3284 = vpop.f32.mrf.mxu0
        %v3285 = vadd.f32 %v3041, %v3284
        %v3286 = vpop.f32.mrf.mxu0
        %3287 = vmatprep.mubr.bf16.mxu0 %v2974
        %3288 = vmatmul.mubr.bf16.gmra.mxu0 %v2846
        %v3289 = vpop.f32.mrf.mxu0
        %v3290 = vadd.f32 %v3041, %v3289
        %v3291 = vpop.f32.mrf.mxu0
        %v3292 = vpop.f32.mrf.mxu0
        %v3293 = vadd.f32 %v3041, %v3292
        %v3294 = vpop.f32.mrf.mxu0
        %3295 = vmatprep.mubr.bf16.mxu0 %v2977
        %3296 = vmatmul.mubr.bf16.gmra.mxu0 %v2849
        %v3297 = vpop.f32.mrf.mxu0
        %v3298 = vadd.f32 %v3041, %v3297
        %v3299 = vpop.f32.mrf.mxu0
        %v3300 = vpop.f32.mrf.mxu0
        %v3301 = vadd.f32 %v3041, %v3300
        %v3302 = vpop.f32.mrf.mxu0
        %3303 = vmatprep.mubr.bf16.mxu0 %v2980
        %3304 = vmatmul.mubr.bf16.gmra.mxu0 %v2852
        %v3305 = vpop.f32.mrf.mxu0
        %v3306 = vadd.f32 %v3041, %v3305
        %v3307 = vpop.f32.mrf.mxu0
        %v3308 = vpop.f32.mrf.mxu0
        %v3309 = vadd.f32 %v3041, %v3308
        %v3310 = vpop.f32.mrf.mxu0
        %3311 = vmatprep.mubr.bf16.mxu0 %v2983
        %3312 = vmatmul.mubr.bf16.gmra.mxu0 %v2855
        %v3313 = vpop.f32.mrf.mxu0
        %v3314 = vadd.f32 %v3041, %v3313
        %v3315 = vpop.f32.mrf.mxu0
        %v3316 = vpop.f32.mrf.mxu0
        %v3317 = vadd.f32 %v3041, %v3316
        %v3318 = vpop.f32.mrf.mxu0
        %3319 = vmatprep.mubr.bf16.mxu0 %v2986
        %3320 = vmatmul.mubr.bf16.gmra.mxu0 %v2858
        %v3321 = vpop.f32.mrf.mxu0
        %v3322 = vadd.f32 %v3041, %v3321
        %v3323 = vpop.f32.mrf.mxu0
        %v3324 = vpop.f32.mrf.mxu0
        %v3325 = vadd.f32 %v3041, %v3324
        %v3326 = vpop.f32.mrf.mxu0
        %3327 = vmatprep.mubr.bf16.mxu0 %v2989
        %3328 = vmatmul.mubr.bf16.gmra.mxu0 %v2861
        %v3329 = vpop.f32.mrf.mxu0
        %v3330 = vadd.f32 %v3041, %v3329
        %v3331 = vpop.f32.mrf.mxu0
        %v3332 = vpop.f32.mrf.mxu0
        %v3333 = vadd.f32 %v3041, %v3332
        %v3334 = vpop.f32.mrf.mxu0
        %3335 = vmatprep.mubr.bf16.mxu0 %v2992
        %3336 = vmatmul.mubr.bf16.gmra.mxu0 %v2864
        %v3337 = vpop.f32.mrf.mxu0
        %v3338 = vadd.f32 %v3041, %v3337
        %v3339 = vpop.f32.mrf.mxu0
        %v3340 = vpop.f32.mrf.mxu0
        %v3341 = vadd.f32 %v3041, %v3340
        %v3342 = vpop.f32.mrf.mxu0
        %3343 = vmatprep.mubr.bf16.mxu0 %v2995
        %3344 = vmatmul.mubr.bf16.gmra.mxu0 %v2867
        %v3345 = vpop.f32.mrf.mxu0
        %v3346 = vadd.f32 %v3041, %v3345
        %v3347 = vpop.f32.mrf.mxu0
        %v3348 = vpop.f32.mrf.mxu0
        %v3349 = vadd.f32 %v3041, %v3348
        %v3350 = vpop.f32.mrf.mxu0
        %3351 = vmatprep.mubr.bf16.mxu0 %v2998
        %3352 = vmatmul.mubr.bf16.gmra.mxu0 %v2870
        %v3353 = vpop.f32.mrf.mxu0
        %v3354 = vadd.f32 %v3041, %v3353
        %v3355 = vpop.f32.mrf.mxu0
        %v3356 = vpop.f32.mrf.mxu0
        %v3357 = vadd.f32 %v3041, %v3356
        %v3358 = vpop.f32.mrf.mxu0
        %3359 = vdwg.mxu0
        %3360 = vmatprep.subr.bf16.mxu0 0
        %3361 = vmatpush1.bf16.msra.mxu0 0
        %3362 = vmatprep.subr.bf16.mxu0 0
        %3363 = vmatpush1.bf16.msra.mxu0 0
        %3364 = vmatprep.subr.bf16.mxu0 0
        %3365 = vmatpush1.bf16.msra.mxu0 0
        %3366 = vmatprep.subr.bf16.mxu0 0
        %3367 = vmatpush1.bf16.msra.mxu0 0
        %3368 = vmatprep.subr.bf16.mxu0 0
        %3369 = vmatpush1.bf16.msra.mxu0 0
        %3370 = vmatprep.subr.bf16.mxu0 0
        %3371 = vmatpush1.bf16.msra.mxu0 0
        %3372 = vmatprep.subr.bf16.mxu0 0
        %3373 = vmatpush1.bf16.msra.mxu0 %v3132
        %3374 = vmatprep.subr.bf16.mxu0 0
        %3375 = vmatpush1.bf16.msra.mxu0 %v3131
        %3376 = vmatprep.subr.bf16.mxu0 0
        %3377 = vmatpush2.bf16.msra.mxu0 0
        %3378 = vmatprep.subr.bf16.mxu0 0
        %3379 = vmatpush2.bf16.msra.mxu0 0
        %3380 = vmatprep.subr.bf16.mxu0 0
        %3381 = vmatpush2.bf16.msra.mxu0 0
        %3382 = vmatprep.subr.bf16.mxu0 0
        %3383 = vmatpush2.bf16.msra.mxu0 0
        %3384 = vmatprep.subr.bf16.mxu0 0
        %3385 = vmatpush2.bf16.msra.mxu0 0
        %3386 = vmatprep.subr.bf16.mxu0 0
        %3387 = vmatpush2.bf16.msra.mxu0 0
        %3388 = vmatprep.subr.bf16.mxu0 0
        %3389 = vmatpush2.bf16.msra.mxu0 0
        %3390 = vmatprep.subr.bf16.mxu0 0
        %3391 = vmatpush2.bf16.msra.mxu0 0
        %3392 = vmatprep.mubr.bf16.mxu0 0
        %3393 = vmatmul.mubr.bf16.gmra.mxu0 %v3152
        %v3394 = vpop.f32.mrf.mxu0
        %v3395 = vadd.f32 %v3234, %v3394
        %v3396 = vpop.f32.mrf.mxu0
        %v3397 = vpop.f32.mrf.mxu0
        %v3398 = vadd.f32 %v3237, %v3397
        %v3399 = vpop.f32.mrf.mxu0
        %3400 = vmatprep.mubr.bf16.mxu0 0
        %3401 = vmatmul.mubr.bf16.gmra.mxu0 %v3155
        %v3402 = vpop.f32.mrf.mxu0
        %v3403 = vadd.f32 %v3242, %v3402
        %v3404 = vpop.f32.mrf.mxu0
        %v3405 = vpop.f32.mrf.mxu0
        %v3406 = vadd.f32 %v3245, %v3405
        %v3407 = vpop.f32.mrf.mxu0
        %3408 = vmatprep.mubr.bf16.mxu0 0
        %3409 = vmatmul.mubr.bf16.gmra.mxu0 %v3158
        %v3410 = vpop.f32.mrf.mxu0
        %v3411 = vadd.f32 %v3250, %v3410
        %v3412 = vpop.f32.mrf.mxu0
        %v3413 = vpop.f32.mrf.mxu0
        %v3414 = vadd.f32 %v3253, %v3413
        %v3415 = vpop.f32.mrf.mxu0
        %3416 = vmatprep.mubr.bf16.mxu0 0
        %3417 = vmatmul.mubr.bf16.gmra.mxu0 %v3161
        %v3418 = vpop.f32.mrf.mxu0
        %v3419 = vadd.f32 %v3258, %v3418
        %v3420 = vpop.f32.mrf.mxu0
        %v3421 = vpop.f32.mrf.mxu0
        %v3422 = vadd.f32 %v3261, %v3421
        %v3423 = vpop.f32.mrf.mxu0
        %3424 = vmatprep.mubr.bf16.mxu0 0
        %3425 = vmatmul.mubr.bf16.gmra.mxu0 %v3164
        %v3426 = vpop.f32.mrf.mxu0
        %v3427 = vadd.f32 %v3266, %v3426
        %v3428 = vpop.f32.mrf.mxu0
        %v3429 = vpop.f32.mrf.mxu0
        %v3430 = vadd.f32 %v3269, %v3429
        %v3431 = vpop.f32.mrf.mxu0
        %3432 = vmatprep.mubr.bf16.mxu0 0
        %3433 = vmatmul.mubr.bf16.gmra.mxu0 %v3167
        %v3434 = vpop.f32.mrf.mxu0
        %v3435 = vadd.f32 %v3274, %v3434
        %v3436 = vpop.f32.mrf.mxu0
        %v3437 = vpop.f32.mrf.mxu0
        %v3438 = vadd.f32 %v3277, %v3437
        %v3439 = vpop.f32.mrf.mxu0
        %3440 = vmatprep.mubr.bf16.mxu0 0
        %3441 = vmatmul.mubr.bf16.gmra.mxu0 %v3170
        %v3442 = vpop.f32.mrf.mxu0
        %v3443 = vadd.f32 %v3282, %v3442
        %v3444 = vpop.f32.mrf.mxu0
        %v3445 = vpop.f32.mrf.mxu0
        %v3446 = vadd.f32 %v3285, %v3445
        %v3447 = vpop.f32.mrf.mxu0
        %3448 = vmatprep.mubr.bf16.mxu0 0
        %3449 = vmatmul.mubr.bf16.gmra.mxu0 %v3173
        %v3450 = vpop.f32.mrf.mxu0
        %v3451 = vadd.f32 %v3290, %v3450
        %v3452 = vpop.f32.mrf.mxu0
        %v3453 = vpop.f32.mrf.mxu0
        %v3454 = vadd.f32 %v3293, %v3453
        %v3455 = vpop.f32.mrf.mxu0
        %3456 = vmatprep.mubr.bf16.mxu0 0
        %3457 = vmatmul.mubr.bf16.gmra.mxu0 %v3176
        %v3458 = vpop.f32.mrf.mxu0
        %v3459 = vadd.f32 %v3298, %v3458
        %v3460 = vpop.f32.mrf.mxu0
        %v3461 = vpop.f32.mrf.mxu0
        %v3462 = vadd.f32 %v3301, %v3461
        %v3463 = vpop.f32.mrf.mxu0
        %3464 = vmatprep.mubr.bf16.mxu0 0
        %3465 = vmatmul.mubr.bf16.gmra.mxu0 %v3179
        %v3466 = vpop.f32.mrf.mxu0
        %v3467 = vadd.f32 %v3306, %v3466
        %v3468 = vpop.f32.mrf.mxu0
        %v3469 = vpop.f32.mrf.mxu0
        %v3470 = vadd.f32 %v3309, %v3469
        %v3471 = vpop.f32.mrf.mxu0
        %3472 = vmatprep.mubr.bf16.mxu0 0
        %3473 = vmatmul.mubr.bf16.gmra.mxu0 %v3182
        %v3474 = vpop.f32.mrf.mxu0
        %v3475 = vadd.f32 %v3314, %v3474
        %v3476 = vpop.f32.mrf.mxu0
        %v3477 = vpop.f32.mrf.mxu0
        %v3478 = vadd.f32 %v3317, %v3477
        %v3479 = vpop.f32.mrf.mxu0
        %3480 = vmatprep.mubr.bf16.mxu0 0
        %3481 = vmatmul.mubr.bf16.gmra.mxu0 %v3185
        %v3482 = vpop.f32.mrf.mxu0
        %v3483 = vadd.f32 %v3322, %v3482
        %v3484 = vpop.f32.mrf.mxu0
        %v3485 = vpop.f32.mrf.mxu0
        %v3486 = vadd.f32 %v3325, %v3485
        %v3487 = vpop.f32.mrf.mxu0
        %3488 = vmatprep.mubr.bf16.mxu0 0
        %3489 = vmatmul.mubr.bf16.gmra.mxu0 %v3188
        %v3490 = vpop.f32.mrf.mxu0
        %v3491 = vadd.f32 %v3330, %v3490
        %v3492 = vpop.f32.mrf.mxu0
        %v3493 = vpop.f32.mrf.mxu0
        %v3494 = vadd.f32 %v3333, %v3493
        %v3495 = vpop.f32.mrf.mxu0
        %3496 = vmatprep.mubr.bf16.mxu0 0
        %3497 = vmatmul.mubr.bf16.gmra.mxu0 %v3191
        %v3498 = vpop.f32.mrf.mxu0
        %v3499 = vadd.f32 %v3338, %v3498
        %v3500 = vpop.f32.mrf.mxu0
        %v3501 = vpop.f32.mrf.mxu0
        %v3502 = vadd.f32 %v3341, %v3501
        %v3503 = vpop.f32.mrf.mxu0
        %3504 = vmatprep.mubr.bf16.mxu0 0
        %3505 = vmatmul.mubr.bf16.gmra.mxu0 %v3194
        %v3506 = vpop.f32.mrf.mxu0
        %v3507 = vadd.f32 %v3346, %v3506
        %v3508 = vpop.f32.mrf.mxu0
        %v3509 = vpop.f32.mrf.mxu0
        %v3510 = vadd.f32 %v3349, %v3509
        %v3511 = vpop.f32.mrf.mxu0
        %3512 = vmatprep.mubr.bf16.mxu0 0
        %3513 = vmatmul.mubr.bf16.gmra.mxu0 %v3197
        %v3514 = vpop.f32.mrf.mxu0
        %v3515 = vadd.f32 %v3354, %v3514
        %v3516 = vpop.f32.mrf.mxu0
        %v3517 = vpop.f32.mrf.mxu0
        %v3518 = vadd.f32 %v3357, %v3517
        %v3519 = vpop.f32.mrf.mxu0
        %3520 = vdwg.mxu0
        %v3521 = vmax.f32 %v3395, 0.0
        %v3522 = vmax.f32 %v3398, 0.0
        %v3523 = vmax.f32 %v3403, 0.0
        %v3524 = vmax.f32 %v3406, 0.0
        %v3525 = vmax.f32 %v3411, 0.0
        %v3526 = vmax.f32 %v3414, 0.0
        %v3527 = vmax.f32 %v3419, 0.0
        %v3528 = vmax.f32 %v3422, 0.0
        %v3529 = vmax.f32 %v3427, 0.0
        %v3530 = vmax.f32 %v3430, 0.0
        %v3531 = vmax.f32 %v3435, 0.0
        %v3532 = vmax.f32 %v3438, 0.0
        %v3533 = vmax.f32 %v3443, 0.0
        %v3534 = vmax.f32 %v3446, 0.0
        %v3535 = vmax.f32 %v3451, 0.0
        %v3536 = vmax.f32 %v3454, 0.0
        %v3537 = vmax.f32 %v3459, 0.0
        %v3538 = vmax.f32 %v3462, 0.0
        %v3539 = vmax.f32 %v3467, 0.0
        %v3540 = vmax.f32 %v3470, 0.0
        %v3541 = vmax.f32 %v3475, 0.0
        %v3542 = vmax.f32 %v3478, 0.0
        %v3543 = vmax.f32 %v3483, 0.0
        %v3544 = vmax.f32 %v3486, 0.0
        %v3545 = vmax.f32 %v3491, 0.0
        %v3546 = vmax.f32 %v3494, 0.0
        %v3547 = vmax.f32 %v3499, 0.0
        %v3548 = vmax.f32 %v3502, 0.0
        %v3549 = vmax.f32 %v3507, 0.0
        %v3550 = vmax.f32 %v3510, 0.0
        %v3551 = vmax.f32 %v3515, 0.0
        %v3552 = vmax.f32 %v3518, 0.0
        %v3553 = vmul.f32 %v3521, %v2168
        %v3554 = vmul.f32 %v3522, %v2173
        %v3555 = vmul.f32 %v3523, %v2178
        %v3556 = vmul.f32 %v3524, %v2183
        %v3557 = vmul.f32 %v3525, %v2188
        %v3558 = vmul.f32 %v3526, %v2193
        %v3559 = vmul.f32 %v3527, %v2198
        %v3560 = vmul.f32 %v3528, %v2203
        %v3561 = vmul.f32 %v3529, %v2208
        %v3562 = vmul.f32 %v3530, %v2213
        %v3563 = vmul.f32 %v3531, %v2218
        %v3564 = vmul.f32 %v3532, %v2223
        %v3565 = vmul.f32 %v3533, %v2228
        %v3566 = vmul.f32 %v3534, %v2233
        %v3567 = vmul.f32 %v3535, %v2238
        %v3568 = vmul.f32 %v3536, %v2243
        %v3569 = vmul.f32 %v3537, %v2248
        %v3570 = vmul.f32 %v3538, %v2253
        %v3571 = vmul.f32 %v3539, %v2258
        %v3572 = vmul.f32 %v3540, %v2263
        %v3573 = vmul.f32 %v3541, %v2268
        %v3574 = vmul.f32 %v3542, %v2273
        %v3575 = vmul.f32 %v3543, %v2278
        %v3576 = vmul.f32 %v3544, %v2283
        %v3577 = vmul.f32 %v3545, %v2288
        %v3578 = vmul.f32 %v3546, %v2293
        %v3579 = vmul.f32 %v3547, %v2298
        %v3580 = vmul.f32 %v3548, %v2303
        %v3581 = vmul.f32 %v3549, %v2308
        %v3582 = vmul.f32 %v3550, %v2313
        %v3583 = vmul.f32 %v3551, %v2318
        %v3584 = vmul.f32 %v3552, %v2323
        %v3585 = vadd.f32 %v3553, %v3554
        %v3586 = vadd.f32 %v3585, %v3555
        %v3587 = vadd.f32 %v3586, %v3556
        %v3588 = vadd.f32 %v3587, %v3557
        %v3589 = vadd.f32 %v3588, %v3558
        %v3590 = vadd.f32 %v3589, %v3559
        %v3591 = vadd.f32 %v3590, %v3560
        %v3592 = vadd.f32 %v3591, %v3561
        %v3593 = vadd.f32 %v3592, %v3562
        %v3594 = vadd.f32 %v3593, %v3563
        %v3595 = vadd.f32 %v3594, %v3564
        %v3596 = vadd.f32 %v3595, %v3565
        %v3597 = vadd.f32 %v3596, %v3566
        %v3598 = vadd.f32 %v3597, %v3567
        %v3599 = vadd.f32 %v3598, %v3568
        %v3600 = vadd.f32 %v3599, %v3569
        %v3601 = vadd.f32 %v3600, %v3570
        %v3602 = vadd.f32 %v3601, %v3571
        %v3603 = vadd.f32 %v3602, %v3572
        %v3604 = vadd.f32 %v3603, %v3573
        %v3605 = vadd.f32 %v3604, %v3574
        %v3606 = vadd.f32 %v3605, %v3575
        %v3607 = vadd.f32 %v3606, %v3576
        %v3608 = vadd.f32 %v3607, %v3577
        %v3609 = vadd.f32 %v3608, %v3578
        %v3610 = vadd.f32 %v3609, %v3579
        %v3611 = vadd.f32 %v3610, %v3580
        %v3612 = vadd.f32 %v3611, %v3581
        %v3613 = vadd.f32 %v3612, %v3582
        %v3614 = vadd.f32 %v3613, %v3583
        %v3615 = vadd.f32 %v3614, %v3584
        %v3616 = vrot.slane %v3615, 4
        %v3617 = vadd.f32 %v3615, %v3616
        %v3618 = vrot.slane %v3617, 2
        %v3619 = vadd.f32 %v3617, %v3618
        %v3620 = vrot.slane %v3619, 1
        %v3621 = vadd.f32 %v3619, %v3620
        %v3622 = vmul.f32 %v3521, %v1927
        %v3623 = vmul.f32 %v3522, %v1932
        %v3624 = vmul.f32 %v3523, %v1937
        %v3625 = vmul.f32 %v3524, %v1942
        %v3626 = vmul.f32 %v3525, %v1947
        %v3627 = vmul.f32 %v3526, %v1952
        %v3628 = vmul.f32 %v3527, %v1957
        %v3629 = vmul.f32 %v3528, %v1962
        %v3630 = vmul.f32 %v3529, %v1967
        %v3631 = vmul.f32 %v3530, %v1972
        %v3632 = vmul.f32 %v3531, %v1977
        %v3633 = vmul.f32 %v3532, %v1982
        %v3634 = vmul.f32 %v3533, %v1987
        %v3635 = vmul.f32 %v3534, %v1992
        %v3636 = vmul.f32 %v3535, %v1997
        %v3637 = vmul.f32 %v3536, %v2002
        %v3638 = vmul.f32 %v3537, %v2007
        %v3639 = vmul.f32 %v3538, %v2012
        %v3640 = vmul.f32 %v3539, %v2017
        %v3641 = vmul.f32 %v3540, %v2022
        %v3642 = vmul.f32 %v3541, %v2027
        %v3643 = vmul.f32 %v3542, %v2032
        %v3644 = vmul.f32 %v3543, %v2037
        %v3645 = vmul.f32 %v3544, %v2042
        %v3646 = vmul.f32 %v3545, %v2047
        %v3647 = vmul.f32 %v3546, %v2052
        %v3648 = vmul.f32 %v3547, %v2057
        %v3649 = vmul.f32 %v3548, %v2062
        %v3650 = vmul.f32 %v3549, %v2067
        %v3651 = vmul.f32 %v3550, %v2072
        %v3652 = vmul.f32 %v3551, %v2077
        %v3653 = vmul.f32 %v3552, %v2082
        %v3654 = vadd.f32 %v3622, %v3623
        %v3655 = vadd.f32 %v3654, %v3624
        %v3656 = vadd.f32 %v3655, %v3625
        %v3657 = vadd.f32 %v3656, %v3626
        %v3658 = vadd.f32 %v3657, %v3627
        %v3659 = vadd.f32 %v3658, %v3628
        %v3660 = vadd.f32 %v3659, %v3629
        %v3661 = vadd.f32 %v3660, %v3630
        %v3662 = vadd.f32 %v3661, %v3631
        %v3663 = vadd.f32 %v3662, %v3632
        %v3664 = vadd.f32 %v3663, %v3633
        %v3665 = vadd.f32 %v3664, %v3634
        %v3666 = vadd.f32 %v3665, %v3635
        %v3667 = vadd.f32 %v3666, %v3636
        %v3668 = vadd.f32 %v3667, %v3637
        %v3669 = vadd.f32 %v3668, %v3638
        %v3670 = vadd.f32 %v3669, %v3639
        %v3671 = vadd.f32 %v3670, %v3640
        %v3672 = vadd.f32 %v3671, %v3641
        %v3673 = vadd.f32 %v3672, %v3642
        %v3674 = vadd.f32 %v3673, %v3643
        %v3675 = vadd.f32 %v3674, %v3644
        %v3676 = vadd.f32 %v3675, %v3645
        %v3677 = vadd.f32 %v3676, %v3646
        %v3678 = vadd.f32 %v3677, %v3647
        %v3679 = vadd.f32 %v3678, %v3648
        %v3680 = vadd.f32 %v3679, %v3649
        %v3681 = vadd.f32 %v3680, %v3650
        %v3682 = vadd.f32 %v3681, %v3651
        %v3683 = vadd.f32 %v3682, %v3652
        %v3684 = vadd.f32 %v3683, %v3653
        %v3685 = vrot.slane %v3684, 4
        %v3686 = vadd.f32 %v3684, %v3685
        %v3687 = vrot.slane %v3686, 2
        %v3688 = vadd.f32 %v3686, %v3687
        %v3689 = vrot.slane %v3688, 1
        %v3690 = vadd.f32 %v3688, %v3689
        %v3691 = vmul.f32 %v3521, %v1686
        %v3692 = vmul.f32 %v3522, %v1691
        %v3693 = vmul.f32 %v3523, %v1696
        %v3694 = vmul.f32 %v3524, %v1701
        %v3695 = vmul.f32 %v3525, %v1706
        %v3696 = vmul.f32 %v3526, %v1711
        %v3697 = vmul.f32 %v3527, %v1716
        %v3698 = vmul.f32 %v3528, %v1721
        %v3699 = vmul.f32 %v3529, %v1726
        %v3700 = vmul.f32 %v3530, %v1731
        %v3701 = vmul.f32 %v3531, %v1736
        %v3702 = vmul.f32 %v3532, %v1741
        %v3703 = vmul.f32 %v3533, %v1746
        %v3704 = vmul.f32 %v3534, %v1751
        %v3705 = vmul.f32 %v3535, %v1756
        %v3706 = vmul.f32 %v3536, %v1761
        %v3707 = vmul.f32 %v3537, %v1766
        %v3708 = vmul.f32 %v3538, %v1771
        %v3709 = vmul.f32 %v3539, %v1776
        %v3710 = vmul.f32 %v3540, %v1781
        %v3711 = vmul.f32 %v3541, %v1786
        %v3712 = vmul.f32 %v3542, %v1791
        %v3713 = vmul.f32 %v3543, %v1796
        %v3714 = vmul.f32 %v3544, %v1801
        %v3715 = vmul.f32 %v3545, %v1806
        %v3716 = vmul.f32 %v3546, %v1811
        %v3717 = vmul.f32 %v3547, %v1816
        %v3718 = vmul.f32 %v3548, %v1821
        %v3719 = vmul.f32 %v3549, %v1826
        %v3720 = vmul.f32 %v3550, %v1831
        %v3721 = vmul.f32 %v3551, %v1836
        %v3722 = vmul.f32 %v3552, %v1841
        %v3723 = vadd.f32 %v3691, %v3692
        %v3724 = vadd.f32 %v3723, %v3693
        %v3725 = vadd.f32 %v3724, %v3694
        %v3726 = vadd.f32 %v3725, %v3695
        %v3727 = vadd.f32 %v3726, %v3696
        %v3728 = vadd.f32 %v3727, %v3697
        %v3729 = vadd.f32 %v3728, %v3698
        %v3730 = vadd.f32 %v3729, %v3699
        %v3731 = vadd.f32 %v3730, %v3700
        %v3732 = vadd.f32 %v3731, %v3701
        %v3733 = vadd.f32 %v3732, %v3702
        %v3734 = vadd.f32 %v3733, %v3703
        %v3735 = vadd.f32 %v3734, %v3704
        %v3736 = vadd.f32 %v3735, %v3705
        %v3737 = vadd.f32 %v3736, %v3706
        %v3738 = vadd.f32 %v3737, %v3707
        %v3739 = vadd.f32 %v3738, %v3708
        %v3740 = vadd.f32 %v3739, %v3709
        %v3741 = vadd.f32 %v3740, %v3710
        %v3742 = vadd.f32 %v3741, %v3711
        %v3743 = vadd.f32 %v3742, %v3712
        %v3744 = vadd.f32 %v3743, %v3713
        %v3745 = vadd.f32 %v3744, %v3714
        %v3746 = vadd.f32 %v3745, %v3715
        %v3747 = vadd.f32 %v3746, %v3716
        %v3748 = vadd.f32 %v3747, %v3717
        %v3749 = vadd.f32 %v3748, %v3718
        %v3750 = vadd.f32 %v3749, %v3719
        %v3751 = vadd.f32 %v3750, %v3720
        %v3752 = vadd.f32 %v3751, %v3721
        %v3753 = vadd.f32 %v3752, %v3722
        %v3754 = vrot.slane %v3753, 4
        %v3755 = vadd.f32 %v3753, %v3754
        %v3756 = vrot.slane %v3755, 2
        %v3757 = vadd.f32 %v3755, %v3756
        %v3758 = vrot.slane %v3757, 1
        %v3759 = vadd.f32 %v3757, %v3758
        %v3760 = vmul.f32 %v3521, %v1445
        %v3761 = vmul.f32 %v3522, %v1450
        %v3762 = vmul.f32 %v3523, %v1455
        %v3763 = vmul.f32 %v3524, %v1460
        %v3764 = vmul.f32 %v3525, %v1465
        %v3765 = vmul.f32 %v3526, %v1470
        %v3766 = vmul.f32 %v3527, %v1475
        %v3767 = vmul.f32 %v3528, %v1480
        %v3768 = vmul.f32 %v3529, %v1485
        %v3769 = vmul.f32 %v3530, %v1490
        %v3770 = vmul.f32 %v3531, %v1495
        %v3771 = vmul.f32 %v3532, %v1500
        %v3772 = vmul.f32 %v3533, %v1505
        %v3773 = vmul.f32 %v3534, %v1510
        %v3774 = vmul.f32 %v3535, %v1515
        %v3775 = vmul.f32 %v3536, %v1520
        %v3776 = vmul.f32 %v3537, %v1525
        %v3777 = vmul.f32 %v3538, %v1530
        %v3778 = vmul.f32 %v3539, %v1535
        %v3779 = vmul.f32 %v3540, %v1540
        %v3780 = vmul.f32 %v3541, %v1545
        %v3781 = vmul.f32 %v3542, %v1550
        %v3782 = vmul.f32 %v3543, %v1555
        %v3783 = vmul.f32 %v3544, %v1560
        %v3784 = vmul.f32 %v3545, %v1565
        %v3785 = vmul.f32 %v3546, %v1570
        %v3786 = vmul.f32 %v3547, %v1575
        %v3787 = vmul.f32 %v3548, %v1580
        %v3788 = vmul.f32 %v3549, %v1585
        %v3789 = vmul.f32 %v3550, %v1590
        %v3790 = vmul.f32 %v3551, %v1595
        %v3791 = vmul.f32 %v3552, %v1600
        %v3792 = vadd.f32 %v3760, %v3761
        %v3793 = vadd.f32 %v3792, %v3762
        %v3794 = vadd.f32 %v3793, %v3763
        %v3795 = vadd.f32 %v3794, %v3764
        %v3796 = vadd.f32 %v3795, %v3765
        %v3797 = vadd.f32 %v3796, %v3766
        %v3798 = vadd.f32 %v3797, %v3767
        %v3799 = vadd.f32 %v3798, %v3768
        %v3800 = vadd.f32 %v3799, %v3769
        %v3801 = vadd.f32 %v3800, %v3770
        %v3802 = vadd.f32 %v3801, %v3771
        %v3803 = vadd.f32 %v3802, %v3772
        %v3804 = vadd.f32 %v3803, %v3773
        %v3805 = vadd.f32 %v3804, %v3774
        %v3806 = vadd.f32 %v3805, %v3775
        %v3807 = vadd.f32 %v3806, %v3776
        %v3808 = vadd.f32 %v3807, %v3777
        %v3809 = vadd.f32 %v3808, %v3778
        %v3810 = vadd.f32 %v3809, %v3779
        %v3811 = vadd.f32 %v3810, %v3780
        %v3812 = vadd.f32 %v3811, %v3781
        %v3813 = vadd.f32 %v3812, %v3782
        %v3814 = vadd.f32 %v3813, %v3783
        %v3815 = vadd.f32 %v3814, %v3784
        %v3816 = vadd.f32 %v3815, %v3785
        %v3817 = vadd.f32 %v3816, %v3786
        %v3818 = vadd.f32 %v3817, %v3787
        %v3819 = vadd.f32 %v3818, %v3788
        %v3820 = vadd.f32 %v3819, %v3789
        %v3821 = vadd.f32 %v3820, %v3790
        %v3822 = vadd.f32 %v3821, %v3791
        %v3823 = vrot.slane %v3822, 4
        %v3824 = vadd.f32 %v3822, %v3823
        %v3825 = vrot.slane %v3824, 2
        %v3826 = vadd.f32 %v3824, %v3825
        %v3827 = vrot.slane %v3826, 1
        %v3828 = vadd.f32 %v3826, %v3827
        %s3829 = scalar_lea.vmem %s1, 1024
        %v3830 = vld [vmem:[%s3829] sm:$0xff]
        %v3831 = vld [vmem:[%s3829 + $0x8] sm:$0xff]
        %v3832 = vld [vmem:[%s3829 + $0x10] sm:$0xff]
        %v3833 = vld [vmem:[%s3829 + $0x18] sm:$0xff]
        %v3834 = vld [vmem:[%s3829 + $0x20] sm:$0xff]
        %v3835 = vld [vmem:[%s3829 + $0x28] sm:$0xff]
        %v3836 = vld [vmem:[%s3829 + $0x30] sm:$0xff]
        %v3837 = vld [vmem:[%s3829 + $0x38] sm:$0xff]
        %v3838 = vld [vmem:[%s3829 + $0x40] sm:$0xff]
        %v3839 = vld [vmem:[%s3829 + $0x48] sm:$0xff]
        %v3840 = vld [vmem:[%s3829 + $0x50] sm:$0xff]
        %v3841 = vld [vmem:[%s3829 + $0x58] sm:$0xff]
        %v3842 = vld [vmem:[%s3829 + $0x60] sm:$0xff]
        %v3843 = vld [vmem:[%s3829 + $0x68] sm:$0xff]
        %v3844 = vld [vmem:[%s3829 + $0x70] sm:$0xff]
        %v3845 = vld [vmem:[%s3829 + $0x78] sm:$0xff]
        %v3846 = vld [vmem:[%s3829 + $0x80] sm:$0xff]
        %v3847 = vld [vmem:[%s3829 + $0x88] sm:$0xff]
        %v3848 = vld [vmem:[%s3829 + $0x90] sm:$0xff]
        %v3849 = vld [vmem:[%s3829 + $0x98] sm:$0xff]
        %v3850 = vld [vmem:[%s3829 + $0xa0] sm:$0xff]
        %v3851 = vld [vmem:[%s3829 + $0xa8] sm:$0xff]
        %v3852 = vld [vmem:[%s3829 + $0xb0] sm:$0xff]
        %v3853 = vld [vmem:[%s3829 + $0xb8] sm:$0xff]
        %v3854 = vld [vmem:[%s3829 + $0xc0] sm:$0xff]
        %v3855 = vld [vmem:[%s3829 + $0xc8] sm:$0xff]
        %v3856 = vld [vmem:[%s3829 + $0xd0] sm:$0xff]
        %v3857 = vld [vmem:[%s3829 + $0xd8] sm:$0xff]
        %v3858 = vld [vmem:[%s3829 + $0xe0] sm:$0xff]
        %v3859 = vld [vmem:[%s3829 + $0xe8] sm:$0xff]
        %v3860 = vld [vmem:[%s3829 + $0xf0] sm:$0xff]
        %v3861 = vld [vmem:[%s3829 + $0xf8] sm:$0xff]
        %3863 = vset.pattern.permute.xlu0 0
        %3864 = vperm.xlu0 %3863, %v3830
        %v3865 = vpop.permute.xlu0 %3864
        %3868 = vset.pattern.permute.xlu0 0
        %3869 = vperm.xlu0 %3868, %v3831
        %v3870 = vpop.permute.xlu0 %3869
        %3873 = vset.pattern.permute.xlu0 0
        %3874 = vperm.xlu0 %3873, %v3832
        %v3875 = vpop.permute.xlu0 %3874
        %3878 = vset.pattern.permute.xlu0 0
        %3879 = vperm.xlu0 %3878, %v3833
        %v3880 = vpop.permute.xlu0 %3879
        %3883 = vset.pattern.permute.xlu0 0
        %3884 = vperm.xlu0 %3883, %v3834
        %v3885 = vpop.permute.xlu0 %3884
        %3888 = vset.pattern.permute.xlu0 0
        %3889 = vperm.xlu0 %3888, %v3835
        %v3890 = vpop.permute.xlu0 %3889
        %3893 = vset.pattern.permute.xlu0 0
        %3894 = vperm.xlu0 %3893, %v3836
        %v3895 = vpop.permute.xlu0 %3894
        %3898 = vset.pattern.permute.xlu0 0
        %3899 = vperm.xlu0 %3898, %v3837
        %v3900 = vpop.permute.xlu0 %3899
        %3903 = vset.pattern.permute.xlu0 0
        %3904 = vperm.xlu0 %3903, %v3838
        %v3905 = vpop.permute.xlu0 %3904
        %3908 = vset.pattern.permute.xlu0 0
        %3909 = vperm.xlu0 %3908, %v3839
        %v3910 = vpop.permute.xlu0 %3909
        %3913 = vset.pattern.permute.xlu0 0
        %3914 = vperm.xlu0 %3913, %v3840
        %v3915 = vpop.permute.xlu0 %3914
        %3918 = vset.pattern.permute.xlu0 0
        %3919 = vperm.xlu0 %3918, %v3841
        %v3920 = vpop.permute.xlu0 %3919
        %3923 = vset.pattern.permute.xlu0 0
        %3924 = vperm.xlu0 %3923, %v3842
        %v3925 = vpop.permute.xlu0 %3924
        %3928 = vset.pattern.permute.xlu0 0
        %3929 = vperm.xlu0 %3928, %v3843
        %v3930 = vpop.permute.xlu0 %3929
        %3933 = vset.pattern.permute.xlu0 0
        %3934 = vperm.xlu0 %3933, %v3844
        %v3935 = vpop.permute.xlu0 %3934
        %3938 = vset.pattern.permute.xlu0 0
        %3939 = vperm.xlu0 %3938, %v3845
        %v3940 = vpop.permute.xlu0 %3939
        %3943 = vset.pattern.permute.xlu0 0
        %3944 = vperm.xlu0 %3943, %v3846
        %v3945 = vpop.permute.xlu0 %3944
        %3948 = vset.pattern.permute.xlu0 0
        %3949 = vperm.xlu0 %3948, %v3847
        %v3950 = vpop.permute.xlu0 %3949
        %3953 = vset.pattern.permute.xlu0 0
        %3954 = vperm.xlu0 %3953, %v3848
        %v3955 = vpop.permute.xlu0 %3954
        %3958 = vset.pattern.permute.xlu0 0
        %3959 = vperm.xlu0 %3958, %v3849
        %v3960 = vpop.permute.xlu0 %3959
        %3963 = vset.pattern.permute.xlu0 0
        %3964 = vperm.xlu0 %3963, %v3850
        %v3965 = vpop.permute.xlu0 %3964
        %3968 = vset.pattern.permute.xlu0 0
        %3969 = vperm.xlu0 %3968, %v3851
        %v3970 = vpop.permute.xlu0 %3969
        %3973 = vset.pattern.permute.xlu0 0
        %3974 = vperm.xlu0 %3973, %v3852
        %v3975 = vpop.permute.xlu0 %3974
        %3978 = vset.pattern.permute.xlu0 0
        %3979 = vperm.xlu0 %3978, %v3853
        %v3980 = vpop.permute.xlu0 %3979
        %3983 = vset.pattern.permute.xlu0 0
        %3984 = vperm.xlu0 %3983, %v3854
        %v3985 = vpop.permute.xlu0 %3984
        %3988 = vset.pattern.permute.xlu0 0
        %3989 = vperm.xlu0 %3988, %v3855
        %v3990 = vpop.permute.xlu0 %3989
        %3993 = vset.pattern.permute.xlu0 0
        %3994 = vperm.xlu0 %3993, %v3856
        %v3995 = vpop.permute.xlu0 %3994
        %3998 = vset.pattern.permute.xlu0 0
        %3999 = vperm.xlu0 %3998, %v3857
        %v4000 = vpop.permute.xlu0 %3999
        %4003 = vset.pattern.permute.xlu0 0
        %4004 = vperm.xlu0 %4003, %v3858
        %v4005 = vpop.permute.xlu0 %4004
        %4008 = vset.pattern.permute.xlu0 0
        %4009 = vperm.xlu0 %4008, %v3859
        %v4010 = vpop.permute.xlu0 %4009
        %4013 = vset.pattern.permute.xlu0 0
        %4014 = vperm.xlu0 %4013, %v3860
        %v4015 = vpop.permute.xlu0 %4014
        %4018 = vset.pattern.permute.xlu0 0
        %4019 = vperm.xlu0 %4018, %v3861
        %v4020 = vpop.permute.xlu0 %4019
        %v4022 = vmul.f32 %v3521, %v3865
        %v4023 = vmul.f32 %v3522, %v3870
        %v4024 = vmul.f32 %v3523, %v3875
        %v4025 = vmul.f32 %v3524, %v3880
        %v4026 = vmul.f32 %v3525, %v3885
        %v4027 = vmul.f32 %v3526, %v3890
        %v4028 = vmul.f32 %v3527, %v3895
        %v4029 = vmul.f32 %v3528, %v3900
        %v4030 = vmul.f32 %v3529, %v3905
        %v4031 = vmul.f32 %v3530, %v3910
        %v4032 = vmul.f32 %v3531, %v3915
        %v4033 = vmul.f32 %v3532, %v3920
        %v4034 = vmul.f32 %v3533, %v3925
        %v4035 = vmul.f32 %v3534, %v3930
        %v4036 = vmul.f32 %v3535, %v3935
        %v4037 = vmul.f32 %v3536, %v3940
        %v4038 = vmul.f32 %v3537, %v3945
        %v4039 = vmul.f32 %v3538, %v3950
        %v4040 = vmul.f32 %v3539, %v3955
        %v4041 = vmul.f32 %v3540, %v3960
        %v4042 = vmul.f32 %v3541, %v3965
        %v4043 = vmul.f32 %v3542, %v3970
        %v4044 = vmul.f32 %v3543, %v3975
        %v4045 = vmul.f32 %v3544, %v3980
        %v4046 = vmul.f32 %v3545, %v3985
        %v4047 = vmul.f32 %v3546, %v3990
        %v4048 = vmul.f32 %v3547, %v3995
        %v4049 = vmul.f32 %v3548, %v4000
        %v4050 = vmul.f32 %v3549, %v4005
        %v4051 = vmul.f32 %v3550, %v4010
        %v4052 = vmul.f32 %v3551, %v4015
        %v4053 = vmul.f32 %v3552, %v4020
        %v4054 = vadd.f32 %v4022, %v4023
        %v4055 = vadd.f32 %v4054, %v4024
        %v4056 = vadd.f32 %v4055, %v4025
        %v4057 = vadd.f32 %v4056, %v4026
        %v4058 = vadd.f32 %v4057, %v4027
        %v4059 = vadd.f32 %v4058, %v4028
        %v4060 = vadd.f32 %v4059, %v4029
        %v4061 = vadd.f32 %v4060, %v4030
        %v4062 = vadd.f32 %v4061, %v4031
        %v4063 = vadd.f32 %v4062, %v4032
        %v4064 = vadd.f32 %v4063, %v4033
        %v4065 = vadd.f32 %v4064, %v4034
        %v4066 = vadd.f32 %v4065, %v4035
        %v4067 = vadd.f32 %v4066, %v4036
        %v4068 = vadd.f32 %v4067, %v4037
        %v4069 = vadd.f32 %v4068, %v4038
        %v4070 = vadd.f32 %v4069, %v4039
        %v4071 = vadd.f32 %v4070, %v4040
        %v4072 = vadd.f32 %v4071, %v4041
        %v4073 = vadd.f32 %v4072, %v4042
        %v4074 = vadd.f32 %v4073, %v4043
        %v4075 = vadd.f32 %v4074, %v4044
        %v4076 = vadd.f32 %v4075, %v4045
        %v4077 = vadd.f32 %v4076, %v4046
        %v4078 = vadd.f32 %v4077, %v4047
        %v4079 = vadd.f32 %v4078, %v4048
        %v4080 = vadd.f32 %v4079, %v4049
        %v4081 = vadd.f32 %v4080, %v4050
        %v4082 = vadd.f32 %v4081, %v4051
        %v4083 = vadd.f32 %v4082, %v4052
        %v4084 = vadd.f32 %v4083, %v4053
        %v4085 = vrot.slane %v4084, 4
        %v4086 = vadd.f32 %v4084, %v4085
        %v4087 = vrot.slane %v4086, 2
        %v4088 = vadd.f32 %v4086, %v4087
        %v4089 = vrot.slane %v4088, 1
        %v4090 = vadd.f32 %v4088, %v4089
        %v4091 = vmul.f32 %v3521, %v1204
        %v4092 = vmul.f32 %v3522, %v1209
        %v4093 = vmul.f32 %v3523, %v1214
        %v4094 = vmul.f32 %v3524, %v1219
        %v4095 = vmul.f32 %v3525, %v1224
        %v4096 = vmul.f32 %v3526, %v1229
        %v4097 = vmul.f32 %v3527, %v1234
        %v4098 = vmul.f32 %v3528, %v1239
        %v4099 = vmul.f32 %v3529, %v1244
        %v4100 = vmul.f32 %v3530, %v1249
        %v4101 = vmul.f32 %v3531, %v1254
        %v4102 = vmul.f32 %v3532, %v1259
        %v4103 = vmul.f32 %v3533, %v1264
        %v4104 = vmul.f32 %v3534, %v1269
        %v4105 = vmul.f32 %v3535, %v1274
        %v4106 = vmul.f32 %v3536, %v1279
        %v4107 = vmul.f32 %v3537, %v1284
        %v4108 = vmul.f32 %v3538, %v1289
        %v4109 = vmul.f32 %v3539, %v1294
        %v4110 = vmul.f32 %v3540, %v1299
        %v4111 = vmul.f32 %v3541, %v1304
        %v4112 = vmul.f32 %v3542, %v1309
        %v4113 = vmul.f32 %v3543, %v1314
        %v4114 = vmul.f32 %v3544, %v1319
        %v4115 = vmul.f32 %v3545, %v1324
        %v4116 = vmul.f32 %v3546, %v1329
        %v4117 = vmul.f32 %v3547, %v1334
        %v4118 = vmul.f32 %v3548, %v1339
        %v4119 = vmul.f32 %v3549, %v1344
        %v4120 = vmul.f32 %v3550, %v1349
        %v4121 = vmul.f32 %v3551, %v1354
        %v4122 = vmul.f32 %v3552, %v1359
        %v4123 = vadd.f32 %v4091, %v4092
        %v4124 = vadd.f32 %v4123, %v4093
        %v4125 = vadd.f32 %v4124, %v4094
        %v4126 = vadd.f32 %v4125, %v4095
        %v4127 = vadd.f32 %v4126, %v4096
        %v4128 = vadd.f32 %v4127, %v4097
        %v4129 = vadd.f32 %v4128, %v4098
        %v4130 = vadd.f32 %v4129, %v4099
        %v4131 = vadd.f32 %v4130, %v4100
        %v4132 = vadd.f32 %v4131, %v4101
        %v4133 = vadd.f32 %v4132, %v4102
        %v4134 = vadd.f32 %v4133, %v4103
        %v4135 = vadd.f32 %v4134, %v4104
        %v4136 = vadd.f32 %v4135, %v4105
        %v4137 = vadd.f32 %v4136, %v4106
        %v4138 = vadd.f32 %v4137, %v4107
        %v4139 = vadd.f32 %v4138, %v4108
        %v4140 = vadd.f32 %v4139, %v4109
        %v4141 = vadd.f32 %v4140, %v4110
        %v4142 = vadd.f32 %v4141, %v4111
        %v4143 = vadd.f32 %v4142, %v4112
        %v4144 = vadd.f32 %v4143, %v4113
        %v4145 = vadd.f32 %v4144, %v4114
        %v4146 = vadd.f32 %v4145, %v4115
        %v4147 = vadd.f32 %v4146, %v4116
        %v4148 = vadd.f32 %v4147, %v4117
        %v4149 = vadd.f32 %v4148, %v4118
        %v4150 = vadd.f32 %v4149, %v4119
        %v4151 = vadd.f32 %v4150, %v4120
        %v4152 = vadd.f32 %v4151, %v4121
        %v4153 = vadd.f32 %v4152, %v4122
        %v4154 = vrot.slane %v4153, 4
        %v4155 = vadd.f32 %v4153, %v4154
        %v4156 = vrot.slane %v4155, 2
        %v4157 = vadd.f32 %v4155, %v4156
        %v4158 = vrot.slane %v4157, 1
        %v4159 = vadd.f32 %v4157, %v4158
        %v4160 = vmul.f32 %v3521, %v963
        %v4161 = vmul.f32 %v3522, %v968
        %v4162 = vmul.f32 %v3523, %v973
        %v4163 = vmul.f32 %v3524, %v978
        %v4164 = vmul.f32 %v3525, %v983
        %v4165 = vmul.f32 %v3526, %v988
        %v4166 = vmul.f32 %v3527, %v993
        %v4167 = vmul.f32 %v3528, %v998
        %v4168 = vmul.f32 %v3529, %v1003
        %v4169 = vmul.f32 %v3530, %v1008
        %v4170 = vmul.f32 %v3531, %v1013
        %v4171 = vmul.f32 %v3532, %v1018
        %v4172 = vmul.f32 %v3533, %v1023
        %v4173 = vmul.f32 %v3534, %v1028
        %v4174 = vmul.f32 %v3535, %v1033
        %v4175 = vmul.f32 %v3536, %v1038
        %v4176 = vmul.f32 %v3537, %v1043
        %v4177 = vmul.f32 %v3538, %v1048
        %v4178 = vmul.f32 %v3539, %v1053
        %v4179 = vmul.f32 %v3540, %v1058
        %v4180 = vmul.f32 %v3541, %v1063
        %v4181 = vmul.f32 %v3542, %v1068
        %v4182 = vmul.f32 %v3543, %v1073
        %v4183 = vmul.f32 %v3544, %v1078
        %v4184 = vmul.f32 %v3545, %v1083
        %v4185 = vmul.f32 %v3546, %v1088
        %v4186 = vmul.f32 %v3547, %v1093
        %v4187 = vmul.f32 %v3548, %v1098
        %v4188 = vmul.f32 %v3549, %v1103
        %v4189 = vmul.f32 %v3550, %v1108
        %v4190 = vmul.f32 %v3551, %v1113
        %v4191 = vmul.f32 %v3552, %v1118
        %v4192 = vadd.f32 %v4160, %v4161
        %v4193 = vadd.f32 %v4192, %v4162
        %v4194 = vadd.f32 %v4193, %v4163
        %v4195 = vadd.f32 %v4194, %v4164
        %v4196 = vadd.f32 %v4195, %v4165
        %v4197 = vadd.f32 %v4196, %v4166
        %v4198 = vadd.f32 %v4197, %v4167
        %v4199 = vadd.f32 %v4198, %v4168
        %v4200 = vadd.f32 %v4199, %v4169
        %v4201 = vadd.f32 %v4200, %v4170
        %v4202 = vadd.f32 %v4201, %v4171
        %v4203 = vadd.f32 %v4202, %v4172
        %v4204 = vadd.f32 %v4203, %v4173
        %v4205 = vadd.f32 %v4204, %v4174
        %v4206 = vadd.f32 %v4205, %v4175
        %v4207 = vadd.f32 %v4206, %v4176
        %v4208 = vadd.f32 %v4207, %v4177
        %v4209 = vadd.f32 %v4208, %v4178
        %v4210 = vadd.f32 %v4209, %v4179
        %v4211 = vadd.f32 %v4210, %v4180
        %v4212 = vadd.f32 %v4211, %v4181
        %v4213 = vadd.f32 %v4212, %v4182
        %v4214 = vadd.f32 %v4213, %v4183
        %v4215 = vadd.f32 %v4214, %v4184
        %v4216 = vadd.f32 %v4215, %v4185
        %v4217 = vadd.f32 %v4216, %v4186
        %v4218 = vadd.f32 %v4217, %v4187
        %v4219 = vadd.f32 %v4218, %v4188
        %v4220 = vadd.f32 %v4219, %v4189
        %v4221 = vadd.f32 %v4220, %v4190
        %v4222 = vadd.f32 %v4221, %v4191
        %v4223 = vrot.slane %v4222, 4
        %v4224 = vadd.f32 %v4222, %v4223
        %v4225 = vrot.slane %v4224, 2
        %v4226 = vadd.f32 %v4224, %v4225
        %v4227 = vrot.slane %v4226, 1
        %v4228 = vadd.f32 %v4226, %v4227
        %v4229 = vmul.f32 %v3521, %v657
        %v4230 = vmul.f32 %v3522, %v662
        %v4231 = vmul.f32 %v3523, %v667
        %v4232 = vmul.f32 %v3524, %v672
        %v4233 = vmul.f32 %v3525, %v677
        %v4234 = vmul.f32 %v3526, %v682
        %v4235 = vmul.f32 %v3527, %v687
        %v4236 = vmul.f32 %v3528, %v692
        %v4237 = vmul.f32 %v3529, %v697
        %v4238 = vmul.f32 %v3530, %v702
        %v4239 = vmul.f32 %v3531, %v707
        %v4240 = vmul.f32 %v3532, %v712
        %v4241 = vmul.f32 %v3533, %v717
        %v4242 = vmul.f32 %v3534, %v722
        %v4243 = vmul.f32 %v3535, %v727
        %v4244 = vmul.f32 %v3536, %v732
        %v4245 = vmul.f32 %v3537, %v737
        %v4246 = vmul.f32 %v3538, %v742
        %v4247 = vmul.f32 %v3539, %v747
        %v4248 = vmul.f32 %v3540, %v752
        %v4249 = vmul.f32 %v3541, %v757
        %v4250 = vmul.f32 %v3542, %v762
        %v4251 = vmul.f32 %v3543, %v767
        %v4252 = vmul.f32 %v3544, %v772
        %v4253 = vmul.f32 %v3545, %v777
        %v4254 = vmul.f32 %v3546, %v782
        %v4255 = vmul.f32 %v3547, %v787
        %v4256 = vmul.f32 %v3548, %v792
        %v4257 = vmul.f32 %v3549, %v797
        %v4258 = vmul.f32 %v3550, %v802
        %v4259 = vmul.f32 %v3551, %v807
        %v4260 = vmul.f32 %v3552, %v812
        %v4261 = vadd.f32 %v4229, %v4230
        %v4262 = vadd.f32 %v4261, %v4231
        %v4263 = vadd.f32 %v4262, %v4232
        %v4264 = vadd.f32 %v4263, %v4233
        %v4265 = vadd.f32 %v4264, %v4234
        %v4266 = vadd.f32 %v4265, %v4235
        %v4267 = vadd.f32 %v4266, %v4236
        %v4268 = vadd.f32 %v4267, %v4237
        %v4269 = vadd.f32 %v4268, %v4238
        %v4270 = vadd.f32 %v4269, %v4239
        %v4271 = vadd.f32 %v4270, %v4240
        %v4272 = vadd.f32 %v4271, %v4241
        %v4273 = vadd.f32 %v4272, %v4242
        %v4274 = vadd.f32 %v4273, %v4243
        %v4275 = vadd.f32 %v4274, %v4244
        %v4276 = vadd.f32 %v4275, %v4245
        %v4277 = vadd.f32 %v4276, %v4246
        %v4278 = vadd.f32 %v4277, %v4247
        %v4279 = vadd.f32 %v4278, %v4248
        %v4280 = vadd.f32 %v4279, %v4249
        %v4281 = vadd.f32 %v4280, %v4250
        %v4282 = vadd.f32 %v4281, %v4251
        %v4283 = vadd.f32 %v4282, %v4252
        %v4284 = vadd.f32 %v4283, %v4253
        %v4285 = vadd.f32 %v4284, %v4254
        %v4286 = vadd.f32 %v4285, %v4255
        %v4287 = vadd.f32 %v4286, %v4256
        %v4288 = vadd.f32 %v4287, %v4257
        %v4289 = vadd.f32 %v4288, %v4258
        %v4290 = vadd.f32 %v4289, %v4259
        %v4291 = vadd.f32 %v4290, %v4260
        %v4292 = vrot.slane %v4291, 4
        %v4293 = vadd.f32 %v4291, %v4292
        %v4294 = vrot.slane %v4293, 2
        %v4295 = vadd.f32 %v4293, %v4294
        %v4296 = vrot.slane %v4295, 1
        %v4297 = vadd.f32 %v4295, %v4296
        %v4298 = vmul.f32 %v3521, %v416
        %v4299 = vmul.f32 %v3522, %v421
        %v4300 = vmul.f32 %v3523, %v426
        %v4301 = vmul.f32 %v3524, %v431
        %v4302 = vmul.f32 %v3525, %v436
        %v4303 = vmul.f32 %v3526, %v441
        %v4304 = vmul.f32 %v3527, %v446
        %v4305 = vmul.f32 %v3528, %v451
        %v4306 = vmul.f32 %v3529, %v456
        %v4307 = vmul.f32 %v3530, %v461
        %v4308 = vmul.f32 %v3531, %v466
        %v4309 = vmul.f32 %v3532, %v471
        %v4310 = vmul.f32 %v3533, %v476
        %v4311 = vmul.f32 %v3534, %v481
        %v4312 = vmul.f32 %v3535, %v486
        %v4313 = vmul.f32 %v3536, %v491
        %v4314 = vmul.f32 %v3537, %v496
        %v4315 = vmul.f32 %v3538, %v501
        %v4316 = vmul.f32 %v3539, %v506
        %v4317 = vmul.f32 %v3540, %v511
        %v4318 = vmul.f32 %v3541, %v516
        %v4319 = vmul.f32 %v3542, %v521
        %v4320 = vmul.f32 %v3543, %v526
        %v4321 = vmul.f32 %v3544, %v531
        %v4322 = vmul.f32 %v3545, %v536
        %v4323 = vmul.f32 %v3546, %v541
        %v4324 = vmul.f32 %v3547, %v546
        %v4325 = vmul.f32 %v3548, %v551
        %v4326 = vmul.f32 %v3549, %v556
        %v4327 = vmul.f32 %v3550, %v561
        %v4328 = vmul.f32 %v3551, %v566
        %v4329 = vmul.f32 %v3552, %v571
        %v4330 = vadd.f32 %v4298, %v4299
        %v4331 = vadd.f32 %v4330, %v4300
        %v4332 = vadd.f32 %v4331, %v4301
        %v4333 = vadd.f32 %v4332, %v4302
        %v4334 = vadd.f32 %v4333, %v4303
        %v4335 = vadd.f32 %v4334, %v4304
        %v4336 = vadd.f32 %v4335, %v4305
        %v4337 = vadd.f32 %v4336, %v4306
        %v4338 = vadd.f32 %v4337, %v4307
        %v4339 = vadd.f32 %v4338, %v4308
        %v4340 = vadd.f32 %v4339, %v4309
        %v4341 = vadd.f32 %v4340, %v4310
        %v4342 = vadd.f32 %v4341, %v4311
        %v4343 = vadd.f32 %v4342, %v4312
        %v4344 = vadd.f32 %v4343, %v4313
        %v4345 = vadd.f32 %v4344, %v4314
        %v4346 = vadd.f32 %v4345, %v4315
        %v4347 = vadd.f32 %v4346, %v4316
        %v4348 = vadd.f32 %v4347, %v4317
        %v4349 = vadd.f32 %v4348, %v4318
        %v4350 = vadd.f32 %v4349, %v4319
        %v4351 = vadd.f32 %v4350, %v4320
        %v4352 = vadd.f32 %v4351, %v4321
        %v4353 = vadd.f32 %v4352, %v4322
        %v4354 = vadd.f32 %v4353, %v4323
        %v4355 = vadd.f32 %v4354, %v4324
        %v4356 = vadd.f32 %v4355, %v4325
        %v4357 = vadd.f32 %v4356, %v4326
        %v4358 = vadd.f32 %v4357, %v4327
        %v4359 = vadd.f32 %v4358, %v4328
        %v4360 = vadd.f32 %v4359, %v4329
        %v4361 = vrot.slane %v4360, 4
        %v4362 = vadd.f32 %v4360, %v4361
        %v4363 = vrot.slane %v4362, 2
        %v4364 = vadd.f32 %v4362, %v4363
        %v4365 = vrot.slane %v4364, 1
        %v4366 = vadd.f32 %v4364, %v4365
        %v4367 = vld [vmem:[%s4] sm:$0xff]
        %v4368 = vld [vmem:[%s4 + $0x8] sm:$0xff]
        %v4369 = vld [vmem:[%s4 + $0x10] sm:$0xff]
        %v4370 = vld [vmem:[%s4 + $0x18] sm:$0xff]
        %v4371 = vld [vmem:[%s4 + $0x20] sm:$0xff]
        %v4372 = vld [vmem:[%s4 + $0x28] sm:$0xff]
        %v4373 = vld [vmem:[%s4 + $0x30] sm:$0xff]
        %v4374 = vld [vmem:[%s4 + $0x38] sm:$0xff]
        %v4375 = vld [vmem:[%s4 + $0x40] sm:$0xff]
        %v4376 = vld [vmem:[%s4 + $0x48] sm:$0xff]
        %v4377 = vld [vmem:[%s4 + $0x50] sm:$0xff]
        %v4378 = vld [vmem:[%s4 + $0x58] sm:$0xff]
        %v4379 = vld [vmem:[%s4 + $0x60] sm:$0xff]
        %v4380 = vld [vmem:[%s4 + $0x68] sm:$0xff]
        %v4381 = vld [vmem:[%s4 + $0x70] sm:$0xff]
        %v4382 = vld [vmem:[%s4 + $0x78] sm:$0xff]
        %v4383 = vld [vmem:[%s4 + $0x80] sm:$0xff]
        %v4384 = vld [vmem:[%s4 + $0x88] sm:$0xff]
        %v4385 = vld [vmem:[%s4 + $0x90] sm:$0xff]
        %v4386 = vld [vmem:[%s4 + $0x98] sm:$0xff]
        %v4387 = vld [vmem:[%s4 + $0xa0] sm:$0xff]
        %v4388 = vld [vmem:[%s4 + $0xa8] sm:$0xff]
        %v4389 = vld [vmem:[%s4 + $0xb0] sm:$0xff]
        %v4390 = vld [vmem:[%s4 + $0xb8] sm:$0xff]
        %v4391 = vld [vmem:[%s4 + $0xc0] sm:$0xff]
        %v4392 = vld [vmem:[%s4 + $0xc8] sm:$0xff]
        %v4393 = vld [vmem:[%s4 + $0xd0] sm:$0xff]
        %v4394 = vld [vmem:[%s4 + $0xd8] sm:$0xff]
        %v4395 = vld [vmem:[%s4 + $0xe0] sm:$0xff]
        %v4396 = vld [vmem:[%s4 + $0xe8] sm:$0xff]
        %v4397 = vld [vmem:[%s4 + $0xf0] sm:$0xff]
        %v4398 = vld [vmem:[%s4 + $0xf8] sm:$0xff]
        %v4399 = vld [vmem:[%s4 + $0x100] sm:$0xff]
        %v4400 = vld [vmem:[%s4 + $0x108] sm:$0xff]
        %v4401 = vld [vmem:[%s4 + $0x110] sm:$0xff]
        %v4402 = vld [vmem:[%s4 + $0x118] sm:$0xff]
        %v4403 = vld [vmem:[%s4 + $0x120] sm:$0xff]
        %v4404 = vld [vmem:[%s4 + $0x128] sm:$0xff]
        %v4405 = vld [vmem:[%s4 + $0x130] sm:$0xff]
        %v4406 = vld [vmem:[%s4 + $0x138] sm:$0xff]
        %v4407 = vld [vmem:[%s4 + $0x140] sm:$0xff]
        %v4408 = vld [vmem:[%s4 + $0x148] sm:$0xff]
        %v4409 = vld [vmem:[%s4 + $0x150] sm:$0xff]
        %v4410 = vld [vmem:[%s4 + $0x158] sm:$0xff]
        %v4411 = vld [vmem:[%s4 + $0x160] sm:$0xff]
        %v4412 = vld [vmem:[%s4 + $0x168] sm:$0xff]
        %v4413 = vld [vmem:[%s4 + $0x170] sm:$0xff]
        %v4414 = vld [vmem:[%s4 + $0x178] sm:$0xff]
        %v4415 = vld [vmem:[%s4 + $0x180] sm:$0xff]
        %v4416 = vld [vmem:[%s4 + $0x188] sm:$0xff]
        %v4417 = vld [vmem:[%s4 + $0x190] sm:$0xff]
        %v4418 = vld [vmem:[%s4 + $0x198] sm:$0xff]
        %v4419 = vld [vmem:[%s4 + $0x1a0] sm:$0xff]
        %v4420 = vld [vmem:[%s4 + $0x1a8] sm:$0xff]
        %v4421 = vld [vmem:[%s4 + $0x1b0] sm:$0xff]
        %v4422 = vld [vmem:[%s4 + $0x1b8] sm:$0xff]
        %v4423 = vld [vmem:[%s4 + $0x1c0] sm:$0xff]
        %v4424 = vld [vmem:[%s4 + $0x1c8] sm:$0xff]
        %v4425 = vld [vmem:[%s4 + $0x1d0] sm:$0xff]
        %v4426 = vld [vmem:[%s4 + $0x1d8] sm:$0xff]
        %v4427 = vld [vmem:[%s4 + $0x1e0] sm:$0xff]
        %v4428 = vld [vmem:[%s4 + $0x1e8] sm:$0xff]
        %v4429 = vld [vmem:[%s4 + $0x1f0] sm:$0xff]
        %v4430 = vld [vmem:[%s4 + $0x1f8] sm:$0xff]
        %v4431 = vld [vmem:[%s4 + $0x200] sm:$0xff]
        %v4432 = vld [vmem:[%s4 + $0x208] sm:$0xff]
        %v4433 = vld [vmem:[%s4 + $0x210] sm:$0xff]
        %v4434 = vld [vmem:[%s4 + $0x218] sm:$0xff]
        %v4435 = vld [vmem:[%s4 + $0x220] sm:$0xff]
        %v4436 = vld [vmem:[%s4 + $0x228] sm:$0xff]
        %v4437 = vld [vmem:[%s4 + $0x230] sm:$0xff]
        %v4438 = vld [vmem:[%s4 + $0x238] sm:$0xff]
        %v4439 = vld [vmem:[%s4 + $0x240] sm:$0xff]
        %v4440 = vld [vmem:[%s4 + $0x248] sm:$0xff]
        %v4441 = vld [vmem:[%s4 + $0x250] sm:$0xff]
        %v4442 = vld [vmem:[%s4 + $0x258] sm:$0xff]
        %v4443 = vld [vmem:[%s4 + $0x260] sm:$0xff]
        %v4444 = vld [vmem:[%s4 + $0x268] sm:$0xff]
        %v4445 = vld [vmem:[%s4 + $0x270] sm:$0xff]
        %v4446 = vld [vmem:[%s4 + $0x278] sm:$0xff]
        %v4447 = vld [vmem:[%s4 + $0x280] sm:$0xff]
        %v4448 = vld [vmem:[%s4 + $0x288] sm:$0xff]
        %v4449 = vld [vmem:[%s4 + $0x290] sm:$0xff]
        %v4450 = vld [vmem:[%s4 + $0x298] sm:$0xff]
        %v4451 = vld [vmem:[%s4 + $0x2a0] sm:$0xff]
        %v4452 = vld [vmem:[%s4 + $0x2a8] sm:$0xff]
        %v4453 = vld [vmem:[%s4 + $0x2b0] sm:$0xff]
        %v4454 = vld [vmem:[%s4 + $0x2b8] sm:$0xff]
        %v4455 = vld [vmem:[%s4 + $0x2c0] sm:$0xff]
        %v4456 = vld [vmem:[%s4 + $0x2c8] sm:$0xff]
        %v4457 = vld [vmem:[%s4 + $0x2d0] sm:$0xff]
        %v4458 = vld [vmem:[%s4 + $0x2d8] sm:$0xff]
        %v4459 = vld [vmem:[%s4 + $0x2e0] sm:$0xff]
        %v4460 = vld [vmem:[%s4 + $0x2e8] sm:$0xff]
        %v4461 = vld [vmem:[%s4 + $0x2f0] sm:$0xff]
        %v4462 = vld [vmem:[%s4 + $0x2f8] sm:$0xff]
        %v4463 = vld [vmem:[%s4 + $0x300] sm:$0xff]
        %v4464 = vld [vmem:[%s4 + $0x308] sm:$0xff]
        %v4465 = vld [vmem:[%s4 + $0x310] sm:$0xff]
        %v4466 = vld [vmem:[%s4 + $0x318] sm:$0xff]
        %v4467 = vld [vmem:[%s4 + $0x320] sm:$0xff]
        %v4468 = vld [vmem:[%s4 + $0x328] sm:$0xff]
        %v4469 = vld [vmem:[%s4 + $0x330] sm:$0xff]
        %v4470 = vld [vmem:[%s4 + $0x338] sm:$0xff]
        %v4471 = vld [vmem:[%s4 + $0x340] sm:$0xff]
        %v4472 = vld [vmem:[%s4 + $0x348] sm:$0xff]
        %v4473 = vld [vmem:[%s4 + $0x350] sm:$0xff]
        %v4474 = vld [vmem:[%s4 + $0x358] sm:$0xff]
        %v4475 = vld [vmem:[%s4 + $0x360] sm:$0xff]
        %v4476 = vld [vmem:[%s4 + $0x368] sm:$0xff]
        %v4477 = vld [vmem:[%s4 + $0x370] sm:$0xff]
        %v4478 = vld [vmem:[%s4 + $0x378] sm:$0xff]
        %v4479 = vld [vmem:[%s4 + $0x380] sm:$0xff]
        %v4480 = vld [vmem:[%s4 + $0x388] sm:$0xff]
        %v4481 = vld [vmem:[%s4 + $0x390] sm:$0xff]
        %v4482 = vld [vmem:[%s4 + $0x398] sm:$0xff]
        %v4483 = vld [vmem:[%s4 + $0x3a0] sm:$0xff]
        %v4484 = vld [vmem:[%s4 + $0x3a8] sm:$0xff]
        %v4485 = vld [vmem:[%s4 + $0x3b0] sm:$0xff]
        %v4486 = vld [vmem:[%s4 + $0x3b8] sm:$0xff]
        %v4487 = vld [vmem:[%s4 + $0x3c0] sm:$0xff]
        %v4488 = vld [vmem:[%s4 + $0x3c8] sm:$0xff]
        %v4489 = vld [vmem:[%s4 + $0x3d0] sm:$0xff]
        %v4490 = vld [vmem:[%s4 + $0x3d8] sm:$0xff]
        %v4491 = vld [vmem:[%s4 + $0x3e0] sm:$0xff]
        %v4492 = vld [vmem:[%s4 + $0x3e8] sm:$0xff]
        %v4493 = vld [vmem:[%s4 + $0x3f0] sm:$0xff]
        %v4494 = vld [vmem:[%s4 + $0x3f8] sm:$0xff]
        %v4495 = vld [vmem:[%s4 + $0x400] sm:$0xff]
        %v4496 = vld [vmem:[%s4 + $0x408] sm:$0xff]
        %v4497 = vld [vmem:[%s4 + $0x410] sm:$0xff]
        %v4498 = vld [vmem:[%s4 + $0x418] sm:$0xff]
        %v4499 = vld [vmem:[%s4 + $0x420] sm:$0xff]
        %v4500 = vld [vmem:[%s4 + $0x428] sm:$0xff]
        %v4501 = vld [vmem:[%s4 + $0x430] sm:$0xff]
        %v4502 = vld [vmem:[%s4 + $0x438] sm:$0xff]
        %v4503 = vld [vmem:[%s4 + $0x440] sm:$0xff]
        %v4504 = vld [vmem:[%s4 + $0x448] sm:$0xff]
        %v4505 = vld [vmem:[%s4 + $0x450] sm:$0xff]
        %v4506 = vld [vmem:[%s4 + $0x458] sm:$0xff]
        %v4507 = vld [vmem:[%s4 + $0x460] sm:$0xff]
        %v4508 = vld [vmem:[%s4 + $0x468] sm:$0xff]
        %v4509 = vld [vmem:[%s4 + $0x470] sm:$0xff]
        %v4510 = vld [vmem:[%s4 + $0x478] sm:$0xff]
        %v4511 = vld [vmem:[%s5] sm:$0x1]
        %4512 = vmatprep.subr.mxu0 0.0
        %4513 = vmatpush1.msra.mxu0 %v4382
        %4514 = vmatprep.subr.mxu0 0.0
        %4515 = vmatpush1.msra.mxu0 %v4381
        %4516 = vmatprep.subr.mxu0 0.0
        %4517 = vmatpush1.msra.mxu0 %v4380
        %4518 = vmatprep.subr.mxu0 0.0
        %4519 = vmatpush1.msra.mxu0 %v4379
        %4520 = vmatprep.subr.mxu0 0.0
        %4521 = vmatpush1.msra.mxu0 %v4378
        %4522 = vmatprep.subr.mxu0 0.0
        %4523 = vmatpush1.msra.mxu0 %v4377
        %4524 = vmatprep.subr.mxu0 0.0
        %4525 = vmatpush1.msra.mxu0 %v4376
        %4526 = vmatprep.subr.mxu0 0.0
        %4527 = vmatpush1.msra.mxu0 %v4375
        %4528 = vmatprep.subr.mxu0 0.0
        %4529 = vmatpush1.msra.mxu0 %v4374
        %4530 = vmatprep.subr.mxu0 0.0
        %4531 = vmatpush1.msra.mxu0 %v4373
        %4532 = vmatprep.subr.mxu0 0.0
        %4533 = vmatpush1.msra.mxu0 %v4372
        %4534 = vmatprep.subr.mxu0 0.0
        %4535 = vmatpush1.msra.mxu0 %v4371
        %4536 = vmatprep.subr.mxu0 0.0
        %4537 = vmatpush1.msra.mxu0 %v4370
        %4538 = vmatprep.subr.mxu0 0.0
        %4539 = vmatpush1.msra.mxu0 %v4369
        %4540 = vmatprep.subr.mxu0 0.0
        %4541 = vmatpush1.msra.mxu0 %v4368
        %4542 = vmatprep.subr.mxu0 0.0
        %4543 = vmatpush1.msra.mxu0 %v4367
        %4544 = vmatprep.subr.mxu0 0.0
        %4545 = vmatpush2.msra.mxu0 %v4398
        %4546 = vmatprep.subr.mxu0 0.0
        %4547 = vmatpush2.msra.mxu0 %v4397
        %4548 = vmatprep.subr.mxu0 0.0
        %4549 = vmatpush2.msra.mxu0 %v4396
        %4550 = vmatprep.subr.mxu0 0.0
        %4551 = vmatpush2.msra.mxu0 %v4395
        %4552 = vmatprep.subr.mxu0 0.0
        %4553 = vmatpush2.msra.mxu0 %v4394
        %4554 = vmatprep.subr.mxu0 0.0
        %4555 = vmatpush2.msra.mxu0 %v4393
        %4556 = vmatprep.subr.mxu0 0.0
        %4557 = vmatpush2.msra.mxu0 %v4392
        %4558 = vmatprep.subr.mxu0 0.0
        %4559 = vmatpush2.msra.mxu0 %v4391
        %4560 = vmatprep.subr.mxu0 0.0
        %4561 = vmatpush2.msra.mxu0 %v4390
        %4562 = vmatprep.subr.mxu0 0.0
        %4563 = vmatpush2.msra.mxu0 %v4389
        %4564 = vmatprep.subr.mxu0 0.0
        %4565 = vmatpush2.msra.mxu0 %v4388
        %4566 = vmatprep.subr.mxu0 0.0
        %4567 = vmatpush2.msra.mxu0 %v4387
        %4568 = vmatprep.subr.mxu0 0.0
        %4569 = vmatpush2.msra.mxu0 %v4386
        %4570 = vmatprep.subr.mxu0 0.0
        %4571 = vmatpush2.msra.mxu0 %v4385
        %4572 = vmatprep.subr.mxu0 0.0
        %4573 = vmatpush2.msra.mxu0 %v4384
        %4574 = vmatprep.subr.mxu0 0.0
        %4575 = vmatpush2.msra.mxu0 %v4383
        %4576 = vmatprep.mubr.f32.mxu0 %v3690
        %4577 = vmatmul.mubr.f32.gmra.mxu0 %v3621
        %v4578 = vpop.f32.mrf.mxu0
        %v4579 = vadd.f32 %v4511, %v4578
        %v4580 = vpop.f32.mrf.mxu0
        %4581 = vdwg.mxu0
        %4582 = vmatprep.subr.mxu0 0.0
        %4583 = vmatpush1.msra.mxu0 %v4414
        %4584 = vmatprep.subr.mxu0 0.0
        %4585 = vmatpush1.msra.mxu0 %v4413
        %4586 = vmatprep.subr.mxu0 0.0
        %4587 = vmatpush1.msra.mxu0 %v4412
        %4588 = vmatprep.subr.mxu0 0.0
        %4589 = vmatpush1.msra.mxu0 %v4411
        %4590 = vmatprep.subr.mxu0 0.0
        %4591 = vmatpush1.msra.mxu0 %v4410
        %4592 = vmatprep.subr.mxu0 0.0
        %4593 = vmatpush1.msra.mxu0 %v4409
        %4594 = vmatprep.subr.mxu0 0.0
        %4595 = vmatpush1.msra.mxu0 %v4408
        %4596 = vmatprep.subr.mxu0 0.0
        %4597 = vmatpush1.msra.mxu0 %v4407
        %4598 = vmatprep.subr.mxu0 0.0
        %4599 = vmatpush1.msra.mxu0 %v4406
        %4600 = vmatprep.subr.mxu0 0.0
        %4601 = vmatpush1.msra.mxu0 %v4405
        %4602 = vmatprep.subr.mxu0 0.0
        %4603 = vmatpush1.msra.mxu0 %v4404
        %4604 = vmatprep.subr.mxu0 0.0
        %4605 = vmatpush1.msra.mxu0 %v4403
        %4606 = vmatprep.subr.mxu0 0.0
        %4607 = vmatpush1.msra.mxu0 %v4402
        %4608 = vmatprep.subr.mxu0 0.0
        %4609 = vmatpush1.msra.mxu0 %v4401
        %4610 = vmatprep.subr.mxu0 0.0
        %4611 = vmatpush1.msra.mxu0 %v4400
        %4612 = vmatprep.subr.mxu0 0.0
        %4613 = vmatpush1.msra.mxu0 %v4399
        %4614 = vmatprep.subr.mxu0 0.0
        %4615 = vmatpush2.msra.mxu0 %v4430
        %4616 = vmatprep.subr.mxu0 0.0
        %4617 = vmatpush2.msra.mxu0 %v4429
        %4618 = vmatprep.subr.mxu0 0.0
        %4619 = vmatpush2.msra.mxu0 %v4428
        %4620 = vmatprep.subr.mxu0 0.0
        %4621 = vmatpush2.msra.mxu0 %v4427
        %4622 = vmatprep.subr.mxu0 0.0
        %4623 = vmatpush2.msra.mxu0 %v4426
        %4624 = vmatprep.subr.mxu0 0.0
        %4625 = vmatpush2.msra.mxu0 %v4425
        %4626 = vmatprep.subr.mxu0 0.0
        %4627 = vmatpush2.msra.mxu0 %v4424
        %4628 = vmatprep.subr.mxu0 0.0
        %4629 = vmatpush2.msra.mxu0 %v4423
        %4630 = vmatprep.subr.mxu0 0.0
        %4631 = vmatpush2.msra.mxu0 %v4422
        %4632 = vmatprep.subr.mxu0 0.0
        %4633 = vmatpush2.msra.mxu0 %v4421
        %4634 = vmatprep.subr.mxu0 0.0
        %4635 = vmatpush2.msra.mxu0 %v4420
        %4636 = vmatprep.subr.mxu0 0.0
        %4637 = vmatpush2.msra.mxu0 %v4419
        %4638 = vmatprep.subr.mxu0 0.0
        %4639 = vmatpush2.msra.mxu0 %v4418
        %4640 = vmatprep.subr.mxu0 0.0
        %4641 = vmatpush2.msra.mxu0 %v4417
        %4642 = vmatprep.subr.mxu0 0.0
        %4643 = vmatpush2.msra.mxu0 %v4416
        %4644 = vmatprep.subr.mxu0 0.0
        %4645 = vmatpush2.msra.mxu0 %v4415
        %4646 = vmatprep.mubr.f32.mxu0 %v3828
        %4647 = vmatmul.mubr.f32.gmra.mxu0 %v3759
        %v4648 = vpop.f32.mrf.mxu0
        %v4649 = vadd.f32 %v4579, %v4648
        %v4650 = vpop.f32.mrf.mxu0
        %4651 = vdwg.mxu0
        %4652 = vmatprep.subr.mxu0 0.0
        %4653 = vmatpush1.msra.mxu0 %v4446
        %4654 = vmatprep.subr.mxu0 0.0
        %4655 = vmatpush1.msra.mxu0 %v4445
        %4656 = vmatprep.subr.mxu0 0.0
        %4657 = vmatpush1.msra.mxu0 %v4444
        %4658 = vmatprep.subr.mxu0 0.0
        %4659 = vmatpush1.msra.mxu0 %v4443
        %4660 = vmatprep.subr.mxu0 0.0
        %4661 = vmatpush1.msra.mxu0 %v4442
        %4662 = vmatprep.subr.mxu0 0.0
        %4663 = vmatpush1.msra.mxu0 %v4441
        %4664 = vmatprep.subr.mxu0 0.0
        %4665 = vmatpush1.msra.mxu0 %v4440
        %4666 = vmatprep.subr.mxu0 0.0
        %4667 = vmatpush1.msra.mxu0 %v4439
        %4668 = vmatprep.subr.mxu0 0.0
        %4669 = vmatpush1.msra.mxu0 %v4438
        %4670 = vmatprep.subr.mxu0 0.0
        %4671 = vmatpush1.msra.mxu0 %v4437
        %4672 = vmatprep.subr.mxu0 0.0
        %4673 = vmatpush1.msra.mxu0 %v4436
        %4674 = vmatprep.subr.mxu0 0.0
        %4675 = vmatpush1.msra.mxu0 %v4435
        %4676 = vmatprep.subr.mxu0 0.0
        %4677 = vmatpush1.msra.mxu0 %v4434
        %4678 = vmatprep.subr.mxu0 0.0
        %4679 = vmatpush1.msra.mxu0 %v4433
        %4680 = vmatprep.subr.mxu0 0.0
        %4681 = vmatpush1.msra.mxu0 %v4432
        %4682 = vmatprep.subr.mxu0 0.0
        %4683 = vmatpush1.msra.mxu0 %v4431
        %4684 = vmatprep.subr.mxu0 0.0
        %4685 = vmatpush2.msra.mxu0 %v4462
        %4686 = vmatprep.subr.mxu0 0.0
        %4687 = vmatpush2.msra.mxu0 %v4461
        %4688 = vmatprep.subr.mxu0 0.0
        %4689 = vmatpush2.msra.mxu0 %v4460
        %4690 = vmatprep.subr.mxu0 0.0
        %4691 = vmatpush2.msra.mxu0 %v4459
        %4692 = vmatprep.subr.mxu0 0.0
        %4693 = vmatpush2.msra.mxu0 %v4458
        %4694 = vmatprep.subr.mxu0 0.0
        %4695 = vmatpush2.msra.mxu0 %v4457
        %4696 = vmatprep.subr.mxu0 0.0
        %4697 = vmatpush2.msra.mxu0 %v4456
        %4698 = vmatprep.subr.mxu0 0.0
        %4699 = vmatpush2.msra.mxu0 %v4455
        %4700 = vmatprep.subr.mxu0 0.0
        %4701 = vmatpush2.msra.mxu0 %v4454
        %4702 = vmatprep.subr.mxu0 0.0
        %4703 = vmatpush2.msra.mxu0 %v4453
        %4704 = vmatprep.subr.mxu0 0.0
        %4705 = vmatpush2.msra.mxu0 %v4452
        %4706 = vmatprep.subr.mxu0 0.0
        %4707 = vmatpush2.msra.mxu0 %v4451
        %4708 = vmatprep.subr.mxu0 0.0
        %4709 = vmatpush2.msra.mxu0 %v4450
        %4710 = vmatprep.subr.mxu0 0.0
        %4711 = vmatpush2.msra.mxu0 %v4449
        %4712 = vmatprep.subr.mxu0 0.0
        %4713 = vmatpush2.msra.mxu0 %v4448
        %4714 = vmatprep.subr.mxu0 0.0
        %4715 = vmatpush2.msra.mxu0 %v4447
        %4716 = vmatprep.mubr.f32.mxu0 %v4159
        %4717 = vmatmul.mubr.f32.gmra.mxu0 %v4090
        %v4718 = vpop.f32.mrf.mxu0
        %v4719 = vadd.f32 %v4649, %v4718
        %v4720 = vpop.f32.mrf.mxu0
        %4721 = vdwg.mxu0
        %4722 = vmatprep.subr.mxu0 0.0
        %4723 = vmatpush1.msra.mxu0 %v4478
        %4724 = vmatprep.subr.mxu0 0.0
        %4725 = vmatpush1.msra.mxu0 %v4477
        %4726 = vmatprep.subr.mxu0 0.0
        %4727 = vmatpush1.msra.mxu0 %v4476
        %4728 = vmatprep.subr.mxu0 0.0
        %4729 = vmatpush1.msra.mxu0 %v4475
        %4730 = vmatprep.subr.mxu0 0.0
        %4731 = vmatpush1.msra.mxu0 %v4474
        %4732 = vmatprep.subr.mxu0 0.0
        %4733 = vmatpush1.msra.mxu0 %v4473
        %4734 = vmatprep.subr.mxu0 0.0
        %4735 = vmatpush1.msra.mxu0 %v4472
        %4736 = vmatprep.subr.mxu0 0.0
        %4737 = vmatpush1.msra.mxu0 %v4471
        %4738 = vmatprep.subr.mxu0 0.0
        %4739 = vmatpush1.msra.mxu0 %v4470
        %4740 = vmatprep.subr.mxu0 0.0
        %4741 = vmatpush1.msra.mxu0 %v4469
        %4742 = vmatprep.subr.mxu0 0.0
        %4743 = vmatpush1.msra.mxu0 %v4468
        %4744 = vmatprep.subr.mxu0 0.0
        %4745 = vmatpush1.msra.mxu0 %v4467
        %4746 = vmatprep.subr.mxu0 0.0
        %4747 = vmatpush1.msra.mxu0 %v4466
        %4748 = vmatprep.subr.mxu0 0.0
        %4749 = vmatpush1.msra.mxu0 %v4465
        %4750 = vmatprep.subr.mxu0 0.0
        %4751 = vmatpush1.msra.mxu0 %v4464
        %4752 = vmatprep.subr.mxu0 0.0
        %4753 = vmatpush1.msra.mxu0 %v4463
        %4754 = vmatprep.subr.mxu0 0.0
        %4755 = vmatpush2.msra.mxu0 %v4494
        %4756 = vmatprep.subr.mxu0 0.0
        %4757 = vmatpush2.msra.mxu0 %v4493
        %4758 = vmatprep.subr.mxu0 0.0
        %4759 = vmatpush2.msra.mxu0 %v4492
        %4760 = vmatprep.subr.mxu0 0.0
        %4761 = vmatpush2.msra.mxu0 %v4491
        %4762 = vmatprep.subr.mxu0 0.0
        %4763 = vmatpush2.msra.mxu0 %v4490
        %4764 = vmatprep.subr.mxu0 0.0
        %4765 = vmatpush2.msra.mxu0 %v4489
        %4766 = vmatprep.subr.mxu0 0.0
        %4767 = vmatpush2.msra.mxu0 %v4488
        %4768 = vmatprep.subr.mxu0 0.0
        %4769 = vmatpush2.msra.mxu0 %v4487
        %4770 = vmatprep.subr.mxu0 0.0
        %4771 = vmatpush2.msra.mxu0 %v4486
        %4772 = vmatprep.subr.mxu0 0.0
        %4773 = vmatpush2.msra.mxu0 %v4485
        %4774 = vmatprep.subr.mxu0 0.0
        %4775 = vmatpush2.msra.mxu0 %v4484
        %4776 = vmatprep.subr.mxu0 0.0
        %4777 = vmatpush2.msra.mxu0 %v4483
        %4778 = vmatprep.subr.mxu0 0.0
        %4779 = vmatpush2.msra.mxu0 %v4482
        %4780 = vmatprep.subr.mxu0 0.0
        %4781 = vmatpush2.msra.mxu0 %v4481
        %4782 = vmatprep.subr.mxu0 0.0
        %4783 = vmatpush2.msra.mxu0 %v4480
        %4784 = vmatprep.subr.mxu0 0.0
        %4785 = vmatpush2.msra.mxu0 %v4479
        %4786 = vmatprep.mubr.f32.mxu0 %v4297
        %4787 = vmatmul.mubr.f32.gmra.mxu0 %v4228
        %v4788 = vpop.f32.mrf.mxu0
        %v4789 = vadd.f32 %v4719, %v4788
        %v4790 = vpop.f32.mrf.mxu0
        %4791 = vdwg.mxu0
        %4792 = vmatprep.subr.mxu0 0.0
        %4793 = vmatpush1.msra.mxu0 %v4510
        %4794 = vmatprep.subr.mxu0 0.0
        %4795 = vmatpush1.msra.mxu0 %v4509
        %4796 = vmatprep.subr.mxu0 0.0
        %4797 = vmatpush1.msra.mxu0 %v4508
        %4798 = vmatprep.subr.mxu0 0.0
        %4799 = vmatpush1.msra.mxu0 %v4507
        %4800 = vmatprep.subr.mxu0 0.0
        %4801 = vmatpush1.msra.mxu0 %v4506
        %4802 = vmatprep.subr.mxu0 0.0
        %4803 = vmatpush1.msra.mxu0 %v4505
        %4804 = vmatprep.subr.mxu0 0.0
        %4805 = vmatpush1.msra.mxu0 %v4504
        %4806 = vmatprep.subr.mxu0 0.0
        %4807 = vmatpush1.msra.mxu0 %v4503
        %4808 = vmatprep.subr.mxu0 0.0
        %4809 = vmatpush1.msra.mxu0 %v4502
        %4810 = vmatprep.subr.mxu0 0.0
        %4811 = vmatpush1.msra.mxu0 %v4501
        %4812 = vmatprep.subr.mxu0 0.0
        %4813 = vmatpush1.msra.mxu0 %v4500
        %4814 = vmatprep.subr.mxu0 0.0
        %4815 = vmatpush1.msra.mxu0 %v4499
        %4816 = vmatprep.subr.mxu0 0.0
        %4817 = vmatpush1.msra.mxu0 %v4498
        %4818 = vmatprep.subr.mxu0 0.0
        %4819 = vmatpush1.msra.mxu0 %v4497
        %4820 = vmatprep.subr.mxu0 0.0
        %4821 = vmatpush1.msra.mxu0 %v4496
        %4822 = vmatprep.subr.mxu0 0.0
        %4823 = vmatpush1.msra.mxu0 %v4495
        %4824 = vmatprep.subr.mxu0 0.0
        %4825 = vmatpush2.msra.mxu0 0.0
        %4826 = vmatprep.subr.mxu0 0.0
        %4827 = vmatpush2.msra.mxu0 0.0
        %4828 = vmatprep.subr.mxu0 0.0
        %4829 = vmatpush2.msra.mxu0 0.0
        %4830 = vmatprep.subr.mxu0 0.0
        %4831 = vmatpush2.msra.mxu0 0.0
        %4832 = vmatprep.subr.mxu0 0.0
        %4833 = vmatpush2.msra.mxu0 0.0
        %4834 = vmatprep.subr.mxu0 0.0
        %4835 = vmatpush2.msra.mxu0 0.0
        %4836 = vmatprep.subr.mxu0 0.0
        %4837 = vmatpush2.msra.mxu0 0.0
        %4838 = vmatprep.subr.mxu0 0.0
        %4839 = vmatpush2.msra.mxu0 0.0
        %4840 = vmatprep.subr.mxu0 0.0
        %4841 = vmatpush2.msra.mxu0 0.0
        %4842 = vmatprep.subr.mxu0 0.0
        %4843 = vmatpush2.msra.mxu0 0.0
        %4844 = vmatprep.subr.mxu0 0.0
        %4845 = vmatpush2.msra.mxu0 0.0
        %4846 = vmatprep.subr.mxu0 0.0
        %4847 = vmatpush2.msra.mxu0 0.0
        %4848 = vmatprep.subr.mxu0 0.0
        %4849 = vmatpush2.msra.mxu0 0.0
        %4850 = vmatprep.subr.mxu0 0.0
        %4851 = vmatpush2.msra.mxu0 0.0
        %4852 = vmatprep.subr.mxu0 0.0
        %4853 = vmatpush2.msra.mxu0 0.0
        %4854 = vmatprep.subr.mxu0 0.0
        %4855 = vmatpush2.msra.mxu0 0.0
        %4856 = vmatprep.mubr.f32.mxu0 0.0
        %4857 = vmatmul.mubr.f32.gmra.mxu0 %v4366
        %v4858 = vpop.f32.mrf.mxu0
        %v4859 = vadd.f32 %v4789, %v4858
        %v4860 = vpop.f32.mrf.mxu0
        %4861 = vdwg.mxu0
        %v4862 = vsub.f32 0.0, %v4859
        %v4863 = vmul.f32 %v4862, 1.442695
        %v4864 = vpow.pop %v4863
        %v4865 = vadd.f32 %v4864, 1.0
        %v4866 = vrcp.pop %v4865
        %v4867 = vmul.f32 1.0, %v4866
        %4868 = vst [vmem:[%s243] sm:$0x1] %v4867
        %s4869 = sand.u32 %s159, 1
        %s4870 = scalar_lea.sflag [#allocation3], %s4869
        %s4871 = sand.u32 %s159, 1
        %s4872 = scalar_lea.vmem [#allocation2], %s4871
        // Predicated region
        $region45: #{tpu_custom_call.1} parent=43 // pred_check
          %p4873 = pneg %p169
        $region46: #{tpu_custom_call.1} parent=43 // pred_check_branch
          %4875 = sbr.rel (%p4873) target = $region48
        $region47: #{tpu_custom_call.1} parent=43 // pred_region
          %s4877 = ssub.s32 16, 16
          %4878 = vsyncadd %s4870, %s4877
          %s4879 = smul.addr %s20, 16
          %s4880 = scalar_lea.hbm %s6, %s4879
          %s4882 = sshll.u32 %s4872, 4
          %s4883 = int_to_ptr.vmem [resolvable:$true] %s4882
          %4885 = dma.vmem_to_hbm [thread:$0]  %s4883, 16, %s4880, %s4870
        $region48: #{tpu_custom_call.1} parent=43 // pred_fallthru
          _
      $region44: #{tpu_custom_call.1} parent=5 // pred_fallthru
        _
      %p4886 = scmp.le.s32.totalorder 2, %s15
      // Predicated region
      $region49: #{tpu_custom_call.1} parent=5 // pred_check
        %p4887 = pneg %p4886
      $region50: #{tpu_custom_call.1} parent=5 // pred_check_branch
        %4889 = sbr.rel (%p4887) target = $region52
      $region51: #{tpu_custom_call.1} parent=5 // pred_region
        %s4890 = ssub.s32 %s15, 2
        // Predicated region
        $region53: #{tpu_custom_call.1} parent=51 // pred_check
          %p4891 = pneg %p175
        $region54: #{tpu_custom_call.1} parent=51 // pred_check_branch
          %4893 = sbr.rel (%p4891) target = $region56
        $region55: #{tpu_custom_call.1} parent=51 // pred_region
          %s4894 = sand.u32 %s160, 1
          %s4895 = scalar_lea.sflag [#allocation3], %s4894
          %s4896 = sand.u32 %s160, 1
          %s4897 = scalar_lea.vmem [#allocation2], %s4896
          %4898 = dma.done %s4895, 16
        $region56: #{tpu_custom_call.1} parent=51 // pred_fallthru
          _
      $region52: #{tpu_custom_call.1} parent=5 // pred_fallthru
        _
    $region6: #{tpu_custom_call.1} parent=1 // loop_footer
      %s19 = sadd.s32 1, %s15
    $region7: #{tpu_custom_call.1} parent=1 // loop_footer_branch
      %14 = sbr.rel target = $region3
    $region8: #{tpu_custom_call.1} parent=1 // loop_exit
      _
    %4899 = vsyncpa [#allocation3], 1
    %s4900 = scalar_lea.sflag [#allocation3], 1
    %4901 = vsyncpa %s4900, 1

</llo_original>
